<compile_context>
chip_gen: v7x
topology: tpu7x:2x2x1
jax: 0.10.0
libtpu: 0.0.40
codegen_flags: <defaults>
</compile_context>

<pallas_src>
import functools

import numpy as np
import jax
import jax.numpy as jnp
from jax.experimental import pallas as pl
from jax.experimental.pallas import tpu as pltpu


def _round_up(x, m):
    return ((x + m - 1) // m) * m


def _cdiv(a, b):
    return (a + b - 1) // b


def _elu_f32(x):
    # ELU with alpha=1 (matches F.elu / nn.ELU defaults), computed in f32.
    return jnp.where(x > 0, x, jnp.exp(jnp.minimum(x, 0.0)) - 1.0)


def _decoder_block_kernel(*refs, stride, tq, halo_f, t_frames, kernel_size,
                          layer_cfgs, compute_dtype):
    """Fused ELU + ConvTranspose1d + causal crop + ResidualUnit1d stack.

    refs = (xc_i, xc_ip1, xp_i, xp_ip1, w0, w1, bt,
            [w1_taps, b1, w2, b2] * num_layers, out_ref)

    All activations are phase packed: a[w, r*C + c] is channel c at time
    (frame_base + w) * stride + r, with frame_base = i*tq - halo_f.
    """
    xc0, xc1, xp0, xp1, w0, w1, bt = refs[:7]
    out_ref = refs[-1]
    layer_refs = refs[7:-1]

    i = pl.program_id(1)
    width = w0.shape[-1]                      # stride * C_out
    c_out = width // stride

    # Haloed window of input frames q = i*tq - halo_f + w.  x[q] and x[q-1]
    # come from two zero-padded HBM copies, so both loads are tile aligned.
    if halo_f > 0:
        x_cur = jnp.concatenate([xc0[0], xc1[0, :2 * halo_f, :]], axis=0)
        x_prev = jnp.concatenate([xp0[0], xp1[0, :2 * halo_f, :]], axis=0)
    else:
        x_cur = xc0[0]
        x_prev = xp0[0]
    x_cur = _elu_f32(x_cur.astype(jnp.float32)).astype(compute_dtype)
    x_prev = _elu_f32(x_prev.astype(jnp.float32)).astype(compute_dtype)

    # ConvTranspose1d(kernel=2*stride, stride) + causal right crop:
    #   h[w, r*C_out + o] = ELU(x[q]) @ wt[:, o, r]
    #                     + ELU(x[q-1]) @ wt[:, o, r+stride] + b[o]
    h = (jnp.dot(x_cur, w0[...], preferred_element_type=jnp.float32)
         + jnp.dot(x_prev, w1[...], preferred_element_type=jnp.float32)
         + bt[...].astype(jnp.float32))

    hf_in = halo_f
    for layer_idx, (p, d, hf) in enumerate(layer_cfgs):
        w1t_ref, b1_ref, w2_ref, b2_ref = layer_refs[4 * layer_idx:
                                                     4 * layer_idx + 4]
        fw_in = tq + 2 * hf_in
        hf_out = hf_in - hf
        fw_out = tq + 2 * hf_out

        # Emulate this layer's F.pad zeros at the true sequence boundaries and
        # kill any stale halo values outside [0, T) frames.
        frame0 = i * tq - hf_in
        frame_ids = jax.lax.broadcasted_iota(jnp.int32, (fw_in, 1), 0) + frame0
        valid = (frame_ids >= 0) & (frame_ids < t_frames)
        h = jnp.where(valid, h, 0.0)

        hp = _elu_f32(h)
        # Per-phase channel slabs of the (padded + ELU'd) layer input.
        slabs = [hp[:, q * c_out:(q + 1) * c_out].astype(compute_dtype)
                 for q in range(stride)]
        w_taps = [w1t_ref[tap] for tap in range(kernel_size)]
        b1 = b1_ref[...].astype(jnp.float32)
        w2 = w2_ref[...]
        b2 = b2_ref[...].astype(jnp.float32)

        outs = []
        for r in range(stride):
            acc = None
            for tap in range(kernel_size):
                # time (f*stride + r) - p + tap*d == (f + sh)*stride + q
                sh, q = divmod(r - p + tap * d, stride)
                lhs = slabs[q][hf + sh:hf + sh + fw_out, :]
                part = jnp.dot(lhs, w_taps[tap],
                               preferred_element_type=jnp.float32)
                acc = part if acc is None else acc + part
            acc = acc + b1                                    # bias added once
            g = _elu_f32(acc).astype(compute_dtype)
            o = jnp.dot(g, w2, preferred_element_type=jnp.float32) + b2
            outs.append(o)
        z = jnp.concatenate(outs, axis=1) if stride > 1 else outs[0]
        h = z + h[hf:hf + fw_out, :]                          # residual add
        hf_in = hf_out

    out_ref[0] = h.astype(out_ref.dtype)


def decoder_block_forward(x_ncl, params, *, stride, kernel_size, dilation_rate,
                          num_layers, is_causal=True, time_tile=256,
                          compute_dtype=jnp.bfloat16, out_dtype=None):
    assert is_causal, "only the default causal variant is implemented"
    # TODO(synk): non-causal crop/pad (is_causal=False) variant not implemented.
    assert kernel_size % 2 == 1, "kernel_size should be odd"
    B, C_in, T = x_ncl.shape
    wt = params["convt_w"]                    # (C_in, C_out, 2*stride)
    bt = params["convt_b"]                    # (C_out,)
    C_out = wt.shape[1]
    assert wt.shape[2] == 2 * stride
    assert len(params["res"]) == num_layers
    if out_dtype is None:
        out_dtype = x_ncl.dtype

    # Static residual-unit config and total halo (in input-frame units).
    layer_cfgs = []
    for layer_idx in range(num_layers):
        d = dilation_rate ** layer_idx
        p = ((kernel_size - 1) * d + 1) // 2
        hf = -(-p // stride)                  # ceil(p / stride)
        layer_cfgs.append((p, d, hf))
    halo_f = sum(hf for _, _, hf in layer_cfgs)

    # Time tiling over input frames (the lane dim stays stride*C_out wide).
    tq = _round_up(max(min(int(time_tile), T), 2 * halo_f, 8), 8)
    nt = _cdiv(T, tq)
    total_frames = (nt + 1) * tq              # +1 block so block i+1 always exists
    assert 2 * halo_f <= tq

    # NCL -> NLC plus a 1-frame-shifted copy, both zero padded, so x[q] and
    # x[q-1] are both read with tile-aligned blocked DMAs.
    x_nlc = jnp.transpose(x_ncl, (0, 2, 1))
    x_cur = jnp.pad(x_nlc, ((0, 0), (halo_f, total_frames - halo_f - T), (0, 0)))
    x_prev = jnp.pad(x_nlc,
                     ((0, 0), (halo_f + 1, total_frames - halo_f - 1 - T), (0, 0)))

    # Transposed-conv weight as two (C_in, stride*C_out) matmul operands:
    #   W0[c, r*C_out + o] = wt[c, o, r],  W1[c, r*C_out + o] = wt[c, o, r+stride]
    w_m0 = jnp.transpose(wt[:, :, :stride], (0, 2, 1)).reshape(C_in, stride * C_out)
    w_m1 = jnp.transpose(wt[:, :, stride:], (0, 2, 1)).reshape(C_in, stride * C_out)
    w_m0 = w_m0.astype(compute_dtype)
    w_m1 = w_m1.astype(compute_dtype)
    b_t = jnp.tile(bt, (stride,)).reshape(1, stride * C_out).astype(jnp.float32)

    x_spec0 = pl.BlockSpec((1, tq, C_in), lambda b, i: (b, i, 0))
    x_spec1 = pl.BlockSpec((1, tq, C_in), lambda b, i: (b, i + 1, 0))
    w_spec = pl.BlockSpec((C_in, stride * C_out), lambda b, i: (0, 0))
    b_spec = pl.BlockSpec((1, stride * C_out), lambda b, i: (0, 0))
    in_specs = [x_spec0, x_spec1, x_spec0, x_spec1, w_spec, w_spec, b_spec]
    inputs = [x_cur, x_cur, x_prev, x_prev, w_m0, w_m1, b_t]

    c_half = C_out // 2
    flops = 4 * B * total_frames * C_in * stride * C_out
    for layer_idx in range(num_layers):
        lp = params["res"][layer_idx]
        w1 = lp["conv_in_w"]                  # (C_half, C_out, k)
        b1 = lp["conv_in_b"]                  # (C_half,)
        w2 = lp["conv_out_w"]                 # (C_out, C_half, 1)
        b2 = lp["conv_out_b"]                 # (C_out,)
        c_half = w1.shape[0]
        w1_taps = jnp.transpose(w1, (2, 1, 0)).astype(compute_dtype)      # (k, C_out, C_half)
        w2_mat = jnp.transpose(w2[:, :, 0], (1, 0)).astype(compute_dtype)  # (C_half, C_out)
        in_specs += [
            pl.BlockSpec((kernel_size, C_out, c_half), lambda b, i: (0, 0, 0)),
            pl.BlockSpec((1, c_half), lambda b, i: (0, 0)),
            pl.BlockSpec((c_half, C_out), lambda b, i: (0, 0)),
            pl.BlockSpec((1, C_out), lambda b, i: (0, 0)),
        ]
        inputs += [w1_taps, b1.reshape(1, c_half).astype(jnp.float32),
                   w2_mat, b2.reshape(1, C_out).astype(jnp.float32)]
        flops += 2 * B * total_frames * stride * c_half * C_out * (kernel_size + 1)

    kern = functools.partial(
        _decoder_block_kernel, stride=stride, tq=tq, halo_f=halo_f,
        t_frames=T, kernel_size=kernel_size, layer_cfgs=tuple(layer_cfgs),
        compute_dtype=compute_dtype)

    # VMEM budget: blocked operands are double buffered, temporaries live once.
    fw = tq + 2 * halo_f
    itm = jnp.dtype(compute_dtype).itemsize
    est = (2 * 4 * tq * C_in * jnp.dtype(x_nlc.dtype).itemsize
           + 2 * tq * stride * C_out * jnp.dtype(out_dtype).itemsize
           + 2 * 2 * C_in * stride * C_out * itm
           + fw * (4 * C_in + 8 * stride * C_out + 4 * stride * c_half) * 4)
    vmem_limit = int(min(max(2 * est, 32 * 2 ** 20), 64 * 2 ** 20))

    bytes_accessed = int(2 * x_cur.size * jnp.dtype(x_cur.dtype).itemsize
                         + B * nt * tq * stride * C_out
                         * jnp.dtype(out_dtype).itemsize
                         + 2 * C_in * stride * C_out * itm)
    transcendentals = int(2 * B * total_frames * C_in
                          + num_layers * B * total_frames * stride
                          * (C_out + c_half))

    y = pl.pallas_call(
        kern,
        out_shape=jax.ShapeDtypeStruct((B, nt * tq, stride * C_out), out_dtype),
        grid_spec=pltpu.PrefetchScalarGridSpec(
            num_scalar_prefetch=0,
            grid=(B, nt),
            in_specs=in_specs,
            out_specs=pl.BlockSpec((1, tq, stride * C_out),
                                   lambda b, i: (b, i, 0)),
        ),
        compiler_params=pltpu.CompilerParams(
            dimension_semantics=("parallel", "parallel"),
            vmem_limit_bytes=vmem_limit),
        cost_estimate=pl.CostEstimate(flops=int(flops),
                                      transcendentals=transcendentals,
                                      bytes_accessed=bytes_accessed),
    )(*inputs)

    # Phase-packed (B, frames, stride*C_out) -> (B, T_out, C_out) is a free
    # row-major reshape in HBM; then back to PyTorch's NCL convention.
    y = y.reshape(B, nt * tq * stride, C_out)[:, :T * stride, :]
    return jnp.transpose(y, (0, 2, 1))


# ----------------------- pure NumPy reference (PyTorch semantics) -----------
def _elu_np(x):
    return np.where(x > 0, x, np.expm1(np.minimum(x, 0.0)))


def _conv_transpose1d_np(x, w, b, stride):
    B, C_in, T = x.shape
    _, C_out, K = w.shape
    L = (T - 1) * stride + K
    y = np.zeros((B, C_out, L), np.float64)
    for s in range(T):
        for k in range(K):
            y[:, :, s * stride + k] += x[:, :, s] @ w[:, :, k]
    return y + b[None, :, None]


def _conv1d_np(x, w, b, dilation=1):
    B, _, L = x.shape
    C_out, _, K = w.shape
    L_out = L - (K - 1) * dilation
    y = np.zeros((B, C_out, L_out), np.float64)
    for t in range(L_out):
        for k in range(K):
            y[:, :, t] += x[:, :, t + k * dilation] @ w[:, :, k].T
    return y + b[None, :, None]


def decoder_block_ref(x, params, *, stride, kernel_size, dilation_rate,
                      num_layers, is_causal=True):
    x = np.asarray(x, np.float64)
    wt = np.asarray(params["convt_w"], np.float64)
    bt = np.asarray(params["convt_b"], np.float64)
    K_in = wt.shape[2]
    padding = K_in - stride
    h = _elu_np(x)
    h = _conv_transpose1d_np(h, wt, bt, stride)
    if is_causal:
        pad_l, pad_r = 0, padding
    else:
        pad_l = padding // 2
        pad_r = padding - pad_l
    h = h[:, :, pad_l: h.shape[2] - pad_r]
    for layer_idx in range(num_layers):
        d = dilation_rate ** layer_idx
        p = ((kernel_size - 1) * d + 1) // 2
        lp = params["res"][layer_idx]
        w1 = np.asarray(lp["conv_in_w"], np.float64)
        b1 = np.asarray(lp["conv_in_b"], np.float64)
        w2 = np.asarray(lp["conv_out_w"], np.float64)
        b2 = np.asarray(lp["conv_out_b"], np.float64)
        if is_causal:
            hp = np.pad(h, ((0, 0), (0, 0), (p, p)))
        else:
            hp = np.pad(h, ((0, 0), (0, 0), (2 * p, 0)))
        z = _elu_np(hp)
        z = _conv1d_np(z, w1, b1, dilation=d)
        z = _elu_np(z)
        z = _conv1d_np(z, w2, b2, dilation=1)
        h = z + h
    return h


if __name__ == "__main__":
    B = 2
    in_channels = 16
    out_channels = 8
    T = 80                   # not a multiple of the time tile on purpose
    stride = 2
    kernel_size = 3          # residual-unit conv kernel (odd)
    dilation_rate = 3
    num_layers = 2

    key = jax.random.PRNGKey(0)
    keys = jax.random.split(key, 3 + 4 * num_layers)
    c_half = out_channels // 2
    params = {
        "convt_w": 0.3 * jax.random.normal(
            keys[0], (in_channels, out_channels, 2 * stride), jnp.float32),
        "convt_b": 0.1 * jax.random.normal(keys[1], (out_channels,), jnp.float32),
        "res": [],
    }
    for layer_idx in range(num_layers):
        k0, k1, k2, k3 = keys[3 + 4 * layer_idx: 3 + 4 * layer_idx + 4]
        params["res"].append({
            "conv_in_w": 0.3 * jax.random.normal(
                k0, (c_half, out_channels, kernel_size), jnp.float32),
            "conv_in_b": 0.1 * jax.random.normal(k1, (c_half,), jnp.float32),
            "conv_out_w": 0.3 * jax.random.normal(
                k2, (out_channels, c_half, 1), jnp.float32),
            "conv_out_b": 0.1 * jax.random.normal(
                k3, (out_channels,), jnp.float32),
        })
    x = jax.random.normal(keys[2], (B, in_channels, T), jnp.float32)

    mod_kwargs = dict(stride=stride, kernel_size=kernel_size,
                      dilation_rate=dilation_rate, num_layers=num_layers,
                      is_causal=True)
    ref = decoder_block_ref(np.asarray(x), params, **mod_kwargs)

    # f32 MXU operands: tight check against the f64 reference.
    out_f32 = decoder_block_forward(x, params, time_tile=32,
                                    compute_dtype=jnp.float32, **mod_kwargs)
    out_f32 = jax.block_until_ready(out_f32)
    np.testing.assert_allclose(np.asarray(out_f32), ref, rtol=3e-4, atol=3e-4)

    # bf16 MXU operands / f32 accumulation (production configuration).
    out_bf16 = decoder_block_forward(x, params, time_tile=32,
                                     compute_dtype=jnp.bfloat16, **mod_kwargs)
    out_bf16 = jax.block_until_ready(out_bf16)
    np.testing.assert_allclose(np.asarray(out_bf16), ref, rtol=8e-2, atol=8e-2)

    assert out_f32.shape == (B, out_channels, T * stride)
    print("KERNEL_OK")
</pallas_src>

<mosaic_0001>
module attributes {stable_mosaic.version = 11 : i64} {
  func.func @_decoder_block_kernel(%arg0: i32, %arg1: i32, %arg2: memref<1x32x16xf32, #tpu.memory_space<vmem>>, %arg3: memref<1x32x16xf32, #tpu.memory_space<vmem>>, %arg4: memref<1x32x16xf32, #tpu.memory_space<vmem>>, %arg5: memref<1x32x16xf32, #tpu.memory_space<vmem>>, %arg6: memref<16x16xf32, #tpu.memory_space<vmem>>, %arg7: memref<16x16xf32, #tpu.memory_space<vmem>>, %arg8: memref<1x16xf32, #tpu.memory_space<vmem>>, %arg9: memref<3x8x4xf32, #tpu.memory_space<vmem>>, %arg10: memref<1x4xf32, #tpu.memory_space<vmem>>, %arg11: memref<4x8xf32, #tpu.memory_space<vmem>>, %arg12: memref<1x8xf32, #tpu.memory_space<vmem>>, %arg13: memref<3x8x4xf32, #tpu.memory_space<vmem>>, %arg14: memref<1x4xf32, #tpu.memory_space<vmem>>, %arg15: memref<4x8xf32, #tpu.memory_space<vmem>>, %arg16: memref<1x8xf32, #tpu.memory_space<vmem>>, %arg17: memref<1x32x16xf32, #tpu.memory_space<vmem>>) attributes {dimension_semantics = [#tpu.dimension_semantics<parallel>, #tpu.dimension_semantics<parallel>], iteration_bounds = array<i64: 2, 3>, scalar_prefetch = 0 : i64, scratch_operands = 0 : i64, tpu.core_type = #tpu.core_type<tc>, window_params = [{transform_indices = @transform_0, window_bounds = array<i64: 1, 32, 16>}, {transform_indices = @transform_1, window_bounds = array<i64: 1, 32, 16>}, {transform_indices = @transform_2, window_bounds = array<i64: 1, 32, 16>}, {transform_indices = @transform_3, window_bounds = array<i64: 1, 32, 16>}, {pipeline_mode = #tpu.pipeline_mode<synchronous>, transform_indices = @transform_4, window_bounds = array<i64: 16, 16>}, {pipeline_mode = #tpu.pipeline_mode<synchronous>, transform_indices = @transform_5, window_bounds = array<i64: 16, 16>}, {pipeline_mode = #tpu.pipeline_mode<synchronous>, transform_indices = @transform_6, window_bounds = array<i64: 1, 16>}, {pipeline_mode = #tpu.pipeline_mode<synchronous>, transform_indices = @transform_7, window_bounds = array<i64: 3, 8, 4>}, {pipeline_mode = #tpu.pipeline_mode<synchronous>, transform_indices = @transform_8, window_bounds = array<i64: 1, 4>}, {pipeline_mode = #tpu.pipeline_mode<synchronous>, transform_indices = @transform_9, window_bounds = array<i64: 4, 8>}, {pipeline_mode = #tpu.pipeline_mode<synchronous>, transform_indices = @transform_10, window_bounds = array<i64: 1, 8>}, {pipeline_mode = #tpu.pipeline_mode<synchronous>, transform_indices = @transform_11, window_bounds = array<i64: 3, 8, 4>}, {pipeline_mode = #tpu.pipeline_mode<synchronous>, transform_indices = @transform_12, window_bounds = array<i64: 1, 4>}, {pipeline_mode = #tpu.pipeline_mode<synchronous>, transform_indices = @transform_13, window_bounds = array<i64: 4, 8>}, {pipeline_mode = #tpu.pipeline_mode<synchronous>, transform_indices = @transform_14, window_bounds = array<i64: 1, 8>}, {transform_indices = @transform_15, window_bounds = array<i64: 1, 32, 16>}]} {
    %c0 = arith.constant 0 : index
    %c0_0 = arith.constant 0 : index
    %c0_1 = arith.constant 0 : index
    %0 = vector.load %arg2[%c0, %c0_0, %c0_1] : memref<1x32x16xf32, #tpu.memory_space<vmem>>, vector<1x32x16xf32>
    %1 = vector.shape_cast %0 : vector<1x32x16xf32> to vector<32x16xf32>
    %c0_2 = arith.constant 0 : index
    %c0_3 = arith.constant 0 : index
    %c0_4 = arith.constant 0 : index
    %2 = vector.load %arg3[%c0_2, %c0_3, %c0_4] : memref<1x32x16xf32, #tpu.memory_space<vmem>>, vector<1x6x16xf32>
    %3 = vector.shape_cast %2 : vector<1x6x16xf32> to vector<6x16xf32>
    %4 = tpu.concatenate %1, %3 in 0 : vector<32x16xf32>, vector<6x16xf32> -> vector<38x16xf32>
    %c0_5 = arith.constant 0 : index
    %c0_6 = arith.constant 0 : index
    %c0_7 = arith.constant 0 : index
    %5 = vector.load %arg4[%c0_5, %c0_6, %c0_7] : memref<1x32x16xf32, #tpu.memory_space<vmem>>, vector<1x32x16xf32>
    %6 = vector.shape_cast %5 : vector<1x32x16xf32> to vector<32x16xf32>
    %c0_8 = arith.constant 0 : index
    %c0_9 = arith.constant 0 : index
    %c0_10 = arith.constant 0 : index
    %7 = vector.load %arg5[%c0_8, %c0_9, %c0_10] : memref<1x32x16xf32, #tpu.memory_space<vmem>>, vector<1x6x16xf32>
    %8 = vector.shape_cast %7 : vector<1x6x16xf32> to vector<6x16xf32>
    %9 = tpu.concatenate %6, %8 in 0 : vector<32x16xf32>, vector<6x16xf32> -> vector<38x16xf32>
    %cst = arith.constant 0.000000e+00 : f32
    %10 = vector.broadcast %cst : f32 to vector<38x16xf32>
    %11 = arith.cmpf ogt, %4, %10 : vector<38x16xf32>
    %cst_11 = arith.constant 0.000000e+00 : f32
    %12 = vector.broadcast %cst_11 : f32 to vector<38x16xf32>
    %13 = arith.minimumf %4, %12 : vector<38x16xf32>
    %14 = math.exp %13 : vector<38x16xf32>
    %cst_12 = arith.constant 1.000000e+00 : f32
    %15 = vector.broadcast %cst_12 : f32 to vector<38x16xf32>
    %16 = arith.subf %14, %15 : vector<38x16xf32>
    %17 = arith.select %11, %4, %16 : vector<38x16xi1>, vector<38x16xf32>
    %cst_13 = arith.constant 0.000000e+00 : f32
    %18 = vector.broadcast %cst_13 : f32 to vector<38x16xf32>
    %19 = arith.cmpf ogt, %9, %18 : vector<38x16xf32>
    %cst_14 = arith.constant 0.000000e+00 : f32
    %20 = vector.broadcast %cst_14 : f32 to vector<38x16xf32>
    %21 = arith.minimumf %9, %20 : vector<38x16xf32>
    %22 = math.exp %21 : vector<38x16xf32>
    %cst_15 = arith.constant 1.000000e+00 : f32
    %23 = vector.broadcast %cst_15 : f32 to vector<38x16xf32>
    %24 = arith.subf %22, %23 : vector<38x16xf32>
    %25 = arith.select %19, %9, %24 : vector<38x16xi1>, vector<38x16xf32>
    %c0_16 = arith.constant 0 : index
    %c0_17 = arith.constant 0 : index
    %26 = vector.load %arg6[%c0_16, %c0_17] : memref<16x16xf32, #tpu.memory_space<vmem>>, vector<16x16xf32>
    %cst_18 = arith.constant dense<0.000000e+00> : vector<38x16xf32>
    %27 = tpu.matmul %17, %26, %cst_18 {dimension_numbers = #tpu.dot_dimension_numbers<[1], [0], [0], [1], [0, 0, 1, 1], [], []>} : vector<38x16xf32>, vector<16x16xf32>, vector<38x16xf32> -> vector<38x16xf32>
    %c0_19 = arith.constant 0 : index
    %c0_20 = arith.constant 0 : index
    %28 = vector.load %arg7[%c0_19, %c0_20] : memref<16x16xf32, #tpu.memory_space<vmem>>, vector<16x16xf32>
    %cst_21 = arith.constant dense<0.000000e+00> : vector<38x16xf32>
    %29 = tpu.matmul %25, %28, %cst_21 {dimension_numbers = #tpu.dot_dimension_numbers<[1], [0], [0], [1], [0, 0, 1, 1], [], []>} : vector<38x16xf32>, vector<16x16xf32>, vector<38x16xf32> -> vector<38x16xf32>
    %30 = arith.addf %27, %29 : vector<38x16xf32>
    %c0_22 = arith.constant 0 : index
    %c0_23 = arith.constant 0 : index
    %31 = vector.load %arg8[%c0_22, %c0_23] : memref<1x16xf32, #tpu.memory_space<vmem>>, vector<1x16xf32>
    %32 = vector.broadcast %31 : vector<1x16xf32> to vector<38x16xf32>
    %33 = arith.addf %30, %32 : vector<38x16xf32>
    %c32_i32 = arith.constant 32 : i32
    %34 = arith.muli %arg1, %c32_i32 : i32
    %c3_i32 = arith.constant 3 : i32
    %35 = arith.subi %34, %c3_i32 : i32
    %36 = tpu.iota {dimensions = array<i32: 0>} : vector<38x1xi32>
    %37 = vector.broadcast %35 : i32 to vector<38x1xi32>
    %38 = arith.addi %36, %37 : vector<38x1xi32>
    %c0_i32 = arith.constant 0 : i32
    %39 = vector.broadcast %c0_i32 : i32 to vector<38x1xi32>
    %40 = arith.cmpi sge, %38, %39 : vector<38x1xi32>
    %c80_i32 = arith.constant 80 : i32
    %41 = vector.broadcast %c80_i32 : i32 to vector<38x1xi32>
    %42 = arith.cmpi slt, %38, %41 : vector<38x1xi32>
    %43 = arith.andi %40, %42 : vector<38x1xi1>
    %cst_24 = arith.constant 0.000000e+00 : f32
    %44 = vector.shape_cast %43 : vector<38x1xi1> to vector<38x1xi1>
    %45 = vector.broadcast %44 : vector<38x1xi1> to vector<38x16xi1>
    %46 = vector.broadcast %cst_24 : f32 to vector<38x16xf32>
    %47 = arith.select %45, %33, %46 : vector<38x16xi1>, vector<38x16xf32>
    %cst_25 = arith.constant 0.000000e+00 : f32
    %48 = vector.broadcast %cst_25 : f32 to vector<38x16xf32>
    %49 = arith.cmpf ogt, %47, %48 : vector<38x16xf32>
    %cst_26 = arith.constant 0.000000e+00 : f32
    %50 = vector.broadcast %cst_26 : f32 to vector<38x16xf32>
    %51 = arith.minimumf %47, %50 : vector<38x16xf32>
    %52 = math.exp %51 : vector<38x16xf32>
    %cst_27 = arith.constant 1.000000e+00 : f32
    %53 = vector.broadcast %cst_27 : f32 to vector<38x16xf32>
    %54 = arith.subf %52, %53 : vector<38x16xf32>
    %55 = arith.select %49, %47, %54 : vector<38x16xi1>, vector<38x16xf32>
    %56 = vector.extract_strided_slice %55 {offsets = [0, 0], sizes = [38, 8], strides = [1, 1]} : vector<38x16xf32> to vector<38x8xf32>
    %57 = vector.extract_strided_slice %55 {offsets = [0, 8], sizes = [38, 8], strides = [1, 1]} : vector<38x16xf32> to vector<38x8xf32>
    %c0_28 = arith.constant 0 : index
    %c0_29 = arith.constant 0 : index
    %c0_30 = arith.constant 0 : index
    %58 = vector.load %arg9[%c0_28, %c0_29, %c0_30] : memref<3x8x4xf32, #tpu.memory_space<vmem>>, vector<1x8x4xf32>
    %59 = vector.shape_cast %58 : vector<1x8x4xf32> to vector<8x4xf32>
    %c1 = arith.constant 1 : index
    %c0_31 = arith.constant 0 : index
    %c0_32 = arith.constant 0 : index
    %60 = vector.load %arg9[%c1, %c0_31, %c0_32] : memref<3x8x4xf32, #tpu.memory_space<vmem>>, vector<1x8x4xf32>
    %61 = vector.shape_cast %60 : vector<1x8x4xf32> to vector<8x4xf32>
    %c2 = arith.constant 2 : index
    %c0_33 = arith.constant 0 : index
    %c0_34 = arith.constant 0 : index
    %62 = vector.load %arg9[%c2, %c0_33, %c0_34] : memref<3x8x4xf32, #tpu.memory_space<vmem>>, vector<1x8x4xf32>
    %63 = vector.shape_cast %62 : vector<1x8x4xf32> to vector<8x4xf32>
    %c0_35 = arith.constant 0 : index
    %c0_36 = arith.constant 0 : index
    %64 = vector.load %arg10[%c0_35, %c0_36] : memref<1x4xf32, #tpu.memory_space<vmem>>, vector<1x4xf32>
    %c0_37 = arith.constant 0 : index
    %c0_38 = arith.constant 0 : index
    %65 = vector.load %arg11[%c0_37, %c0_38] : memref<4x8xf32, #tpu.memory_space<vmem>>, vector<4x8xf32>
    %c0_39 = arith.constant 0 : index
    %c0_40 = arith.constant 0 : index
    %66 = vector.load %arg12[%c0_39, %c0_40] : memref<1x8xf32, #tpu.memory_space<vmem>>, vector<1x8xf32>
    %67 = vector.extract_strided_slice %57 {offsets = [0, 0], sizes = [36, 8], strides = [1, 1]} : vector<38x8xf32> to vector<36x8xf32>
    %cst_41 = arith.constant dense<0.000000e+00> : vector<36x4xf32>
    %68 = tpu.matmul %67, %59, %cst_41 {dimension_numbers = #tpu.dot_dimension_numbers<[1], [0], [0], [1], [0, 0, 1, 1], [], []>} : vector<36x8xf32>, vector<8x4xf32>, vector<36x4xf32> -> vector<36x4xf32>
    %69 = vector.extract_strided_slice %56 {offsets = [1, 0], sizes = [36, 8], strides = [1, 1]} : vector<38x8xf32> to vector<36x8xf32>
    %cst_42 = arith.constant dense<0.000000e+00> : vector<36x4xf32>
    %70 = tpu.matmul %69, %61, %cst_42 {dimension_numbers = #tpu.dot_dimension_numbers<[1], [0], [0], [1], [0, 0, 1, 1], [], []>} : vector<36x8xf32>, vector<8x4xf32>, vector<36x4xf32> -> vector<36x4xf32>
    %71 = arith.addf %68, %70 : vector<36x4xf32>
    %72 = vector.extract_strided_slice %57 {offsets = [1, 0], sizes = [36, 8], strides = [1, 1]} : vector<38x8xf32> to vector<36x8xf32>
    %cst_43 = arith.constant dense<0.000000e+00> : vector<36x4xf32>
    %73 = tpu.matmul %72, %63, %cst_43 {dimension_numbers = #tpu.dot_dimension_numbers<[1], [0], [0], [1], [0, 0, 1, 1], [], []>} : vector<36x8xf32>, vector<8x4xf32>, vector<36x4xf32> -> vector<36x4xf32>
    %74 = arith.addf %71, %73 : vector<36x4xf32>
    %75 = vector.broadcast %64 : vector<1x4xf32> to vector<36x4xf32>
    %76 = arith.addf %74, %75 : vector<36x4xf32>
    %cst_44 = arith.constant 0.000000e+00 : f32
    %77 = vector.broadcast %cst_44 : f32 to vector<36x4xf32>
    %78 = arith.cmpf ogt, %76, %77 : vector<36x4xf32>
    %cst_45 = arith.constant 0.000000e+00 : f32
    %79 = vector.broadcast %cst_45 : f32 to vector<36x4xf32>
    %80 = arith.minimumf %76, %79 : vector<36x4xf32>
    %81 = math.exp %80 : vector<36x4xf32>
    %cst_46 = arith.constant 1.000000e+00 : f32
    %82 = vector.broadcast %cst_46 : f32 to vector<36x4xf32>
    %83 = arith.subf %81, %82 : vector<36x4xf32>
    %84 = arith.select %78, %76, %83 : vector<36x4xi1>, vector<36x4xf32>
    %cst_47 = arith.constant dense<0.000000e+00> : vector<36x8xf32>
    %85 = tpu.matmul %84, %65, %cst_47 {dimension_numbers = #tpu.dot_dimension_numbers<[1], [0], [0], [1], [0, 0, 1, 1], [], []>} : vector<36x4xf32>, vector<4x8xf32>, vector<36x8xf32> -> vector<36x8xf32>
    %86 = vector.broadcast %66 : vector<1x8xf32> to vector<36x8xf32>
    %87 = arith.addf %85, %86 : vector<36x8xf32>
    %88 = vector.extract_strided_slice %56 {offsets = [1, 0], sizes = [36, 8], strides = [1, 1]} : vector<38x8xf32> to vector<36x8xf32>
    %cst_48 = arith.constant dense<0.000000e+00> : vector<36x4xf32>
    %89 = tpu.matmul %88, %59, %cst_48 {dimension_numbers = #tpu.dot_dimension_numbers<[1], [0], [0], [1], [0, 0, 1, 1], [], []>} : vector<36x8xf32>, vector<8x4xf32>, vector<36x4xf32> -> vector<36x4xf32>
    %90 = vector.extract_strided_slice %57 {offsets = [1, 0], sizes = [36, 8], strides = [1, 1]} : vector<38x8xf32> to vector<36x8xf32>
    %cst_49 = arith.constant dense<0.000000e+00> : vector<36x4xf32>
    %91 = tpu.matmul %90, %61, %cst_49 {dimension_numbers = #tpu.dot_dimension_numbers<[1], [0], [0], [1], [0, 0, 1, 1], [], []>} : vector<36x8xf32>, vector<8x4xf32>, vector<36x4xf32> -> vector<36x4xf32>
    %92 = arith.addf %89, %91 : vector<36x4xf32>
    %93 = vector.extract_strided_slice %56 {offsets = [2, 0], sizes = [36, 8], strides = [1, 1]} : vector<38x8xf32> to vector<36x8xf32>
    %cst_50 = arith.constant dense<0.000000e+00> : vector<36x4xf32>
    %94 = tpu.matmul %93, %63, %cst_50 {dimension_numbers = #tpu.dot_dimension_numbers<[1], [0], [0], [1], [0, 0, 1, 1], [], []>} : vector<36x8xf32>, vector<8x4xf32>, vector<36x4xf32> -> vector<36x4xf32>
    %95 = arith.addf %92, %94 : vector<36x4xf32>
    %96 = vector.broadcast %64 : vector<1x4xf32> to vector<36x4xf32>
    %97 = arith.addf %95, %96 : vector<36x4xf32>
    %cst_51 = arith.constant 0.000000e+00 : f32
    %98 = vector.broadcast %cst_51 : f32 to vector<36x4xf32>
    %99 = arith.cmpf ogt, %97, %98 : vector<36x4xf32>
    %cst_52 = arith.constant 0.000000e+00 : f32
    %100 = vector.broadcast %cst_52 : f32 to vector<36x4xf32>
    %101 = arith.minimumf %97, %100 : vector<36x4xf32>
    %102 = math.exp %101 : vector<36x4xf32>
    %cst_53 = arith.constant 1.000000e+00 : f32
    %103 = vector.broadcast %cst_53 : f32 to vector<36x4xf32>
    %104 = arith.subf %102, %103 : vector<36x4xf32>
    %105 = arith.select %99, %97, %104 : vector<36x4xi1>, vector<36x4xf32>
    %cst_54 = arith.constant dense<0.000000e+00> : vector<36x8xf32>
    %106 = tpu.matmul %105, %65, %cst_54 {dimension_numbers = #tpu.dot_dimension_numbers<[1], [0], [0], [1], [0, 0, 1, 1], [], []>} : vector<36x4xf32>, vector<4x8xf32>, vector<36x8xf32> -> vector<36x8xf32>
    %107 = vector.broadcast %66 : vector<1x8xf32> to vector<36x8xf32>
    %108 = arith.addf %106, %107 : vector<36x8xf32>
    %109 = tpu.concatenate %87, %108 in 1 : vector<36x8xf32>, vector<36x8xf32> -> vector<36x16xf32>
    %110 = vector.extract_strided_slice %47 {offsets = [1, 0], sizes = [36, 16], strides = [1, 1]} : vector<38x16xf32> to vector<36x16xf32>
    %111 = arith.addf %109, %110 : vector<36x16xf32>
    %c32_i32_55 = arith.constant 32 : i32
    %112 = arith.muli %arg1, %c32_i32_55 : i32
    %c2_i32 = arith.constant 2 : i32
    %113 = arith.subi %112, %c2_i32 : i32
    %114 = tpu.iota {dimensions = array<i32: 0>} : vector<36x1xi32>
    %115 = vector.broadcast %113 : i32 to vector<36x1xi32>
    %116 = arith.addi %114, %115 : vector<36x1xi32>
    %c0_i32_56 = arith.constant 0 : i32
    %117 = vector.broadcast %c0_i32_56 : i32 to vector<36x1xi32>
    %118 = arith.cmpi sge, %116, %117 : vector<36x1xi32>
    %c80_i32_57 = arith.constant 80 : i32
    %119 = vector.broadcast %c80_i32_57 : i32 to vector<36x1xi32>
    %120 = arith.cmpi slt, %116, %119 : vector<36x1xi32>
    %121 = arith.andi %118, %120 : vector<36x1xi1>
    %cst_58 = arith.constant 0.000000e+00 : f32
    %122 = vector.shape_cast %121 : vector<36x1xi1> to vector<36x1xi1>
    %123 = vector.broadcast %122 : vector<36x1xi1> to vector<36x16xi1>
    %124 = vector.broadcast %cst_58 : f32 to vector<36x16xf32>
    %125 = arith.select %123, %111, %124 : vector<36x16xi1>, vector<36x16xf32>
    %cst_59 = arith.constant 0.000000e+00 : f32
    %126 = vector.broadcast %cst_59 : f32 to vector<36x16xf32>
    %127 = arith.cmpf ogt, %125, %126 : vector<36x16xf32>
    %cst_60 = arith.constant 0.000000e+00 : f32
    %128 = vector.broadcast %cst_60 : f32 to vector<36x16xf32>
    %129 = arith.minimumf %125, %128 : vector<36x16xf32>
    %130 = math.exp %129 : vector<36x16xf32>
    %cst_61 = arith.constant 1.000000e+00 : f32
    %131 = vector.broadcast %cst_61 : f32 to vector<36x16xf32>
    %132 = arith.subf %130, %131 : vector<36x16xf32>
    %133 = arith.select %127, %125, %132 : vector<36x16xi1>, vector<36x16xf32>
    %134 = vector.extract_strided_slice %133 {offsets = [0, 0], sizes = [36, 8], strides = [1, 1]} : vector<36x16xf32> to vector<36x8xf32>
    %135 = vector.extract_strided_slice %133 {offsets = [0, 8], sizes = [36, 8], strides = [1, 1]} : vector<36x16xf32> to vector<36x8xf32>
    %c0_62 = arith.constant 0 : index
    %c0_63 = arith.constant 0 : index
    %c0_64 = arith.constant 0 : index
    %136 = vector.load %arg13[%c0_62, %c0_63, %c0_64] : memref<3x8x4xf32, #tpu.memory_space<vmem>>, vector<1x8x4xf32>
    %137 = vector.shape_cast %136 : vector<1x8x4xf32> to vector<8x4xf32>
    %c1_65 = arith.constant 1 : index
    %c0_66 = arith.constant 0 : index
    %c0_67 = arith.constant 0 : index
    %138 = vector.load %arg13[%c1_65, %c0_66, %c0_67] : memref<3x8x4xf32, #tpu.memory_space<vmem>>, vector<1x8x4xf32>
    %139 = vector.shape_cast %138 : vector<1x8x4xf32> to vector<8x4xf32>
    %c2_68 = arith.constant 2 : index
    %c0_69 = arith.constant 0 : index
    %c0_70 = arith.constant 0 : index
    %140 = vector.load %arg13[%c2_68, %c0_69, %c0_70] : memref<3x8x4xf32, #tpu.memory_space<vmem>>, vector<1x8x4xf32>
    %141 = vector.shape_cast %140 : vector<1x8x4xf32> to vector<8x4xf32>
    %c0_71 = arith.constant 0 : index
    %c0_72 = arith.constant 0 : index
    %142 = vector.load %arg14[%c0_71, %c0_72] : memref<1x4xf32, #tpu.memory_space<vmem>>, vector<1x4xf32>
    %c0_73 = arith.constant 0 : index
    %c0_74 = arith.constant 0 : index
    %143 = vector.load %arg15[%c0_73, %c0_74] : memref<4x8xf32, #tpu.memory_space<vmem>>, vector<4x8xf32>
    %c0_75 = arith.constant 0 : index
    %c0_76 = arith.constant 0 : index
    %144 = vector.load %arg16[%c0_75, %c0_76] : memref<1x8xf32, #tpu.memory_space<vmem>>, vector<1x8xf32>
    %145 = vector.extract_strided_slice %135 {offsets = [0, 0], sizes = [32, 8], strides = [1, 1]} : vector<36x8xf32> to vector<32x8xf32>
    %cst_77 = arith.constant dense<0.000000e+00> : vector<32x4xf32>
    %146 = tpu.matmul %145, %137, %cst_77 {dimension_numbers = #tpu.dot_dimension_numbers<[1], [0], [0], [1], [0, 0, 1, 1], [], []>} : vector<32x8xf32>, vector<8x4xf32>, vector<32x4xf32> -> vector<32x4xf32>
    %147 = vector.extract_strided_slice %134 {offsets = [2, 0], sizes = [32, 8], strides = [1, 1]} : vector<36x8xf32> to vector<32x8xf32>
    %cst_78 = arith.constant dense<0.000000e+00> : vector<32x4xf32>
    %148 = tpu.matmul %147, %139, %cst_78 {dimension_numbers = #tpu.dot_dimension_numbers<[1], [0], [0], [1], [0, 0, 1, 1], [], []>} : vector<32x8xf32>, vector<8x4xf32>, vector<32x4xf32> -> vector<32x4xf32>
    %149 = arith.addf %146, %148 : vector<32x4xf32>
    %150 = vector.extract_strided_slice %135 {offsets = [3, 0], sizes = [32, 8], strides = [1, 1]} : vector<36x8xf32> to vector<32x8xf32>
    %cst_79 = arith.constant dense<0.000000e+00> : vector<32x4xf32>
    %151 = tpu.matmul %150, %141, %cst_79 {dimension_numbers = #tpu.dot_dimension_numbers<[1], [0], [0], [1], [0, 0, 1, 1], [], []>} : vector<32x8xf32>, vector<8x4xf32>, vector<32x4xf32> -> vector<32x4xf32>
    %152 = arith.addf %149, %151 : vector<32x4xf32>
    %153 = vector.broadcast %142 : vector<1x4xf32> to vector<32x4xf32>
    %154 = arith.addf %152, %153 : vector<32x4xf32>
    %cst_80 = arith.constant 0.000000e+00 : f32
    %155 = vector.broadcast %cst_80 : f32 to vector<32x4xf32>
    %156 = arith.cmpf ogt, %154, %155 : vector<32x4xf32>
    %cst_81 = arith.constant 0.000000e+00 : f32
    %157 = vector.broadcast %cst_81 : f32 to vector<32x4xf32>
    %158 = arith.minimumf %154, %157 : vector<32x4xf32>
    %159 = math.exp %158 : vector<32x4xf32>
    %cst_82 = arith.constant 1.000000e+00 : f32
    %160 = vector.broadcast %cst_82 : f32 to vector<32x4xf32>
    %161 = arith.subf %159, %160 : vector<32x4xf32>
    %162 = arith.select %156, %154, %161 : vector<32x4xi1>, vector<32x4xf32>
    %cst_83 = arith.constant dense<0.000000e+00> : vector<32x8xf32>
    %163 = tpu.matmul %162, %143, %cst_83 {dimension_numbers = #tpu.dot_dimension_numbers<[1], [0], [0], [1], [0, 0, 1, 1], [], []>} : vector<32x4xf32>, vector<4x8xf32>, vector<32x8xf32> -> vector<32x8xf32>
    %164 = vector.broadcast %144 : vector<1x8xf32> to vector<32x8xf32>
    %165 = arith.addf %163, %164 : vector<32x8xf32>
    %166 = vector.extract_strided_slice %134 {offsets = [1, 0], sizes = [32, 8], strides = [1, 1]} : vector<36x8xf32> to vector<32x8xf32>
    %cst_84 = arith.constant dense<0.000000e+00> : vector<32x4xf32>
    %167 = tpu.matmul %166, %137, %cst_84 {dimension_numbers = #tpu.dot_dimension_numbers<[1], [0], [0], [1], [0, 0, 1, 1], [], []>} : vector<32x8xf32>, vector<8x4xf32>, vector<32x4xf32> -> vector<32x4xf32>
    %168 = vector.extract_strided_slice %135 {offsets = [2, 0], sizes = [32, 8], strides = [1, 1]} : vector<36x8xf32> to vector<32x8xf32>
    %cst_85 = arith.constant dense<0.000000e+00> : vector<32x4xf32>
    %169 = tpu.matmul %168, %139, %cst_85 {dimension_numbers = #tpu.dot_dimension_numbers<[1], [0], [0], [1], [0, 0, 1, 1], [], []>} : vector<32x8xf32>, vector<8x4xf32>, vector<32x4xf32> -> vector<32x4xf32>
    %170 = arith.addf %167, %169 : vector<32x4xf32>
    %171 = vector.extract_strided_slice %134 {offsets = [4, 0], sizes = [32, 8], strides = [1, 1]} : vector<36x8xf32> to vector<32x8xf32>
    %cst_86 = arith.constant dense<0.000000e+00> : vector<32x4xf32>
    %172 = tpu.matmul %171, %141, %cst_86 {dimension_numbers = #tpu.dot_dimension_numbers<[1], [0], [0], [1], [0, 0, 1, 1], [], []>} : vector<32x8xf32>, vector<8x4xf32>, vector<32x4xf32> -> vector<32x4xf32>
    %173 = arith.addf %170, %172 : vector<32x4xf32>
    %174 = vector.broadcast %142 : vector<1x4xf32> to vector<32x4xf32>
    %175 = arith.addf %173, %174 : vector<32x4xf32>
    %cst_87 = arith.constant 0.000000e+00 : f32
    %176 = vector.broadcast %cst_87 : f32 to vector<32x4xf32>
    %177 = arith.cmpf ogt, %175, %176 : vector<32x4xf32>
    %cst_88 = arith.constant 0.000000e+00 : f32
    %178 = vector.broadcast %cst_88 : f32 to vector<32x4xf32>
    %179 = arith.minimumf %175, %178 : vector<32x4xf32>
    %180 = math.exp %179 : vector<32x4xf32>
    %cst_89 = arith.constant 1.000000e+00 : f32
    %181 = vector.broadcast %cst_89 : f32 to vector<32x4xf32>
    %182 = arith.subf %180, %181 : vector<32x4xf32>
    %183 = arith.select %177, %175, %182 : vector<32x4xi1>, vector<32x4xf32>
    %cst_90 = arith.constant dense<0.000000e+00> : vector<32x8xf32>
    %184 = tpu.matmul %183, %143, %cst_90 {dimension_numbers = #tpu.dot_dimension_numbers<[1], [0], [0], [1], [0, 0, 1, 1], [], []>} : vector<32x4xf32>, vector<4x8xf32>, vector<32x8xf32> -> vector<32x8xf32>
    %185 = vector.broadcast %144 : vector<1x8xf32> to vector<32x8xf32>
    %186 = arith.addf %184, %185 : vector<32x8xf32>
    %187 = tpu.concatenate %165, %186 in 1 : vector<32x8xf32>, vector<32x8xf32> -> vector<32x16xf32>
    %188 = vector.extract_strided_slice %125 {offsets = [2, 0], sizes = [32, 16], strides = [1, 1]} : vector<36x16xf32> to vector<32x16xf32>
    %189 = arith.addf %187, %188 : vector<32x16xf32>
    %c0_91 = arith.constant 0 : index
    %c0_92 = arith.constant 0 : index
    %c0_93 = arith.constant 0 : index
    %190 = vector.load %arg17[%c0_91, %c0_92, %c0_93] : memref<1x32x16xf32, #tpu.memory_space<vmem>>, vector<1x32x16xf32>
    %191 = vector.shape_cast %190 : vector<1x32x16xf32> to vector<32x16xf32>
    %192 = vector.shape_cast %189 : vector<32x16xf32> to vector<1x32x16xf32>
    tpu.vector_store %arg17[%c0_91, %c0_92, %c0_93], %192 {strides = array<i32>} : memref<1x32x16xf32, #tpu.memory_space<vmem>>, vector<1x32x16xf32>,
    return
  }
  func.func @transform_0(%arg0: i32, %arg1: i32) -> (i32, i32, i32) {
    %c0_i32 = arith.constant 0 : i32
    %c0_i32_0 = arith.constant 0 : i32
    return %arg0, %arg1, %c0_i32 : i32, i32, i32
  }
  func.func @transform_1(%arg0: i32, %arg1: i32) -> (i32, i32, i32) {
    %c1_i32 = arith.constant 1 : i32
    %0 = arith.addi %arg1, %c1_i32 : i32
    %c0_i32 = arith.constant 0 : i32
    %c0_i32_0 = arith.constant 0 : i32
    return %arg0, %0, %c0_i32 : i32, i32, i32
  }
  func.func @transform_2(%arg0: i32, %arg1: i32) -> (i32, i32, i32) {
    %c0_i32 = arith.constant 0 : i32
    %c0_i32_0 = arith.constant 0 : i32
    return %arg0, %arg1, %c0_i32 : i32, i32, i32
  }
  func.func @transform_3(%arg0: i32, %arg1: i32) -> (i32, i32, i32) {
    %c1_i32 = arith.constant 1 : i32
    %0 = arith.addi %arg1, %c1_i32 : i32
    %c0_i32 = arith.constant 0 : i32
    %c0_i32_0 = arith.constant 0 : i32
    return %arg0, %0, %c0_i32 : i32, i32, i32
  }
  func.func @transform_4(%arg0: i32, %arg1: i32) -> (i32, i32) {
    %c0_i32 = arith.constant 0 : i32
    %c0_i32_0 = arith.constant 0 : i32
    %c0_i32_1 = arith.constant 0 : i32
    return %c0_i32, %c0_i32_0 : i32, i32
  }
  func.func @transform_5(%arg0: i32, %arg1: i32) -> (i32, i32) {
    %c0_i32 = arith.constant 0 : i32
    %c0_i32_0 = arith.constant 0 : i32
    %c0_i32_1 = arith.constant 0 : i32
    return %c0_i32, %c0_i32_0 : i32, i32
  }
  func.func @transform_6(%arg0: i32, %arg1: i32) -> (i32, i32) {
    %c0_i32 = arith.constant 0 : i32
    %c0_i32_0 = arith.constant 0 : i32
    %c0_i32_1 = arith.constant 0 : i32
    return %c0_i32, %c0_i32_0 : i32, i32
  }
  func.func @transform_7(%arg0: i32, %arg1: i32) -> (i32, i32, i32) {
    %c0_i32 = arith.constant 0 : i32
    %c0_i32_0 = arith.constant 0 : i32
    %c0_i32_1 = arith.constant 0 : i32
    %c0_i32_2 = arith.constant 0 : i32
    return %c0_i32, %c0_i32_0, %c0_i32_1 : i32, i32, i32
  }
  func.func @transform_8(%arg0: i32, %arg1: i32) -> (i32, i32) {
    %c0_i32 = arith.constant 0 : i32
    %c0_i32_0 = arith.constant 0 : i32
    %c0_i32_1 = arith.constant 0 : i32
    return %c0_i32, %c0_i32_0 : i32, i32
  }
  func.func @transform_9(%arg0: i32, %arg1: i32) -> (i32, i32) {
    %c0_i32 = arith.constant 0 : i32
    %c0_i32_0 = arith.constant 0 : i32
    %c0_i32_1 = arith.constant 0 : i32
    return %c0_i32, %c0_i32_0 : i32, i32
  }
  func.func @transform_10(%arg0: i32, %arg1: i32) -> (i32, i32) {
    %c0_i32 = arith.constant 0 : i32
    %c0_i32_0 = arith.constant 0 : i32
    %c0_i32_1 = arith.constant 0 : i32
    return %c0_i32, %c0_i32_0 : i32, i32
  }
  func.func @transform_11(%arg0: i32, %arg1: i32) -> (i32, i32, i32) {
    %c0_i32 = arith.constant 0 : i32
    %c0_i32_0 = arith.constant 0 : i32
    %c0_i32_1 = arith.constant 0 : i32
    %c0_i32_2 = arith.constant 0 : i32
    return %c0_i32, %c0_i32_0, %c0_i32_1 : i32, i32, i32
  }
  func.func @transform_12(%arg0: i32, %arg1: i32) -> (i32, i32) {
    %c0_i32 = arith.constant 0 : i32
    %c0_i32_0 = arith.constant 0 : i32
    %c0_i32_1 = arith.constant 0 : i32
    return %c0_i32, %c0_i32_0 : i32, i32
  }
  func.func @transform_13(%arg0: i32, %arg1: i32) -> (i32, i32) {
    %c0_i32 = arith.constant 0 : i32
    %c0_i32_0 = arith.constant 0 : i32
    %c0_i32_1 = arith.constant 0 : i32
    return %c0_i32, %c0_i32_0 : i32, i32
  }
  func.func @transform_14(%arg0: i32, %arg1: i32) -> (i32, i32) {
    %c0_i32 = arith.constant 0 : i32
    %c0_i32_0 = arith.constant 0 : i32
    %c0_i32_1 = arith.constant 0 : i32
    return %c0_i32, %c0_i32_0 : i32, i32
  }
  func.func @transform_15(%arg0: i32, %arg1: i32) -> (i32, i32, i32) {
    %c0_i32 = arith.constant 0 : i32
    %c0_i32_0 = arith.constant 0 : i32
    return %arg0, %arg1, %c0_i32 : i32, i32, i32
  }
}

</mosaic_0001>

<llo_original>
// kernel: tpu_custom_call.1
$region0: #{tpu_custom_call.1}
  #allocation0 [shape = 'u32[]', space=smem, size = 0x4, offset = 0x4, fixed_abs, tag = 'smem constant byte address 0x4 - core index']
  #allocation1 [shape = 'u32[144,128]{1,0:T(1,128)}', space=vmem, size = 0x12000, scoped, tag = 'internal scratch']
  %s0 = inlined_call_operand.vmem [shape: f32[2,128,16], index: 0, kind: input, shape index: {}]
  %s1 = inlined_call_operand.vmem [shape: f32[2,128,16], index: 1, kind: input, shape index: {}]
  %s2 = inlined_call_operand.vmem [shape: f32[2,128,16], index: 2, kind: input, shape index: {}]
  %s3 = inlined_call_operand.vmem [shape: f32[2,128,16], index: 3, kind: input, shape index: {}]
  %s4 = inlined_call_operand.vmem [shape: f32[16,16], index: 4, kind: input, shape index: {}]
  %s5 = inlined_call_operand.vmem [shape: f32[16,16], index: 5, kind: input, shape index: {}]
  %s6 = inlined_call_operand.vmem [shape: f32[1,16], index: 6, kind: input, shape index: {}]
  %s7 = inlined_call_operand.vmem [shape: f32[3,8,4], index: 7, kind: input, shape index: {}]
  %s8 = inlined_call_operand.vmem [shape: f32[1,4], index: 8, kind: input, shape index: {}]
  %s9 = inlined_call_operand.vmem [shape: f32[4,8], index: 9, kind: input, shape index: {}]
  %s10 = inlined_call_operand.vmem [shape: f32[1,8], index: 10, kind: input, shape index: {}]
  %s11 = inlined_call_operand.vmem [shape: f32[3,8,4], index: 11, kind: input, shape index: {}]
  %s12 = inlined_call_operand.vmem [shape: f32[1,4], index: 12, kind: input, shape index: {}]
  %s13 = inlined_call_operand.vmem [shape: f32[4,8], index: 13, kind: input, shape index: {}]
  %s14 = inlined_call_operand.vmem [shape: f32[1,8], index: 14, kind: input, shape index: {}]
  %s15 = inlined_call_operand.vmem [shape: f32[2,96,16], index: 15, kind: output, shape index: {}]
  %s16 = sld [smem:[#allocation0]]
  $region93: #{tpu_custom_call.1} parent=0
    _
  %s18 = ssub.s32 1, %s16
  %s19 = scalar_select 0, %s18, %s16
  loop: start=0, step=1, limit=8
  $region2: #{tpu_custom_call.1} parent=0 // loop_pre_header
    _
  $region3: #{tpu_custom_call.1} parent=0 // loop_header
    %s21 = sphi 0, %s25
    %p22 = scmp.ge.s32.totalorder %s21, 8
    %s28 = sphi 0, %s40
    %s29 = sphi 0, %s36
    %s30 = sphi 0, %s28
    %s31 = sphi 0, %s29
    %s32 = sphi 0, %s30
    %s33 = sphi 0, %s31
    %s45 = sphi 0, %s47
    %s48 = sphi 0, %s45
    %s49 = sphi 0, %s48
    %s65 = sphi 0, %s49
    %s75 = sphi 0, %s77
    %s78 = sphi 0, %s75
    %s79 = sphi 0, %s78
    %s95 = sphi 0, %s79
    %s103 = sphi 0, %s105
    %s106 = sphi 0, %s103
    %s107 = sphi 0, %s106
    %s123 = sphi 0, %s107
    %s133 = sphi 0, %s135
    %s136 = sphi 0, %s133
    %s137 = sphi 0, %s136
    %s153 = sphi 0, %s137
    %s157 = sphi 0, %s157
    %s159 = sphi 0, %s157
    %s160 = sphi 0, %s159
    %s174 = sphi 0, %s160
    %s178 = sphi 0, %s178
    %s180 = sphi 0, %s178
    %s181 = sphi 0, %s180
    %s195 = sphi 0, %s181
    %s199 = sphi 0, %s199
    %s201 = sphi 0, %s199
    %s202 = sphi 0, %s201
    %s216 = sphi 0, %s202
    %s220 = sphi 0, %s220
    %s222 = sphi 0, %s220
    %s223 = sphi 0, %s222
    %s237 = sphi 0, %s223
    %s241 = sphi 0, %s241
    %s243 = sphi 0, %s241
    %s244 = sphi 0, %s243
    %s258 = sphi 0, %s244
    %s262 = sphi 0, %s262
    %s264 = sphi 0, %s262
    %s265 = sphi 0, %s264
    %s279 = sphi 0, %s265
    %s283 = sphi 0, %s283
    %s285 = sphi 0, %s283
    %s286 = sphi 0, %s285
    %s300 = sphi 0, %s286
    %s304 = sphi 0, %s304
    %s306 = sphi 0, %s304
    %s307 = sphi 0, %s306
    %s321 = sphi 0, %s307
    %s325 = sphi 0, %s325
    %s327 = sphi 0, %s325
    %s328 = sphi 0, %s327
    %s342 = sphi 0, %s328
    %s346 = sphi 0, %s346
    %s348 = sphi 0, %s346
    %s349 = sphi 0, %s348
    %s363 = sphi 0, %s349
    %s367 = sphi 0, %s367
    %s369 = sphi 0, %s367
    %s370 = sphi 0, %s369
    %s384 = sphi 0, %s370
    %s392 = sphi 0, %s394
    %s395 = sphi 0, %s392
    %s396 = sphi 0, %s395
    %s412 = sphi 0, %s396
  $region4: #{tpu_custom_call.1} parent=0 // loop_header_branch
    %24 = sbr.rel (%p22) target = $region8
  $region5: #{tpu_custom_call.1} parent=0 // loop_body
    %s26 = ssub.s32 %s21, 1
    %s27 = ssub.s32 %s21, 2
    %s34 = sadd.s32 1, %s29
    %p35 = scmp.ge.s32.totalorder %s34, 3
    %s36 = scalar_select %p35, 0, %s34
    %s37 = sadd.s32 1, %s28
    %s38 = scalar_select %p35, %s37, %s28
    %p39 = scmp.ge.s32.totalorder %s38, 2
    %s40 = scalar_select %p39, 0, %s38
    %s41 = ssub.s32 %s28, %s40
    %s42 = ssub.s32 %s29, %s36
    %s43 = sor.u32 %s41, %s42
    %p44 = scmp.eq.s32.totalorder %s43, 0
    %s46 = sadd.s32 %s45, 1
    %s47 = scalar_select %p44, %s45, %s46
    %p50 = pneg %p44
    %p51 = scmp.eq.s32.totalorder %s21, 5
    %p52 = por %p50, %p51
    %p53 = scmp.ne.s32.totalorder %s45, %s48
    %p54 = scmp.eq.s32.totalorder %s21, 0
    %p55 = por %p53, %p54
    %p56 = scmp.ne.s32.totalorder %s45, %s48
    %p57 = scmp.eq.s32.totalorder %s26, 5
    %p58 = por %p56, %p57
    %p59 = scmp.ne.s32.totalorder %s48, %s49
    %p60 = scmp.eq.s32.totalorder %s26, 0
    %p61 = por %p59, %p60
    %p62 = scmp.ne.s32.totalorder %s48, %s49
    %p63 = scmp.eq.s32.totalorder %s27, 5
    %p64 = por %p62, %p63
    %p66 = scmp.ne.s32.totalorder %s49, %s65
    %p67 = scmp.eq.s32.totalorder %s27, 0
    %p68 = por %p66, %p67
    %s69 = sadd.s32 %s29, 1
    %s70 = sadd.s32 %s36, 1
    %s71 = ssub.s32 %s28, %s40
    %s72 = ssub.s32 %s69, %s70
    %s73 = sor.u32 %s71, %s72
    %p74 = scmp.eq.s32.totalorder %s73, 0
    %s76 = sadd.s32 %s75, 1
    %s77 = scalar_select %p74, %s75, %s76
    %p80 = pneg %p74
    %p81 = scmp.eq.s32.totalorder %s21, 5
    %p82 = por %p80, %p81
    %p83 = scmp.ne.s32.totalorder %s75, %s78
    %p84 = scmp.eq.s32.totalorder %s21, 0
    %p85 = por %p83, %p84
    %p86 = scmp.ne.s32.totalorder %s75, %s78
    %p87 = scmp.eq.s32.totalorder %s26, 5
    %p88 = por %p86, %p87
    %p89 = scmp.ne.s32.totalorder %s78, %s79
    %p90 = scmp.eq.s32.totalorder %s26, 0
    %p91 = por %p89, %p90
    %p92 = scmp.ne.s32.totalorder %s78, %s79
    %p93 = scmp.eq.s32.totalorder %s27, 5
    %p94 = por %p92, %p93
    %p96 = scmp.ne.s32.totalorder %s79, %s95
    %p97 = scmp.eq.s32.totalorder %s27, 0
    %p98 = por %p96, %p97
    %s99 = ssub.s32 %s28, %s40
    %s100 = ssub.s32 %s29, %s36
    %s101 = sor.u32 %s99, %s100
    %p102 = scmp.eq.s32.totalorder %s101, 0
    %s104 = sadd.s32 %s103, 1
    %s105 = scalar_select %p102, %s103, %s104
    %p108 = pneg %p102
    %p109 = scmp.eq.s32.totalorder %s21, 5
    %p110 = por %p108, %p109
    %p111 = scmp.ne.s32.totalorder %s103, %s106
    %p112 = scmp.eq.s32.totalorder %s21, 0
    %p113 = por %p111, %p112
    %p114 = scmp.ne.s32.totalorder %s103, %s106
    %p115 = scmp.eq.s32.totalorder %s26, 5
    %p116 = por %p114, %p115
    %p117 = scmp.ne.s32.totalorder %s106, %s107
    %p118 = scmp.eq.s32.totalorder %s26, 0
    %p119 = por %p117, %p118
    %p120 = scmp.ne.s32.totalorder %s106, %s107
    %p121 = scmp.eq.s32.totalorder %s27, 5
    %p122 = por %p120, %p121
    %p124 = scmp.ne.s32.totalorder %s107, %s123
    %p125 = scmp.eq.s32.totalorder %s27, 0
    %p126 = por %p124, %p125
    %s127 = sadd.s32 %s29, 1
    %s128 = sadd.s32 %s36, 1
    %s129 = ssub.s32 %s28, %s40
    %s130 = ssub.s32 %s127, %s128
    %s131 = sor.u32 %s129, %s130
    %p132 = scmp.eq.s32.totalorder %s131, 0
    %s134 = sadd.s32 %s133, 1
    %s135 = scalar_select %p132, %s133, %s134
    %p138 = pneg %p132
    %p139 = scmp.eq.s32.totalorder %s21, 5
    %p140 = por %p138, %p139
    %p141 = scmp.ne.s32.totalorder %s133, %s136
    %p142 = scmp.eq.s32.totalorder %s21, 0
    %p143 = por %p141, %p142
    %p144 = scmp.ne.s32.totalorder %s133, %s136
    %p145 = scmp.eq.s32.totalorder %s26, 5
    %p146 = por %p144, %p145
    %p147 = scmp.ne.s32.totalorder %s136, %s137
    %p148 = scmp.eq.s32.totalorder %s26, 0
    %p149 = por %p147, %p148
    %p150 = scmp.ne.s32.totalorder %s136, %s137
    %p151 = scmp.eq.s32.totalorder %s27, 5
    %p152 = por %p150, %p151
    %p154 = scmp.ne.s32.totalorder %s137, %s153
    %p155 = scmp.eq.s32.totalorder %s27, 0
    %p156 = por %p154, %p155
    %s158 = sadd.s32 %s157, 1
    %p161 = scmp.eq.s32.totalorder %s21, 5
    %p162 = scmp.ne.s32.totalorder %s157, %s159
    %p163 = scmp.eq.s32.totalorder %s21, 0
    %p164 = por %p162, %p163
    %p165 = scmp.ne.s32.totalorder %s157, %s159
    %p166 = scmp.eq.s32.totalorder %s26, 5
    %p167 = por %p165, %p166
    %p168 = scmp.ne.s32.totalorder %s159, %s160
    %p169 = scmp.eq.s32.totalorder %s26, 0
    %p170 = por %p168, %p169
    %p171 = scmp.ne.s32.totalorder %s159, %s160
    %p172 = scmp.eq.s32.totalorder %s27, 5
    %p173 = por %p171, %p172
    %p175 = scmp.ne.s32.totalorder %s160, %s174
    %p176 = scmp.eq.s32.totalorder %s27, 0
    %p177 = por %p175, %p176
    %s179 = sadd.s32 %s178, 1
    %p182 = scmp.eq.s32.totalorder %s21, 5
    %p183 = scmp.ne.s32.totalorder %s178, %s180
    %p184 = scmp.eq.s32.totalorder %s21, 0
    %p185 = por %p183, %p184
    %p186 = scmp.ne.s32.totalorder %s178, %s180
    %p187 = scmp.eq.s32.totalorder %s26, 5
    %p188 = por %p186, %p187
    %p189 = scmp.ne.s32.totalorder %s180, %s181
    %p190 = scmp.eq.s32.totalorder %s26, 0
    %p191 = por %p189, %p190
    %p192 = scmp.ne.s32.totalorder %s180, %s181
    %p193 = scmp.eq.s32.totalorder %s27, 5
    %p194 = por %p192, %p193
    %p196 = scmp.ne.s32.totalorder %s181, %s195
    %p197 = scmp.eq.s32.totalorder %s27, 0
    %p198 = por %p196, %p197
    %s200 = sadd.s32 %s199, 1
    %p203 = scmp.eq.s32.totalorder %s21, 5
    %p204 = scmp.ne.s32.totalorder %s199, %s201
    %p205 = scmp.eq.s32.totalorder %s21, 0
    %p206 = por %p204, %p205
    %p207 = scmp.ne.s32.totalorder %s199, %s201
    %p208 = scmp.eq.s32.totalorder %s26, 5
    %p209 = por %p207, %p208
    %p210 = scmp.ne.s32.totalorder %s201, %s202
    %p211 = scmp.eq.s32.totalorder %s26, 0
    %p212 = por %p210, %p211
    %p213 = scmp.ne.s32.totalorder %s201, %s202
    %p214 = scmp.eq.s32.totalorder %s27, 5
    %p215 = por %p213, %p214
    %p217 = scmp.ne.s32.totalorder %s202, %s216
    %p218 = scmp.eq.s32.totalorder %s27, 0
    %p219 = por %p217, %p218
    %s221 = sadd.s32 %s220, 1
    %p224 = scmp.eq.s32.totalorder %s21, 5
    %p225 = scmp.ne.s32.totalorder %s220, %s222
    %p226 = scmp.eq.s32.totalorder %s21, 0
    %p227 = por %p225, %p226
    %p228 = scmp.ne.s32.totalorder %s220, %s222
    %p229 = scmp.eq.s32.totalorder %s26, 5
    %p230 = por %p228, %p229
    %p231 = scmp.ne.s32.totalorder %s222, %s223
    %p232 = scmp.eq.s32.totalorder %s26, 0
    %p233 = por %p231, %p232
    %p234 = scmp.ne.s32.totalorder %s222, %s223
    %p235 = scmp.eq.s32.totalorder %s27, 5
    %p236 = por %p234, %p235
    %p238 = scmp.ne.s32.totalorder %s223, %s237
    %p239 = scmp.eq.s32.totalorder %s27, 0
    %p240 = por %p238, %p239
    %s242 = sadd.s32 %s241, 1
    %p245 = scmp.eq.s32.totalorder %s21, 5
    %p246 = scmp.ne.s32.totalorder %s241, %s243
    %p247 = scmp.eq.s32.totalorder %s21, 0
    %p248 = por %p246, %p247
    %p249 = scmp.ne.s32.totalorder %s241, %s243
    %p250 = scmp.eq.s32.totalorder %s26, 5
    %p251 = por %p249, %p250
    %p252 = scmp.ne.s32.totalorder %s243, %s244
    %p253 = scmp.eq.s32.totalorder %s26, 0
    %p254 = por %p252, %p253
    %p255 = scmp.ne.s32.totalorder %s243, %s244
    %p256 = scmp.eq.s32.totalorder %s27, 5
    %p257 = por %p255, %p256
    %p259 = scmp.ne.s32.totalorder %s244, %s258
    %p260 = scmp.eq.s32.totalorder %s27, 0
    %p261 = por %p259, %p260
    %s263 = sadd.s32 %s262, 1
    %p266 = scmp.eq.s32.totalorder %s21, 5
    %p267 = scmp.ne.s32.totalorder %s262, %s264
    %p268 = scmp.eq.s32.totalorder %s21, 0
    %p269 = por %p267, %p268
    %p270 = scmp.ne.s32.totalorder %s262, %s264
    %p271 = scmp.eq.s32.totalorder %s26, 5
    %p272 = por %p270, %p271
    %p273 = scmp.ne.s32.totalorder %s264, %s265
    %p274 = scmp.eq.s32.totalorder %s26, 0
    %p275 = por %p273, %p274
    %p276 = scmp.ne.s32.totalorder %s264, %s265
    %p277 = scmp.eq.s32.totalorder %s27, 5
    %p278 = por %p276, %p277
    %p280 = scmp.ne.s32.totalorder %s265, %s279
    %p281 = scmp.eq.s32.totalorder %s27, 0
    %p282 = por %p280, %p281
    %s284 = sadd.s32 %s283, 1
    %p287 = scmp.eq.s32.totalorder %s21, 5
    %p288 = scmp.ne.s32.totalorder %s283, %s285
    %p289 = scmp.eq.s32.totalorder %s21, 0
    %p290 = por %p288, %p289
    %p291 = scmp.ne.s32.totalorder %s283, %s285
    %p292 = scmp.eq.s32.totalorder %s26, 5
    %p293 = por %p291, %p292
    %p294 = scmp.ne.s32.totalorder %s285, %s286
    %p295 = scmp.eq.s32.totalorder %s26, 0
    %p296 = por %p294, %p295
    %p297 = scmp.ne.s32.totalorder %s285, %s286
    %p298 = scmp.eq.s32.totalorder %s27, 5
    %p299 = por %p297, %p298
    %p301 = scmp.ne.s32.totalorder %s286, %s300
    %p302 = scmp.eq.s32.totalorder %s27, 0
    %p303 = por %p301, %p302
    %s305 = sadd.s32 %s304, 1
    %p308 = scmp.eq.s32.totalorder %s21, 5
    %p309 = scmp.ne.s32.totalorder %s304, %s306
    %p310 = scmp.eq.s32.totalorder %s21, 0
    %p311 = por %p309, %p310
    %p312 = scmp.ne.s32.totalorder %s304, %s306
    %p313 = scmp.eq.s32.totalorder %s26, 5
    %p314 = por %p312, %p313
    %p315 = scmp.ne.s32.totalorder %s306, %s307
    %p316 = scmp.eq.s32.totalorder %s26, 0
    %p317 = por %p315, %p316
    %p318 = scmp.ne.s32.totalorder %s306, %s307
    %p319 = scmp.eq.s32.totalorder %s27, 5
    %p320 = por %p318, %p319
    %p322 = scmp.ne.s32.totalorder %s307, %s321
    %p323 = scmp.eq.s32.totalorder %s27, 0
    %p324 = por %p322, %p323
    %s326 = sadd.s32 %s325, 1
    %p329 = scmp.eq.s32.totalorder %s21, 5
    %p330 = scmp.ne.s32.totalorder %s325, %s327
    %p331 = scmp.eq.s32.totalorder %s21, 0
    %p332 = por %p330, %p331
    %p333 = scmp.ne.s32.totalorder %s325, %s327
    %p334 = scmp.eq.s32.totalorder %s26, 5
    %p335 = por %p333, %p334
    %p336 = scmp.ne.s32.totalorder %s327, %s328
    %p337 = scmp.eq.s32.totalorder %s26, 0
    %p338 = por %p336, %p337
    %p339 = scmp.ne.s32.totalorder %s327, %s328
    %p340 = scmp.eq.s32.totalorder %s27, 5
    %p341 = por %p339, %p340
    %p343 = scmp.ne.s32.totalorder %s328, %s342
    %p344 = scmp.eq.s32.totalorder %s27, 0
    %p345 = por %p343, %p344
    %s347 = sadd.s32 %s346, 1
    %p350 = scmp.eq.s32.totalorder %s21, 5
    %p351 = scmp.ne.s32.totalorder %s346, %s348
    %p352 = scmp.eq.s32.totalorder %s21, 0
    %p353 = por %p351, %p352
    %p354 = scmp.ne.s32.totalorder %s346, %s348
    %p355 = scmp.eq.s32.totalorder %s26, 5
    %p356 = por %p354, %p355
    %p357 = scmp.ne.s32.totalorder %s348, %s349
    %p358 = scmp.eq.s32.totalorder %s26, 0
    %p359 = por %p357, %p358
    %p360 = scmp.ne.s32.totalorder %s348, %s349
    %p361 = scmp.eq.s32.totalorder %s27, 5
    %p362 = por %p360, %p361
    %p364 = scmp.ne.s32.totalorder %s349, %s363
    %p365 = scmp.eq.s32.totalorder %s27, 0
    %p366 = por %p364, %p365
    %s368 = sadd.s32 %s367, 1
    %p371 = scmp.eq.s32.totalorder %s21, 5
    %p372 = scmp.ne.s32.totalorder %s367, %s369
    %p373 = scmp.eq.s32.totalorder %s21, 0
    %p374 = por %p372, %p373
    %p375 = scmp.ne.s32.totalorder %s367, %s369
    %p376 = scmp.eq.s32.totalorder %s26, 5
    %p377 = por %p375, %p376
    %p378 = scmp.ne.s32.totalorder %s369, %s370
    %p379 = scmp.eq.s32.totalorder %s26, 0
    %p380 = por %p378, %p379
    %p381 = scmp.ne.s32.totalorder %s369, %s370
    %p382 = scmp.eq.s32.totalorder %s27, 5
    %p383 = por %p381, %p382
    %p385 = scmp.ne.s32.totalorder %s370, %s384
    %p386 = scmp.eq.s32.totalorder %s27, 0
    %p387 = por %p385, %p386
    %s388 = ssub.s32 %s28, %s40
    %s389 = ssub.s32 %s29, %s36
    %s390 = sor.u32 %s388, %s389
    %p391 = scmp.eq.s32.totalorder %s390, 0
    %s393 = sadd.s32 %s392, 1
    %s394 = scalar_select %p391, %s392, %s393
    %p397 = pneg %p391
    %p398 = scmp.eq.s32.totalorder %s21, 5
    %p399 = por %p397, %p398
    %p400 = scmp.ne.s32.totalorder %s392, %s395
    %p401 = scmp.eq.s32.totalorder %s21, 0
    %p402 = por %p400, %p401
    %p403 = scmp.ne.s32.totalorder %s392, %s395
    %p404 = scmp.eq.s32.totalorder %s26, 5
    %p405 = por %p403, %p404
    %p406 = scmp.ne.s32.totalorder %s395, %s396
    %p407 = scmp.eq.s32.totalorder %s26, 0
    %p408 = por %p406, %p407
    %p409 = scmp.ne.s32.totalorder %s395, %s396
    %p410 = scmp.eq.s32.totalorder %s27, 5
    %p411 = por %p409, %p410
    %p413 = scmp.ne.s32.totalorder %s396, %s412
    %p414 = scmp.eq.s32.totalorder %s27, 0
    %p415 = por %p413, %p414
    %p416 = scmp.le.s32.totalorder 1, %s21
    %p417 = scmp.lt.s32.totalorder %s21, 7
    %p418 = pnand %p416, %p417
    %p419 = pneg %p418
    // Predicated region
    $region9: #{tpu_custom_call.1} parent=5 // pred_check
      _
    $region10: #{tpu_custom_call.1} parent=5 // pred_check_branch
      %421 = sbr.rel (%p418) target = $region12
    $region11: #{tpu_custom_call.1} parent=5 // pred_region
      %s422 = ssub.s32 %s21, 1
      // Predicated region
      $region13: #{tpu_custom_call.1} parent=11 // pred_check
        %p423 = pneg %p170
      $region14: #{tpu_custom_call.1} parent=11 // pred_check_branch
        %425 = sbr.rel (%p423) target = $region16
      $region15: #{tpu_custom_call.1} parent=11 // pred_region
        _
      $region16: #{tpu_custom_call.1} parent=11 // pred_fallthru
        _
      // Predicated region
      $region17: #{tpu_custom_call.1} parent=11 // pred_check
        %p426 = pneg %p191
      $region18: #{tpu_custom_call.1} parent=11 // pred_check_branch
        %428 = sbr.rel (%p426) target = $region20
      $region19: #{tpu_custom_call.1} parent=11 // pred_region
        _
      $region20: #{tpu_custom_call.1} parent=11 // pred_fallthru
        _
      // Predicated region
      $region21: #{tpu_custom_call.1} parent=11 // pred_check
        %p429 = pneg %p212
      $region22: #{tpu_custom_call.1} parent=11 // pred_check_branch
        %431 = sbr.rel (%p429) target = $region24
      $region23: #{tpu_custom_call.1} parent=11 // pred_region
        _
      $region24: #{tpu_custom_call.1} parent=11 // pred_fallthru
        _
      // Predicated region
      $region25: #{tpu_custom_call.1} parent=11 // pred_check
        %p432 = pneg %p233
      $region26: #{tpu_custom_call.1} parent=11 // pred_check_branch
        %434 = sbr.rel (%p432) target = $region28
      $region27: #{tpu_custom_call.1} parent=11 // pred_region
        _
      $region28: #{tpu_custom_call.1} parent=11 // pred_fallthru
        _
      // Predicated region
      $region29: #{tpu_custom_call.1} parent=11 // pred_check
        %p435 = pneg %p254
      $region30: #{tpu_custom_call.1} parent=11 // pred_check_branch
        %437 = sbr.rel (%p435) target = $region32
      $region31: #{tpu_custom_call.1} parent=11 // pred_region
        _
      $region32: #{tpu_custom_call.1} parent=11 // pred_fallthru
        _
      // Predicated region
      $region33: #{tpu_custom_call.1} parent=11 // pred_check
        %p438 = pneg %p275
      $region34: #{tpu_custom_call.1} parent=11 // pred_check_branch
        %440 = sbr.rel (%p438) target = $region36
      $region35: #{tpu_custom_call.1} parent=11 // pred_region
        _
      $region36: #{tpu_custom_call.1} parent=11 // pred_fallthru
        _
      // Predicated region
      $region37: #{tpu_custom_call.1} parent=11 // pred_check
        %p441 = pneg %p296
      $region38: #{tpu_custom_call.1} parent=11 // pred_check_branch
        %443 = sbr.rel (%p441) target = $region40
      $region39: #{tpu_custom_call.1} parent=11 // pred_region
        _
      $region40: #{tpu_custom_call.1} parent=11 // pred_fallthru
        _
      // Predicated region
      $region41: #{tpu_custom_call.1} parent=11 // pred_check
        %p444 = pneg %p317
      $region42: #{tpu_custom_call.1} parent=11 // pred_check_branch
        %446 = sbr.rel (%p444) target = $region44
      $region43: #{tpu_custom_call.1} parent=11 // pred_region
        _
      $region44: #{tpu_custom_call.1} parent=11 // pred_fallthru
        _
      // Predicated region
      $region45: #{tpu_custom_call.1} parent=11 // pred_check
        %p447 = pneg %p338
      $region46: #{tpu_custom_call.1} parent=11 // pred_check_branch
        %449 = sbr.rel (%p447) target = $region48
      $region47: #{tpu_custom_call.1} parent=11 // pred_region
        _
      $region48: #{tpu_custom_call.1} parent=11 // pred_fallthru
        _
      // Predicated region
      $region49: #{tpu_custom_call.1} parent=11 // pred_check
        %p450 = pneg %p359
      $region50: #{tpu_custom_call.1} parent=11 // pred_check_branch
        %452 = sbr.rel (%p450) target = $region52
      $region51: #{tpu_custom_call.1} parent=11 // pred_region
        _
      $region52: #{tpu_custom_call.1} parent=11 // pred_fallthru
        _
      // Predicated region
      $region53: #{tpu_custom_call.1} parent=11 // pred_check
        %p453 = pneg %p380
      $region54: #{tpu_custom_call.1} parent=11 // pred_check_branch
        %455 = sbr.rel (%p453) target = $region56
      $region55: #{tpu_custom_call.1} parent=11 // pred_region
        _
      $region56: #{tpu_custom_call.1} parent=11 // pred_fallthru
        _
    $region12: #{tpu_custom_call.1} parent=5 // pred_fallthru
      _
    %p456 = scmp.lt.s32.totalorder %s21, 6
    // Predicated region
    $region57: #{tpu_custom_call.1} parent=5 // pred_check
      %p457 = pneg %p456
    $region58: #{tpu_custom_call.1} parent=5 // pred_check_branch
      %459 = sbr.rel (%p457) target = $region60
    $region59: #{tpu_custom_call.1} parent=5 // pred_region
      // Predicated region
      $region61: #{tpu_custom_call.1} parent=59 // pred_check
        %p460 = pneg %p55
      $region62: #{tpu_custom_call.1} parent=59 // pred_check_branch
        %462 = sbr.rel (%p460) target = $region64
      $region63: #{tpu_custom_call.1} parent=59 // pred_region
        %s463 = smul.u32 4, %s29
        %p464 = scmp.lt.s32.totalorder %s28, 1
        %s465 = scalar_select %p464, %s28, 1
        %p466 = scmp.lt.s32.totalorder %s463, 15
        %s467 = scalar_select %p466, %s463, 15
        %s468 = smul.addr %s465, 16
        %s469 = sadd.s32 %s467, %s468
        %s470 = smul.addr %s469, 8
        %s471 = scalar_lea.vmem %s0, %s470
        %s472 = smul.u32 4, %s29
      $region64: #{tpu_custom_call.1} parent=59 // pred_fallthru
        _
      // Predicated region
      $region65: #{tpu_custom_call.1} parent=59 // pred_check
        %p473 = pneg %p85
      $region66: #{tpu_custom_call.1} parent=59 // pred_check_branch
        %475 = sbr.rel (%p473) target = $region68
      $region67: #{tpu_custom_call.1} parent=59 // pred_region
        %s476 = sadd.s32 %s29, 1
        %s477 = smul.u32 4, %s476
        %p478 = scmp.lt.s32.totalorder %s28, 1
        %s479 = scalar_select %p478, %s28, 1
        %p480 = scmp.lt.s32.totalorder %s477, 15
        %s481 = scalar_select %p480, %s477, 15
        %s482 = smul.addr %s479, 16
        %s483 = sadd.s32 %s481, %s482
        %s484 = smul.addr %s483, 8
        %s485 = scalar_lea.vmem %s1, %s484
        %s486 = sadd.s32 %s29, 1
        %s487 = smul.u32 4, %s486
      $region68: #{tpu_custom_call.1} parent=59 // pred_fallthru
        _
      // Predicated region
      $region69: #{tpu_custom_call.1} parent=59 // pred_check
        %p488 = pneg %p113
      $region70: #{tpu_custom_call.1} parent=59 // pred_check_branch
        %490 = sbr.rel (%p488) target = $region72
      $region71: #{tpu_custom_call.1} parent=59 // pred_region
        %s491 = smul.u32 4, %s29
        %p492 = scmp.lt.s32.totalorder %s28, 1
        %s493 = scalar_select %p492, %s28, 1
        %p494 = scmp.lt.s32.totalorder %s491, 15
        %s495 = scalar_select %p494, %s491, 15
        %s496 = smul.addr %s493, 16
        %s497 = sadd.s32 %s495, %s496
        %s498 = smul.addr %s497, 8
        %s499 = scalar_lea.vmem %s2, %s498
        %s500 = smul.u32 4, %s29
      $region72: #{tpu_custom_call.1} parent=59 // pred_fallthru
        _
      // Predicated region
      $region73: #{tpu_custom_call.1} parent=59 // pred_check
        %p501 = pneg %p143
      $region74: #{tpu_custom_call.1} parent=59 // pred_check_branch
        %503 = sbr.rel (%p501) target = $region76
      $region75: #{tpu_custom_call.1} parent=59 // pred_region
        %s504 = sadd.s32 %s29, 1
        %s505 = smul.u32 4, %s504
        %p506 = scmp.lt.s32.totalorder %s28, 1
        %s507 = scalar_select %p506, %s28, 1
        %p508 = scmp.lt.s32.totalorder %s505, 15
        %s509 = scalar_select %p508, %s505, 15
        %s510 = smul.addr %s507, 16
        %s511 = sadd.s32 %s509, %s510
        %s512 = smul.addr %s511, 8
        %s513 = scalar_lea.vmem %s3, %s512
        %s514 = sadd.s32 %s29, 1
        %s515 = smul.u32 4, %s514
      $region76: #{tpu_custom_call.1} parent=59 // pred_fallthru
        _
    $region60: #{tpu_custom_call.1} parent=5 // pred_fallthru
      _
    %p516 = scmp.le.s32.totalorder 1, %s21
    %p517 = scmp.lt.s32.totalorder %s21, 7
    %p518 = pnand %p516, %p517
    %p519 = pneg %p518
    // Predicated region
    $region77: #{tpu_custom_call.1} parent=5 // pred_check
      _
    $region78: #{tpu_custom_call.1} parent=5 // pred_check_branch
      %521 = sbr.rel (%p518) target = $region80
    $region79: #{tpu_custom_call.1} parent=5 // pred_region
      %s522 = ssub.s32 %s21, 1
      %s523 = smul.u32 4, %s31
      %p524 = scmp.lt.s32.totalorder %s30, 1
      %s525 = scalar_select %p524, %s30, 1
      %p526 = scmp.lt.s32.totalorder %s523, 15
      %s527 = scalar_select %p526, %s523, 15
      %s528 = smul.addr %s525, 16
      %s529 = sadd.s32 %s527, %s528
      %s530 = smul.addr %s529, 8
      %s531 = scalar_lea.vmem %s0, %s530
      %p532 = pneg %p61
      %p533 = pneg %p58
      %s534 = sadd.s32 %s31, 1
      %s535 = smul.u32 4, %s534
      %p536 = scmp.lt.s32.totalorder %s30, 1
      %s537 = scalar_select %p536, %s30, 1
      %p538 = scmp.lt.s32.totalorder %s535, 15
      %s539 = scalar_select %p538, %s535, 15
      %s540 = smul.addr %s537, 16
      %s541 = sadd.s32 %s539, %s540
      %s542 = smul.addr %s541, 8
      %s543 = scalar_lea.vmem %s1, %s542
      %p544 = pneg %p91
      %p545 = pneg %p88
      %s546 = smul.u32 4, %s31
      %p547 = scmp.lt.s32.totalorder %s30, 1
      %s548 = scalar_select %p547, %s30, 1
      %p549 = scmp.lt.s32.totalorder %s546, 15
      %s550 = scalar_select %p549, %s546, 15
      %s551 = smul.addr %s548, 16
      %s552 = sadd.s32 %s550, %s551
      %s553 = smul.addr %s552, 8
      %s554 = scalar_lea.vmem %s2, %s553
      %p555 = pneg %p119
      %p556 = pneg %p116
      %s557 = sadd.s32 %s31, 1
      %s558 = smul.u32 4, %s557
      %p559 = scmp.lt.s32.totalorder %s30, 1
      %s560 = scalar_select %p559, %s30, 1
      %p561 = scmp.lt.s32.totalorder %s558, 15
      %s562 = scalar_select %p561, %s558, 15
      %s563 = smul.addr %s560, 16
      %s564 = sadd.s32 %s562, %s563
      %s565 = smul.addr %s564, 8
      %s566 = scalar_lea.vmem %s3, %s565
      %p567 = pneg %p149
      %p568 = pneg %p146
      %p569 = pneg %p170
      %p570 = pneg %p167
      %p571 = pneg %p191
      %p572 = pneg %p188
      %p573 = pneg %p212
      %p574 = pneg %p209
      %p575 = pneg %p233
      %p576 = pneg %p230
      %p577 = pneg %p254
      %p578 = pneg %p251
      %p579 = pneg %p275
      %p580 = pneg %p272
      %p581 = pneg %p296
      %p582 = pneg %p293
      %p583 = pneg %p317
      %p584 = pneg %p314
      %p585 = pneg %p338
      %p586 = pneg %p335
      %p587 = pneg %p359
      %p588 = pneg %p356
      %p589 = pneg %p380
      %p590 = pneg %p377
      %p591 = pneg %p408
      %p592 = pneg %p405
      %s593 = smul.u32 4, %s31
      %p594 = scmp.lt.s32.totalorder %s30, 1
      %s595 = scalar_select %p594, %s30, 1
      %p596 = scmp.lt.s32.totalorder %s593, 11
      %s597 = scalar_select %p596, %s593, 11
      %s598 = smul.addr %s595, 12
      %s599 = sadd.s32 %s597, %s598
      %s600 = smul.addr %s599, 8
      %s601 = scalar_lea.vmem %s15, %s600
      %s602 = smul.u32 4, %s31
      %p603 = scmp.lt.s32.totalorder %s30, 1
      %s604 = scalar_select %p603, %s30, 1
      %p605 = scmp.lt.s32.totalorder %s602, 15
      %s606 = scalar_select %p605, %s602, 15
      %s607 = smul.addr %s604, 16
      %s608 = sadd.s32 %s606, %s607
      %s609 = smul.addr %s608, 8
      %s610 = scalar_lea.vmem %s0, %s609
      %s611 = smul.u32 4, %s31
      %s612 = sadd.s32 %s31, 1
      %s613 = smul.u32 4, %s612
      %p614 = scmp.lt.s32.totalorder %s30, 1
      %s615 = scalar_select %p614, %s30, 1
      %p616 = scmp.lt.s32.totalorder %s613, 15
      %s617 = scalar_select %p616, %s613, 15
      %s618 = smul.addr %s615, 16
      %s619 = sadd.s32 %s617, %s618
      %s620 = smul.addr %s619, 8
      %s621 = scalar_lea.vmem %s1, %s620
      %s622 = sadd.s32 %s31, 1
      %s623 = smul.u32 4, %s622
      %s624 = smul.u32 4, %s31
      %p625 = scmp.lt.s32.totalorder %s30, 1
      %s626 = scalar_select %p625, %s30, 1
      %p627 = scmp.lt.s32.totalorder %s624, 15
      %s628 = scalar_select %p627, %s624, 15
      %s629 = smul.addr %s626, 16
      %s630 = sadd.s32 %s628, %s629
      %s631 = smul.addr %s630, 8
      %s632 = scalar_lea.vmem %s2, %s631
      %s633 = smul.u32 4, %s31
      %s634 = sadd.s32 %s31, 1
      %s635 = smul.u32 4, %s634
      %p636 = scmp.lt.s32.totalorder %s30, 1
      %s637 = scalar_select %p636, %s30, 1
      %p638 = scmp.lt.s32.totalorder %s635, 15
      %s639 = scalar_select %p638, %s635, 15
      %s640 = smul.addr %s637, 16
      %s641 = sadd.s32 %s639, %s640
      %s642 = smul.addr %s641, 8
      %s643 = scalar_lea.vmem %s3, %s642
      %s644 = sadd.s32 %s31, 1
      %s645 = smul.u32 4, %s644
      %s646 = smul.u32 4, %s31
      %p647 = scmp.lt.s32.totalorder %s30, 1
      %s648 = scalar_select %p647, %s30, 1
      %p649 = scmp.lt.s32.totalorder %s646, 11
      %s650 = scalar_select %p649, %s646, 11
      %s651 = smul.addr %s648, 12
      %s652 = sadd.s32 %s650, %s651
      %s653 = smul.addr %s652, 8
      %s654 = scalar_lea.vmem %s15, %s653
      %s655 = smul.u32 4, %s31
      %v656 = vld [vmem:[%s610] sm:$0xff]
      %v657 = vld [vmem:[%s610 + $0x8] sm:$0xff]
      %v658 = vld [vmem:[%s610 + $0x10] sm:$0xff]
      %v659 = vld [vmem:[%s610 + $0x18] sm:$0xff]
      %v660 = vld [vmem:[%s621] sm:$0x3f]
      %v661 = vld [vmem:[%s632] sm:$0xff]
      %v662 = vld [vmem:[%s632 + $0x8] sm:$0xff]
      %v663 = vld [vmem:[%s632 + $0x10] sm:$0xff]
      %v664 = vld [vmem:[%s632 + $0x18] sm:$0xff]
      %v665 = vld [vmem:[%s643] sm:$0x3f]
      %vm666 = vcmp.gt.f32.partialorder %v656, 0.0
      %vm667 = vcmp.gt.f32.partialorder %v657, 0.0
      %vm668 = vcmp.gt.f32.partialorder %v658, 0.0
      %vm669 = vcmp.gt.f32.partialorder %v659, 0.0
      %vm670 = vcmp.gt.f32.partialorder %v660, 0.0
      %v671 = vmin.f32 %v656, 0.0
      %v672 = vmin.f32 %v657, 0.0
      %v673 = vmin.f32 %v658, 0.0
      %v674 = vmin.f32 %v659, 0.0
      %v675 = vmin.f32 %v660, 0.0
      %v676 = vmul.f32 %v671, 1.442695
      %v677 = vpow.pop %v676
      %v678 = vmul.f32 %v672, 1.442695
      %v679 = vpow.pop %v678
      %v680 = vmul.f32 %v673, 1.442695
      %v681 = vpow.pop %v680
      %v682 = vmul.f32 %v674, 1.442695
      %v683 = vpow.pop %v682
      %v684 = vmul.f32 %v675, 1.442695
      %v685 = vpow.pop %v684
      %v686 = vsub.f32 %v677, 1.0
      %v687 = vsub.f32 %v679, 1.0
      %v688 = vsub.f32 %v681, 1.0
      %v689 = vsub.f32 %v683, 1.0
      %v690 = vsub.f32 %v685, 1.0
      %v691 = vsel %vm666, %v656, %v686
      %v692 = vsel %vm667, %v657, %v687
      %v693 = vsel %vm668, %v658, %v688
      %v694 = vsel %vm669, %v659, %v689
      %v695 = vsel %vm670, %v660, %v690
      %vm696 = vcmp.gt.f32.partialorder %v661, 0.0
      %vm697 = vcmp.gt.f32.partialorder %v662, 0.0
      %vm698 = vcmp.gt.f32.partialorder %v663, 0.0
      %vm699 = vcmp.gt.f32.partialorder %v664, 0.0
      %vm700 = vcmp.gt.f32.partialorder %v665, 0.0
      %v701 = vmin.f32 %v661, 0.0
      %v702 = vmin.f32 %v662, 0.0
      %v703 = vmin.f32 %v663, 0.0
      %v704 = vmin.f32 %v664, 0.0
      %v705 = vmin.f32 %v665, 0.0
      %v706 = vmul.f32 %v701, 1.442695
      %v707 = vpow.pop %v706
      %v708 = vmul.f32 %v702, 1.442695
      %v709 = vpow.pop %v708
      %v710 = vmul.f32 %v703, 1.442695
      %v711 = vpow.pop %v710
      %v712 = vmul.f32 %v704, 1.442695
      %v713 = vpow.pop %v712
      %v714 = vmul.f32 %v705, 1.442695
      %v715 = vpow.pop %v714
      %v716 = vsub.f32 %v707, 1.0
      %v717 = vsub.f32 %v709, 1.0
      %v718 = vsub.f32 %v711, 1.0
      %v719 = vsub.f32 %v713, 1.0
      %v720 = vsub.f32 %v715, 1.0
      %v721 = vsel %vm696, %v661, %v716
      %v722 = vsel %vm697, %v662, %v717
      %v723 = vsel %vm698, %v663, %v718
      %v724 = vsel %vm699, %v664, %v719
      %v725 = vsel %vm700, %v665, %v720
      %v726 = vld [vmem:[%s4] sm:$0xff]
      %v727 = vld [vmem:[%s4 + $0x8] sm:$0xff]
      %v728 = vld [vmem:[%s5] sm:$0xff]
      %v729 = vld [vmem:[%s5 + $0x8] sm:$0xff]
      %vm730 = vcmask 130048
      %v732 = vsel %vm730, %v721, 0
      %v735 = vsel %vm730, %v722, 0
      %v738 = vsel %vm730, %v723, 0
      %v741 = vsel %vm730, %v724, 0
      %v744 = vsel %vm730, %v725, 0
      %746 = vmatprep.subr.mxu0 0.0
      %747 = vmatpush1.msra.mxu0 %v728
      %748 = vmatprep.subr.mxu0 0.0
      %749 = vmatpush1.msra.mxu0 %v729
      %750 = vmatprep.subr.mxu0 0.0
      %751 = vmatpush1.msra.mxu0 0.0
      %752 = vmatprep.subr.mxu0 0.0
      %753 = vmatpush1.msra.mxu0 0.0
      %754 = vmatprep.subr.mxu0 0.0
      %755 = vmatpush1.msra.mxu0 0.0
      %756 = vmatprep.subr.mxu0 0.0
      %757 = vmatpush1.msra.mxu0 0.0
      %758 = vmatprep.subr.mxu0 0.0
      %759 = vmatpush1.msra.mxu0 0.0
      %760 = vmatprep.subr.mxu0 0.0
      %761 = vmatpush1.msra.mxu0 0.0
      %762 = vmatprep.subr.mxu0 0.0
      %763 = vmatpush1.msra.mxu0 0.0
      %764 = vmatprep.subr.mxu0 0.0
      %765 = vmatpush1.msra.mxu0 0.0
      %766 = vmatprep.subr.mxu0 0.0
      %767 = vmatpush1.msra.mxu0 0.0
      %768 = vmatprep.subr.mxu0 0.0
      %769 = vmatpush1.msra.mxu0 0.0
      %770 = vmatprep.subr.mxu0 0.0
      %771 = vmatpush1.msra.mxu0 0.0
      %772 = vmatprep.subr.mxu0 0.0
      %773 = vmatpush1.msra.mxu0 0.0
      %774 = vmatprep.subr.mxu0 0.0
      %775 = vmatpush1.msra.mxu0 0.0
      %776 = vmatprep.subr.mxu0 0.0
      %777 = vmatpush1.msra.mxu0 0.0
      %778 = vmatprep.subr.mxu0 0.0
      %779 = vmatpush1.msra.mxu0 0.0
      %780 = vmatprep.subr.mxu0 0.0
      %781 = vmatpush1.msra.mxu0 0.0
      %782 = vmatprep.subr.mxu0 0.0
      %783 = vmatpush1.msra.mxu0 0.0
      %784 = vmatprep.subr.mxu0 0.0
      %785 = vmatpush1.msra.mxu0 0.0
      %786 = vmatprep.subr.mxu0 0.0
      %787 = vmatpush1.msra.mxu0 0.0
      %788 = vmatprep.subr.mxu0 0.0
      %789 = vmatpush1.msra.mxu0 0.0
      %790 = vmatprep.subr.mxu0 0.0
      %791 = vmatpush1.msra.mxu0 0.0
      %792 = vmatprep.subr.mxu0 0.0
      %793 = vmatpush1.msra.mxu0 0.0
      %794 = vmatprep.subr.mxu0 0.0
      %795 = vmatpush1.msra.mxu0 0.0
      %796 = vmatprep.subr.mxu0 0.0
      %797 = vmatpush1.msra.mxu0 0.0
      %798 = vmatprep.subr.mxu0 0.0
      %799 = vmatpush1.msra.mxu0 0.0
      %800 = vmatprep.subr.mxu0 0.0
      %801 = vmatpush1.msra.mxu0 0.0
      %802 = vmatprep.subr.mxu0 0.0
      %803 = vmatpush1.msra.mxu0 0.0
      %804 = vmatprep.subr.mxu0 0.0
      %805 = vmatpush1.msra.mxu0 0.0
      %806 = vmatprep.subr.mxu0 0.0
      %807 = vmatpush1.msra.mxu0 0.0
      %808 = vmatprep.subr.mxu0 0.0
      %809 = vmatpush1.msra.mxu0 0.0
      %810 = vmatprep.mubr.f32.mxu0 0.0
      %811 = vmatmul.mubr.f32.gmra.mrb[0].mxu0 %v732
      %v812 = vpop.f32.mrb[0].mxu0
      %v813 = vadd.f32 0.0, %v812
      %v814 = vpop.f32.mrb[0].mxu0
      %815 = vmatprep.mubr.f32.mxu0 0.0
      %816 = vmatmul.mubr.f32.gmra.mrb[0].mxu0 %v735
      %v817 = vpop.f32.mrb[0].mxu0
      %v818 = vadd.f32 0.0, %v817
      %v819 = vpop.f32.mrb[0].mxu0
      %820 = vmatprep.mubr.f32.mxu0 0.0
      %821 = vmatmul.mubr.f32.gmra.mrb[0].mxu0 %v738
      %v822 = vpop.f32.mrb[0].mxu0
      %v823 = vadd.f32 0.0, %v822
      %v824 = vpop.f32.mrb[0].mxu0
      %825 = vmatprep.mubr.f32.mxu0 0.0
      %826 = vmatmul.mubr.f32.gmra.mrb[0].mxu0 %v741
      %v827 = vpop.f32.mrb[0].mxu0
      %v828 = vadd.f32 0.0, %v827
      %v829 = vpop.f32.mrb[0].mxu0
      %830 = vmatprep.mubr.f32.mxu0 0.0
      %831 = vmatmul.mubr.f32.gmra.mrb[0].mxu0 %v744
      %v832 = vpop.f32.mrb[0].mxu0
      %v833 = vadd.f32 0.0, %v832
      %v834 = vpop.f32.mrb[0].mxu0
      %835 = vdwg.mxu0
      %v837 = vsel %vm730, %v691, 0
      %v840 = vsel %vm730, %v692, 0
      %v843 = vsel %vm730, %v693, 0
      %v846 = vsel %vm730, %v694, 0
      %v849 = vsel %vm730, %v695, 0
      %851 = vmatprep.subr.mxu0 0.0
      %852 = vmatpush1.msra.mxu0 %v726
      %853 = vmatprep.subr.mxu0 0.0
      %854 = vmatpush1.msra.mxu0 %v727
      %855 = vmatprep.subr.mxu0 0.0
      %856 = vmatpush1.msra.mxu0 0.0
      %857 = vmatprep.subr.mxu0 0.0
      %858 = vmatpush1.msra.mxu0 0.0
      %859 = vmatprep.subr.mxu0 0.0
      %860 = vmatpush1.msra.mxu0 0.0
      %861 = vmatprep.subr.mxu0 0.0
      %862 = vmatpush1.msra.mxu0 0.0
      %863 = vmatprep.subr.mxu0 0.0
      %864 = vmatpush1.msra.mxu0 0.0
      %865 = vmatprep.subr.mxu0 0.0
      %866 = vmatpush1.msra.mxu0 0.0
      %867 = vmatprep.subr.mxu0 0.0
      %868 = vmatpush1.msra.mxu0 0.0
      %869 = vmatprep.subr.mxu0 0.0
      %870 = vmatpush1.msra.mxu0 0.0
      %871 = vmatprep.subr.mxu0 0.0
      %872 = vmatpush1.msra.mxu0 0.0
      %873 = vmatprep.subr.mxu0 0.0
      %874 = vmatpush1.msra.mxu0 0.0
      %875 = vmatprep.subr.mxu0 0.0
      %876 = vmatpush1.msra.mxu0 0.0
      %877 = vmatprep.subr.mxu0 0.0
      %878 = vmatpush1.msra.mxu0 0.0
      %879 = vmatprep.subr.mxu0 0.0
      %880 = vmatpush1.msra.mxu0 0.0
      %881 = vmatprep.subr.mxu0 0.0
      %882 = vmatpush1.msra.mxu0 0.0
      %883 = vmatprep.subr.mxu0 0.0
      %884 = vmatpush1.msra.mxu0 0.0
      %885 = vmatprep.subr.mxu0 0.0
      %886 = vmatpush1.msra.mxu0 0.0
      %887 = vmatprep.subr.mxu0 0.0
      %888 = vmatpush1.msra.mxu0 0.0
      %889 = vmatprep.subr.mxu0 0.0
      %890 = vmatpush1.msra.mxu0 0.0
      %891 = vmatprep.subr.mxu0 0.0
      %892 = vmatpush1.msra.mxu0 0.0
      %893 = vmatprep.subr.mxu0 0.0
      %894 = vmatpush1.msra.mxu0 0.0
      %895 = vmatprep.subr.mxu0 0.0
      %896 = vmatpush1.msra.mxu0 0.0
      %897 = vmatprep.subr.mxu0 0.0
      %898 = vmatpush1.msra.mxu0 0.0
      %899 = vmatprep.subr.mxu0 0.0
      %900 = vmatpush1.msra.mxu0 0.0
      %901 = vmatprep.subr.mxu0 0.0
      %902 = vmatpush1.msra.mxu0 0.0
      %903 = vmatprep.subr.mxu0 0.0
      %904 = vmatpush1.msra.mxu0 0.0
      %905 = vmatprep.subr.mxu0 0.0
      %906 = vmatpush1.msra.mxu0 0.0
      %907 = vmatprep.subr.mxu0 0.0
      %908 = vmatpush1.msra.mxu0 0.0
      %909 = vmatprep.subr.mxu0 0.0
      %910 = vmatpush1.msra.mxu0 0.0
      %911 = vmatprep.subr.mxu0 0.0
      %912 = vmatpush1.msra.mxu0 0.0
      %913 = vmatprep.subr.mxu0 0.0
      %914 = vmatpush1.msra.mxu0 0.0
      %915 = vmatprep.mubr.f32.mxu0 0.0
      %916 = vmatmul.mubr.f32.gmra.mrb[0].mxu0 %v837
      %v917 = vpop.f32.mrb[0].mxu0
      %v918 = vadd.f32 %v813, %v917
      %v919 = vpop.f32.mrb[0].mxu0
      %920 = vmatprep.mubr.f32.mxu0 0.0
      %921 = vmatmul.mubr.f32.gmra.mrb[0].mxu0 %v840
      %v922 = vpop.f32.mrb[0].mxu0
      %v923 = vadd.f32 %v818, %v922
      %v924 = vpop.f32.mrb[0].mxu0
      %925 = vmatprep.mubr.f32.mxu0 0.0
      %926 = vmatmul.mubr.f32.gmra.mrb[0].mxu0 %v843
      %v927 = vpop.f32.mrb[0].mxu0
      %v928 = vadd.f32 %v823, %v927
      %v929 = vpop.f32.mrb[0].mxu0
      %930 = vmatprep.mubr.f32.mxu0 0.0
      %931 = vmatmul.mubr.f32.gmra.mrb[0].mxu0 %v846
      %v932 = vpop.f32.mrb[0].mxu0
      %v933 = vadd.f32 %v828, %v932
      %v934 = vpop.f32.mrb[0].mxu0
      %935 = vmatprep.mubr.f32.mxu0 0.0
      %936 = vmatmul.mubr.f32.gmra.mrb[0].mxu0 %v849
      %v937 = vpop.f32.mrb[0].mxu0
      %v938 = vadd.f32 %v833, %v937
      %v939 = vpop.f32.mrb[0].mxu0
      %940 = vdwg.mxu0
      %v941 = vld [vmem:[%s6] sm:$0x1]
      %v943 = vlaneseq
      %v944 = vshrl.u32 %v943, 7
      %v945 = vsub.s32 0, %v944
      %v946 = vrot.slane %v941, %v945
      %v948 = vadd.f32 %v918, %v946
      %v949 = vadd.f32 %v923, %v946
      %v950 = vadd.f32 %v928, %v946
      %v951 = vadd.f32 %v933, %v946
      %v952 = vadd.f32 %v938, %v946
      %s953 = smul.u32 %s31, 32
      %s954 = ssub.s32 %s953, 3
      %v955 = vlaneseq
      %v956 = vshrl.u32 %v955, 7
      %v957 = vadd.s32 %v956, 8
      %v958 = vadd.s32 %v956, 16
      %v959 = vadd.s32 %v956, 24
      %v960 = vadd.s32 %v956, 32
      %v961 = vstv %s954
      %v962 = vadd.s32 %v956, %v961
      %v963 = vadd.s32 %v957, %v961
      %v964 = vadd.s32 %v958, %v961
      %v965 = vadd.s32 %v959, %v961
      %v966 = vadd.s32 %v960, %v961
      %vm967 = vcmp.ge.s32.totalorder %v962, 0
      %vm968 = vcmp.ge.s32.totalorder %v963, 0
      %vm969 = vcmp.ge.s32.totalorder %v964, 0
      %vm970 = vcmp.ge.s32.totalorder %v965, 0
      %vm971 = vcmp.ge.s32.totalorder %v966, 0
      %vm972 = vcmp.lt.s32.totalorder %v962, 80
      %vm973 = vcmp.lt.s32.totalorder %v963, 80
      %vm974 = vcmp.lt.s32.totalorder %v964, 80
      %vm975 = vcmp.lt.s32.totalorder %v965, 80
      %vm976 = vcmp.lt.s32.totalorder %v966, 80
      %vm977 = vmand %vm967, %vm972
      %vm978 = vmand %vm968, %vm973
      %vm979 = vmand %vm969, %vm974
      %vm980 = vmand %vm970, %vm975
      %vm981 = vmand %vm971, %vm976
      %v982 = vsel %vm977, 1, 0
      %v983 = vsel %vm978, 1, 0
      %v984 = vsel %vm979, 1, 0
      %v985 = vsel %vm980, 1, 0
      %v986 = vsel %vm981, 1, 0
      %vm987 = vcmp.eq.s32.totalorder %v982, 1
      %vm988 = vcmp.eq.s32.totalorder %v983, 1
      %vm989 = vcmp.eq.s32.totalorder %v984, 1
      %vm990 = vcmp.eq.s32.totalorder %v985, 1
      %vm991 = vcmp.eq.s32.totalorder %v986, 1
      %v992 = vsel %vm987, %v948, 0.0
      %v993 = vsel %vm988, %v949, 0.0
      %v994 = vsel %vm989, %v950, 0.0
      %v995 = vsel %vm990, %v951, 0.0
      %v996 = vsel %vm991, %v952, 0.0
      %vm997 = vcmp.gt.f32.partialorder %v992, 0.0
      %vm998 = vcmp.gt.f32.partialorder %v993, 0.0
      %vm999 = vcmp.gt.f32.partialorder %v994, 0.0
      %vm1000 = vcmp.gt.f32.partialorder %v995, 0.0
      %vm1001 = vcmp.gt.f32.partialorder %v996, 0.0
      %v1002 = vmin.f32 %v992, 0.0
      %v1003 = vmin.f32 %v993, 0.0
      %v1004 = vmin.f32 %v994, 0.0
      %v1005 = vmin.f32 %v995, 0.0
      %v1006 = vmin.f32 %v996, 0.0
      %v1007 = vmul.f32 %v1002, 1.442695
      %v1008 = vpow.pop %v1007
      %v1009 = vmul.f32 %v1003, 1.442695
      %v1010 = vpow.pop %v1009
      %v1011 = vmul.f32 %v1004, 1.442695
      %v1012 = vpow.pop %v1011
      %v1013 = vmul.f32 %v1005, 1.442695
      %v1014 = vpow.pop %v1013
      %v1015 = vmul.f32 %v1006, 1.442695
      %v1016 = vpow.pop %v1015
      %v1017 = vsub.f32 %v1008, 1.0
      %v1018 = vsub.f32 %v1010, 1.0
      %v1019 = vsub.f32 %v1012, 1.0
      %v1020 = vsub.f32 %v1014, 1.0
      %v1021 = vsub.f32 %v1016, 1.0
      %v1022 = vsel %vm997, %v992, %v1017
      %v1023 = vsel %vm998, %v993, %v1018
      %v1024 = vsel %vm999, %v994, %v1019
      %v1025 = vsel %vm1000, %v995, %v1020
      %v1026 = vsel %vm1001, %v996, %v1021
      %v1027 = vld [vmem:[%s7] sm:$0xff]
      %s1028 = scalar_lea.vmem %s7, 8
      %v1029 = vld [vmem:[%s1028] sm:$0xff]
      %s1030 = scalar_lea.vmem %s7, 16
      %v1031 = vld [vmem:[%s1030] sm:$0xff]
      %v1032 = vld [vmem:[%s8] sm:$0x1]
      %v1033 = vld [vmem:[%s9] sm:$0xf]
      %v1034 = vld [vmem:[%s10] sm:$0x1]
      %vm1040 = vcmask 1046528
      %v1041 = vrot.slane %v1022, 1
      %v1042 = vrot.slane %v1023, 1
      %v1043 = vsel %vm1040, %v1041, %v1042
      %v1044 = vrot.slane %v1024, 1
      %v1045 = vsel %vm1040, %v1042, %v1044
      %v1046 = vrot.slane %v1025, 1
      %v1047 = vsel %vm1040, %v1044, %v1046
      %v1048 = vrot.slane %v1026, 1
      %v1049 = vsel %vm1040, %v1046, %v1048
      %vm1050 = vcmask 64512
      %v1051 = vsel %vm1050, %v1043, 0
      %v1053 = vsel %vm1050, %v1045, 0
      %v1055 = vsel %vm1050, %v1047, 0
      %v1057 = vsel %vm1050, %v1049, 0
      %v1059 = vsel %vm1050, %v1048, 0
      %1061 = vmatprep.subr.mxu0 0.0
      %1062 = vmatpush1.msra.mxu0 %v1029
      %1063 = vmatprep.subr.mxu0 0.0
      %1064 = vmatpush1.msra.mxu0 0.0
      %1065 = vmatprep.subr.mxu0 0.0
      %1066 = vmatpush1.msra.mxu0 0.0
      %1067 = vmatprep.subr.mxu0 0.0
      %1068 = vmatpush1.msra.mxu0 0.0
      %1069 = vmatprep.subr.mxu0 0.0
      %1070 = vmatpush1.msra.mxu0 0.0
      %1071 = vmatprep.subr.mxu0 0.0
      %1072 = vmatpush1.msra.mxu0 0.0
      %1073 = vmatprep.subr.mxu0 0.0
      %1074 = vmatpush1.msra.mxu0 0.0
      %1075 = vmatprep.subr.mxu0 0.0
      %1076 = vmatpush1.msra.mxu0 0.0
      %1077 = vmatprep.subr.mxu0 0.0
      %1078 = vmatpush1.msra.mxu0 0.0
      %1079 = vmatprep.subr.mxu0 0.0
      %1080 = vmatpush1.msra.mxu0 0.0
      %1081 = vmatprep.subr.mxu0 0.0
      %1082 = vmatpush1.msra.mxu0 0.0
      %1083 = vmatprep.subr.mxu0 0.0
      %1084 = vmatpush1.msra.mxu0 0.0
      %1085 = vmatprep.subr.mxu0 0.0
      %1086 = vmatpush1.msra.mxu0 0.0
      %1087 = vmatprep.subr.mxu0 0.0
      %1088 = vmatpush1.msra.mxu0 0.0
      %1089 = vmatprep.subr.mxu0 0.0
      %1090 = vmatpush1.msra.mxu0 0.0
      %1091 = vmatprep.subr.mxu0 0.0
      %1092 = vmatpush1.msra.mxu0 0.0
      %1093 = vmatprep.subr.mxu0 0.0
      %1094 = vmatpush1.msra.mxu0 0.0
      %1095 = vmatprep.subr.mxu0 0.0
      %1096 = vmatpush1.msra.mxu0 0.0
      %1097 = vmatprep.subr.mxu0 0.0
      %1098 = vmatpush1.msra.mxu0 0.0
      %1099 = vmatprep.subr.mxu0 0.0
      %1100 = vmatpush1.msra.mxu0 0.0
      %1101 = vmatprep.subr.mxu0 0.0
      %1102 = vmatpush1.msra.mxu0 0.0
      %1103 = vmatprep.subr.mxu0 0.0
      %1104 = vmatpush1.msra.mxu0 0.0
      %1105 = vmatprep.subr.mxu0 0.0
      %1106 = vmatpush1.msra.mxu0 0.0
      %1107 = vmatprep.subr.mxu0 0.0
      %1108 = vmatpush1.msra.mxu0 0.0
      %1109 = vmatprep.subr.mxu0 0.0
      %1110 = vmatpush1.msra.mxu0 0.0
      %1111 = vmatprep.subr.mxu0 0.0
      %1112 = vmatpush1.msra.mxu0 0.0
      %1113 = vmatprep.subr.mxu0 0.0
      %1114 = vmatpush1.msra.mxu0 0.0
      %1115 = vmatprep.subr.mxu0 0.0
      %1116 = vmatpush1.msra.mxu0 0.0
      %1117 = vmatprep.subr.mxu0 0.0
      %1118 = vmatpush1.msra.mxu0 0.0
      %1119 = vmatprep.subr.mxu0 0.0
      %1120 = vmatpush1.msra.mxu0 0.0
      %1121 = vmatprep.subr.mxu0 0.0
      %1122 = vmatpush1.msra.mxu0 0.0
      %1123 = vmatprep.subr.mxu0 0.0
      %1124 = vmatpush1.msra.mxu0 0.0
      %1125 = vmatprep.mubr.f32.mxu0 0.0
      %1126 = vmatmul.mubr.f32.gmra.mrb[0].mxu0 %v1051
      %v1127 = vpop.f32.mrb[0].mxu0
      %v1128 = vadd.f32 0.0, %v1127
      %v1129 = vpop.f32.mrb[0].mxu0
      %1130 = vmatprep.mubr.f32.mxu0 0.0
      %1131 = vmatmul.mubr.f32.gmra.mrb[0].mxu0 %v1053
      %v1132 = vpop.f32.mrb[0].mxu0
      %v1133 = vadd.f32 0.0, %v1132
      %v1134 = vpop.f32.mrb[0].mxu0
      %1135 = vmatprep.mubr.f32.mxu0 0.0
      %1136 = vmatmul.mubr.f32.gmra.mrb[0].mxu0 %v1055
      %v1137 = vpop.f32.mrb[0].mxu0
      %v1138 = vadd.f32 0.0, %v1137
      %v1139 = vpop.f32.mrb[0].mxu0
      %1140 = vmatprep.mubr.f32.mxu0 0.0
      %1141 = vmatmul.mubr.f32.gmra.mrb[0].mxu0 %v1057
      %v1142 = vpop.f32.mrb[0].mxu0
      %v1143 = vadd.f32 0.0, %v1142
      %v1144 = vpop.f32.mrb[0].mxu0
      %1145 = vmatprep.mubr.f32.mxu0 0.0
      %1146 = vmatmul.mubr.f32.gmra.mrb[0].mxu0 %v1059
      %v1147 = vpop.f32.mrb[0].mxu0
      %v1148 = vadd.f32 0.0, %v1147
      %v1149 = vpop.f32.mrb[0].mxu0
      %1150 = vdwg.mxu0
      %1151 = vrot.lane.b32.xlu0 %v1022, 120
      %v1152 = vpop.permute.xlu0 %1151
      %1153 = vrot.lane.b32.xlu0 %v1023, 120
      %v1154 = vpop.permute.xlu0 %1153
      %1155 = vrot.lane.b32.xlu0 %v1024, 120
      %v1156 = vpop.permute.xlu0 %1155
      %1157 = vrot.lane.b32.xlu0 %v1025, 120
      %v1158 = vpop.permute.xlu0 %1157
      %1159 = vrot.lane.b32.xlu0 %v1026, 120
      %v1160 = vpop.permute.xlu0 %1159
      %v1161 = vsel %vm1050, %v1152, 0
      %v1163 = vsel %vm1050, %v1154, 0
      %v1165 = vsel %vm1050, %v1156, 0
      %v1167 = vsel %vm1050, %v1158, 0
      %v1169 = vsel %vm1050, %v1160, 0
      %1171 = vmatprep.subr.mxu0 0.0
      %1172 = vmatpush1.msra.mxu0 %v1027
      %1173 = vmatprep.subr.mxu0 0.0
      %1174 = vmatpush1.msra.mxu0 0.0
      %1175 = vmatprep.subr.mxu0 0.0
      %1176 = vmatpush1.msra.mxu0 0.0
      %1177 = vmatprep.subr.mxu0 0.0
      %1178 = vmatpush1.msra.mxu0 0.0
      %1179 = vmatprep.subr.mxu0 0.0
      %1180 = vmatpush1.msra.mxu0 0.0
      %1181 = vmatprep.subr.mxu0 0.0
      %1182 = vmatpush1.msra.mxu0 0.0
      %1183 = vmatprep.subr.mxu0 0.0
      %1184 = vmatpush1.msra.mxu0 0.0
      %1185 = vmatprep.subr.mxu0 0.0
      %1186 = vmatpush1.msra.mxu0 0.0
      %1187 = vmatprep.subr.mxu0 0.0
      %1188 = vmatpush1.msra.mxu0 0.0
      %1189 = vmatprep.subr.mxu0 0.0
      %1190 = vmatpush1.msra.mxu0 0.0
      %1191 = vmatprep.subr.mxu0 0.0
      %1192 = vmatpush1.msra.mxu0 0.0
      %1193 = vmatprep.subr.mxu0 0.0
      %1194 = vmatpush1.msra.mxu0 0.0
      %1195 = vmatprep.subr.mxu0 0.0
      %1196 = vmatpush1.msra.mxu0 0.0
      %1197 = vmatprep.subr.mxu0 0.0
      %1198 = vmatpush1.msra.mxu0 0.0
      %1199 = vmatprep.subr.mxu0 0.0
      %1200 = vmatpush1.msra.mxu0 0.0
      %1201 = vmatprep.subr.mxu0 0.0
      %1202 = vmatpush1.msra.mxu0 0.0
      %1203 = vmatprep.subr.mxu0 0.0
      %1204 = vmatpush1.msra.mxu0 0.0
      %1205 = vmatprep.subr.mxu0 0.0
      %1206 = vmatpush1.msra.mxu0 0.0
      %1207 = vmatprep.subr.mxu0 0.0
      %1208 = vmatpush1.msra.mxu0 0.0
      %1209 = vmatprep.subr.mxu0 0.0
      %1210 = vmatpush1.msra.mxu0 0.0
      %1211 = vmatprep.subr.mxu0 0.0
      %1212 = vmatpush1.msra.mxu0 0.0
      %1213 = vmatprep.subr.mxu0 0.0
      %1214 = vmatpush1.msra.mxu0 0.0
      %1215 = vmatprep.subr.mxu0 0.0
      %1216 = vmatpush1.msra.mxu0 0.0
      %1217 = vmatprep.subr.mxu0 0.0
      %1218 = vmatpush1.msra.mxu0 0.0
      %1219 = vmatprep.subr.mxu0 0.0
      %1220 = vmatpush1.msra.mxu0 0.0
      %1221 = vmatprep.subr.mxu0 0.0
      %1222 = vmatpush1.msra.mxu0 0.0
      %1223 = vmatprep.subr.mxu0 0.0
      %1224 = vmatpush1.msra.mxu0 0.0
      %1225 = vmatprep.subr.mxu0 0.0
      %1226 = vmatpush1.msra.mxu0 0.0
      %1227 = vmatprep.subr.mxu0 0.0
      %1228 = vmatpush1.msra.mxu0 0.0
      %1229 = vmatprep.subr.mxu0 0.0
      %1230 = vmatpush1.msra.mxu0 0.0
      %1231 = vmatprep.subr.mxu0 0.0
      %1232 = vmatpush1.msra.mxu0 0.0
      %1233 = vmatprep.subr.mxu0 0.0
      %1234 = vmatpush1.msra.mxu0 0.0
      %1235 = vmatprep.mubr.f32.mxu0 0.0
      %1236 = vmatmul.mubr.f32.gmra.mrb[0].mxu0 %v1161
      %v1237 = vpop.f32.mrb[0].mxu0
      %v1238 = vadd.f32 %v1128, %v1237
      %v1239 = vpop.f32.mrb[0].mxu0
      %1240 = vmatprep.mubr.f32.mxu0 0.0
      %1241 = vmatmul.mubr.f32.gmra.mrb[0].mxu0 %v1163
      %v1242 = vpop.f32.mrb[0].mxu0
      %v1243 = vadd.f32 %v1133, %v1242
      %v1244 = vpop.f32.mrb[0].mxu0
      %1245 = vmatprep.mubr.f32.mxu0 0.0
      %1246 = vmatmul.mubr.f32.gmra.mrb[0].mxu0 %v1165
      %v1247 = vpop.f32.mrb[0].mxu0
      %v1248 = vadd.f32 %v1138, %v1247
      %v1249 = vpop.f32.mrb[0].mxu0
      %1250 = vmatprep.mubr.f32.mxu0 0.0
      %1251 = vmatmul.mubr.f32.gmra.mrb[0].mxu0 %v1167
      %v1252 = vpop.f32.mrb[0].mxu0
      %v1253 = vadd.f32 %v1143, %v1252
      %v1254 = vpop.f32.mrb[0].mxu0
      %1255 = vmatprep.mubr.f32.mxu0 0.0
      %1256 = vmatmul.mubr.f32.gmra.mrb[0].mxu0 %v1169
      %v1257 = vpop.f32.mrb[0].mxu0
      %v1258 = vadd.f32 %v1148, %v1257
      %v1259 = vpop.f32.mrb[0].mxu0
      %1260 = vdwg.mxu0
      %1261 = vrot.lane.b32.xlu0 %v1043, 120
      %v1262 = vpop.permute.xlu0 %1261
      %1263 = vrot.lane.b32.xlu0 %v1045, 120
      %v1264 = vpop.permute.xlu0 %1263
      %1265 = vrot.lane.b32.xlu0 %v1047, 120
      %v1266 = vpop.permute.xlu0 %1265
      %1267 = vrot.lane.b32.xlu0 %v1049, 120
      %v1268 = vpop.permute.xlu0 %1267
      %1269 = vrot.lane.b32.xlu0 %v1048, 120
      %v1270 = vpop.permute.xlu0 %1269
      %v1271 = vsel %vm1050, %v1262, 0
      %v1273 = vsel %vm1050, %v1264, 0
      %v1275 = vsel %vm1050, %v1266, 0
      %v1277 = vsel %vm1050, %v1268, 0
      %v1279 = vsel %vm1050, %v1270, 0
      %1281 = vmatprep.subr.mxu0 0.0
      %1282 = vmatpush1.msra.mxu0 %v1031
      %1283 = vmatprep.subr.mxu0 0.0
      %1284 = vmatpush1.msra.mxu0 0.0
      %1285 = vmatprep.subr.mxu0 0.0
      %1286 = vmatpush1.msra.mxu0 0.0
      %1287 = vmatprep.subr.mxu0 0.0
      %1288 = vmatpush1.msra.mxu0 0.0
      %1289 = vmatprep.subr.mxu0 0.0
      %1290 = vmatpush1.msra.mxu0 0.0
      %1291 = vmatprep.subr.mxu0 0.0
      %1292 = vmatpush1.msra.mxu0 0.0
      %1293 = vmatprep.subr.mxu0 0.0
      %1294 = vmatpush1.msra.mxu0 0.0
      %1295 = vmatprep.subr.mxu0 0.0
      %1296 = vmatpush1.msra.mxu0 0.0
      %1297 = vmatprep.subr.mxu0 0.0
      %1298 = vmatpush1.msra.mxu0 0.0
      %1299 = vmatprep.subr.mxu0 0.0
      %1300 = vmatpush1.msra.mxu0 0.0
      %1301 = vmatprep.subr.mxu0 0.0
      %1302 = vmatpush1.msra.mxu0 0.0
      %1303 = vmatprep.subr.mxu0 0.0
      %1304 = vmatpush1.msra.mxu0 0.0
      %1305 = vmatprep.subr.mxu0 0.0
      %1306 = vmatpush1.msra.mxu0 0.0
      %1307 = vmatprep.subr.mxu0 0.0
      %1308 = vmatpush1.msra.mxu0 0.0
      %1309 = vmatprep.subr.mxu0 0.0
      %1310 = vmatpush1.msra.mxu0 0.0
      %1311 = vmatprep.subr.mxu0 0.0
      %1312 = vmatpush1.msra.mxu0 0.0
      %1313 = vmatprep.subr.mxu0 0.0
      %1314 = vmatpush1.msra.mxu0 0.0
      %1315 = vmatprep.subr.mxu0 0.0
      %1316 = vmatpush1.msra.mxu0 0.0
      %1317 = vmatprep.subr.mxu0 0.0
      %1318 = vmatpush1.msra.mxu0 0.0
      %1319 = vmatprep.subr.mxu0 0.0
      %1320 = vmatpush1.msra.mxu0 0.0
      %1321 = vmatprep.subr.mxu0 0.0
      %1322 = vmatpush1.msra.mxu0 0.0
      %1323 = vmatprep.subr.mxu0 0.0
      %1324 = vmatpush1.msra.mxu0 0.0
      %1325 = vmatprep.subr.mxu0 0.0
      %1326 = vmatpush1.msra.mxu0 0.0
      %1327 = vmatprep.subr.mxu0 0.0
      %1328 = vmatpush1.msra.mxu0 0.0
      %1329 = vmatprep.subr.mxu0 0.0
      %1330 = vmatpush1.msra.mxu0 0.0
      %1331 = vmatprep.subr.mxu0 0.0
      %1332 = vmatpush1.msra.mxu0 0.0
      %1333 = vmatprep.subr.mxu0 0.0
      %1334 = vmatpush1.msra.mxu0 0.0
      %1335 = vmatprep.subr.mxu0 0.0
      %1336 = vmatpush1.msra.mxu0 0.0
      %1337 = vmatprep.subr.mxu0 0.0
      %1338 = vmatpush1.msra.mxu0 0.0
      %1339 = vmatprep.subr.mxu0 0.0
      %1340 = vmatpush1.msra.mxu0 0.0
      %1341 = vmatprep.subr.mxu0 0.0
      %1342 = vmatpush1.msra.mxu0 0.0
      %1343 = vmatprep.subr.mxu0 0.0
      %1344 = vmatpush1.msra.mxu0 0.0
      %1345 = vmatprep.mubr.f32.mxu0 0.0
      %1346 = vmatmul.mubr.f32.gmra.mrb[0].mxu0 %v1271
      %v1347 = vpop.f32.mrb[0].mxu0
      %v1348 = vadd.f32 0.0, %v1347
      %v1349 = vpop.f32.mrb[0].mxu0
      %1350 = vmatprep.mubr.f32.mxu0 0.0
      %1351 = vmatmul.mubr.f32.gmra.mrb[0].mxu0 %v1273
      %v1352 = vpop.f32.mrb[0].mxu0
      %v1353 = vadd.f32 0.0, %v1352
      %v1354 = vpop.f32.mrb[0].mxu0
      %1355 = vmatprep.mubr.f32.mxu0 0.0
      %1356 = vmatmul.mubr.f32.gmra.mrb[0].mxu0 %v1275
      %v1357 = vpop.f32.mrb[0].mxu0
      %v1358 = vadd.f32 0.0, %v1357
      %v1359 = vpop.f32.mrb[0].mxu0
      %1360 = vmatprep.mubr.f32.mxu0 0.0
      %1361 = vmatmul.mubr.f32.gmra.mrb[0].mxu0 %v1277
      %v1362 = vpop.f32.mrb[0].mxu0
      %v1363 = vadd.f32 0.0, %v1362
      %v1364 = vpop.f32.mrb[0].mxu0
      %1365 = vmatprep.mubr.f32.mxu0 0.0
      %1366 = vmatmul.mubr.f32.gmra.mrb[0].mxu0 %v1279
      %v1367 = vpop.f32.mrb[0].mxu0
      %v1368 = vadd.f32 0.0, %v1367
      %v1369 = vpop.f32.mrb[0].mxu0
      %1370 = vdwg.mxu0
      %v1371 = vadd.f32 %v1238, %v1348
      %v1372 = vadd.f32 %v1243, %v1353
      %v1373 = vadd.f32 %v1248, %v1358
      %v1374 = vadd.f32 %v1253, %v1363
      %v1375 = vadd.f32 %v1258, %v1368
      %v1377 = vlaneseq
      %v1378 = vshrl.u32 %v1377, 7
      %v1379 = vsub.s32 0, %v1378
      %v1380 = vrot.slane %v1032, %v1379
      %v1382 = vadd.f32 %v1371, %v1380
      %v1383 = vadd.f32 %v1372, %v1380
      %v1384 = vadd.f32 %v1373, %v1380
      %v1385 = vadd.f32 %v1374, %v1380
      %v1386 = vadd.f32 %v1375, %v1380
      %vm1387 = vcmp.gt.f32.partialorder %v1382, 0.0
      %vm1388 = vcmp.gt.f32.partialorder %v1383, 0.0
      %vm1389 = vcmp.gt.f32.partialorder %v1384, 0.0
      %vm1390 = vcmp.gt.f32.partialorder %v1385, 0.0
      %vm1391 = vcmp.gt.f32.partialorder %v1386, 0.0
      %v1392 = vmin.f32 %v1382, 0.0
      %v1393 = vmin.f32 %v1383, 0.0
      %v1394 = vmin.f32 %v1384, 0.0
      %v1395 = vmin.f32 %v1385, 0.0
      %v1396 = vmin.f32 %v1386, 0.0
      %v1397 = vmul.f32 %v1392, 1.442695
      %v1398 = vpow.pop %v1397
      %v1399 = vmul.f32 %v1393, 1.442695
      %v1400 = vpow.pop %v1399
      %v1401 = vmul.f32 %v1394, 1.442695
      %v1402 = vpow.pop %v1401
      %v1403 = vmul.f32 %v1395, 1.442695
      %v1404 = vpow.pop %v1403
      %v1405 = vmul.f32 %v1396, 1.442695
      %v1406 = vpow.pop %v1405
      %v1407 = vsub.f32 %v1398, 1.0
      %v1408 = vsub.f32 %v1400, 1.0
      %v1409 = vsub.f32 %v1402, 1.0
      %v1410 = vsub.f32 %v1404, 1.0
      %v1411 = vsub.f32 %v1406, 1.0
      %v1412 = vsel %vm1387, %v1382, %v1407
      %v1413 = vsel %vm1388, %v1383, %v1408
      %v1414 = vsel %vm1389, %v1384, %v1409
      %v1415 = vsel %vm1390, %v1385, %v1410
      %v1416 = vsel %vm1391, %v1386, %v1411
      %v1418 = vlaneseq
      %v1419 = vshrl.u32 %v1418, 7
      %v1420 = vsub.s32 0, %v1419
      %v1421 = vrot.slane %v1034, %v1420
      %vm1423 = vcmask 31744
      %v1425 = vsel %vm1423, %v1412, 0
      %v1428 = vsel %vm1423, %v1413, 0
      %v1431 = vsel %vm1423, %v1414, 0
      %v1434 = vsel %vm1423, %v1415, 0
      %v1437 = vsel %vm1423, %v1416, 0
      %vm1439 = vcmask 1043456
      %v1441 = vsel %vm1439, %v1033, 0
      %1443 = vmatprep.subr.mxu0 0.0
      %1444 = vmatpush1.msra.mxu0 %v1441
      %1445 = vmatprep.subr.mxu0 0.0
      %1446 = vmatpush1.msra.mxu0 0.0
      %1447 = vmatprep.subr.mxu0 0.0
      %1448 = vmatpush1.msra.mxu0 0.0
      %1449 = vmatprep.subr.mxu0 0.0
      %1450 = vmatpush1.msra.mxu0 0.0
      %1451 = vmatprep.subr.mxu0 0.0
      %1452 = vmatpush1.msra.mxu0 0.0
      %1453 = vmatprep.subr.mxu0 0.0
      %1454 = vmatpush1.msra.mxu0 0.0
      %1455 = vmatprep.subr.mxu0 0.0
      %1456 = vmatpush1.msra.mxu0 0.0
      %1457 = vmatprep.subr.mxu0 0.0
      %1458 = vmatpush1.msra.mxu0 0.0
      %1459 = vmatprep.subr.mxu0 0.0
      %1460 = vmatpush1.msra.mxu0 0.0
      %1461 = vmatprep.subr.mxu0 0.0
      %1462 = vmatpush1.msra.mxu0 0.0
      %1463 = vmatprep.subr.mxu0 0.0
      %1464 = vmatpush1.msra.mxu0 0.0
      %1465 = vmatprep.subr.mxu0 0.0
      %1466 = vmatpush1.msra.mxu0 0.0
      %1467 = vmatprep.subr.mxu0 0.0
      %1468 = vmatpush1.msra.mxu0 0.0
      %1469 = vmatprep.subr.mxu0 0.0
      %1470 = vmatpush1.msra.mxu0 0.0
      %1471 = vmatprep.subr.mxu0 0.0
      %1472 = vmatpush1.msra.mxu0 0.0
      %1473 = vmatprep.subr.mxu0 0.0
      %1474 = vmatpush1.msra.mxu0 0.0
      %1475 = vmatprep.subr.mxu0 0.0
      %1476 = vmatpush1.msra.mxu0 0.0
      %1477 = vmatprep.subr.mxu0 0.0
      %1478 = vmatpush1.msra.mxu0 0.0
      %1479 = vmatprep.subr.mxu0 0.0
      %1480 = vmatpush1.msra.mxu0 0.0
      %1481 = vmatprep.subr.mxu0 0.0
      %1482 = vmatpush1.msra.mxu0 0.0
      %1483 = vmatprep.subr.mxu0 0.0
      %1484 = vmatpush1.msra.mxu0 0.0
      %1485 = vmatprep.subr.mxu0 0.0
      %1486 = vmatpush1.msra.mxu0 0.0
      %1487 = vmatprep.subr.mxu0 0.0
      %1488 = vmatpush1.msra.mxu0 0.0
      %1489 = vmatprep.subr.mxu0 0.0
      %1490 = vmatpush1.msra.mxu0 0.0
      %1491 = vmatprep.subr.mxu0 0.0
      %1492 = vmatpush1.msra.mxu0 0.0
      %1493 = vmatprep.subr.mxu0 0.0
      %1494 = vmatpush1.msra.mxu0 0.0
      %1495 = vmatprep.subr.mxu0 0.0
      %1496 = vmatpush1.msra.mxu0 0.0
      %1497 = vmatprep.subr.mxu0 0.0
      %1498 = vmatpush1.msra.mxu0 0.0
      %1499 = vmatprep.subr.mxu0 0.0
      %1500 = vmatpush1.msra.mxu0 0.0
      %1501 = vmatprep.subr.mxu0 0.0
      %1502 = vmatpush1.msra.mxu0 0.0
      %1503 = vmatprep.subr.mxu0 0.0
      %1504 = vmatpush1.msra.mxu0 0.0
      %1505 = vmatprep.subr.mxu0 0.0
      %1506 = vmatpush1.msra.mxu0 0.0
      %1507 = vmatprep.mubr.f32.mxu0 0.0
      %1508 = vmatmul.mubr.f32.gmra.mrb[0].mxu0 %v1425
      %v1509 = vpop.f32.mrb[0].mxu0
      %v1510 = vadd.f32 %v1421, %v1509
      %v1511 = vpop.f32.mrb[0].mxu0
      %1512 = vmatprep.mubr.f32.mxu0 0.0
      %1513 = vmatmul.mubr.f32.gmra.mrb[0].mxu0 %v1428
      %v1514 = vpop.f32.mrb[0].mxu0
      %v1515 = vadd.f32 %v1421, %v1514
      %v1516 = vpop.f32.mrb[0].mxu0
      %1517 = vmatprep.mubr.f32.mxu0 0.0
      %1518 = vmatmul.mubr.f32.gmra.mrb[0].mxu0 %v1431
      %v1519 = vpop.f32.mrb[0].mxu0
      %v1520 = vadd.f32 %v1421, %v1519
      %v1521 = vpop.f32.mrb[0].mxu0
      %1522 = vmatprep.mubr.f32.mxu0 0.0
      %1523 = vmatmul.mubr.f32.gmra.mrb[0].mxu0 %v1434
      %v1524 = vpop.f32.mrb[0].mxu0
      %v1525 = vadd.f32 %v1421, %v1524
      %v1526 = vpop.f32.mrb[0].mxu0
      %1527 = vmatprep.mubr.f32.mxu0 0.0
      %1528 = vmatmul.mubr.f32.gmra.mrb[0].mxu0 %v1437
      %v1529 = vpop.f32.mrb[0].mxu0
      %v1530 = vadd.f32 %v1421, %v1529
      %v1531 = vpop.f32.mrb[0].mxu0
      %1532 = vdwg.mxu0
      %1533 = vmatprep.subr.mxu0 0.0
      %1534 = vmatpush1.msra.mxu0 %v1029
      %1535 = vmatprep.subr.mxu0 0.0
      %1536 = vmatpush1.msra.mxu0 0.0
      %1537 = vmatprep.subr.mxu0 0.0
      %1538 = vmatpush1.msra.mxu0 0.0
      %1539 = vmatprep.subr.mxu0 0.0
      %1540 = vmatpush1.msra.mxu0 0.0
      %1541 = vmatprep.subr.mxu0 0.0
      %1542 = vmatpush1.msra.mxu0 0.0
      %1543 = vmatprep.subr.mxu0 0.0
      %1544 = vmatpush1.msra.mxu0 0.0
      %1545 = vmatprep.subr.mxu0 0.0
      %1546 = vmatpush1.msra.mxu0 0.0
      %1547 = vmatprep.subr.mxu0 0.0
      %1548 = vmatpush1.msra.mxu0 0.0
      %1549 = vmatprep.subr.mxu0 0.0
      %1550 = vmatpush1.msra.mxu0 0.0
      %1551 = vmatprep.subr.mxu0 0.0
      %1552 = vmatpush1.msra.mxu0 0.0
      %1553 = vmatprep.subr.mxu0 0.0
      %1554 = vmatpush1.msra.mxu0 0.0
      %1555 = vmatprep.subr.mxu0 0.0
      %1556 = vmatpush1.msra.mxu0 0.0
      %1557 = vmatprep.subr.mxu0 0.0
      %1558 = vmatpush1.msra.mxu0 0.0
      %1559 = vmatprep.subr.mxu0 0.0
      %1560 = vmatpush1.msra.mxu0 0.0
      %1561 = vmatprep.subr.mxu0 0.0
      %1562 = vmatpush1.msra.mxu0 0.0
      %1563 = vmatprep.subr.mxu0 0.0
      %1564 = vmatpush1.msra.mxu0 0.0
      %1565 = vmatprep.subr.mxu0 0.0
      %1566 = vmatpush1.msra.mxu0 0.0
      %1567 = vmatprep.subr.mxu0 0.0
      %1568 = vmatpush1.msra.mxu0 0.0
      %1569 = vmatprep.subr.mxu0 0.0
      %1570 = vmatpush1.msra.mxu0 0.0
      %1571 = vmatprep.subr.mxu0 0.0
      %1572 = vmatpush1.msra.mxu0 0.0
      %1573 = vmatprep.subr.mxu0 0.0
      %1574 = vmatpush1.msra.mxu0 0.0
      %1575 = vmatprep.subr.mxu0 0.0
      %1576 = vmatpush1.msra.mxu0 0.0
      %1577 = vmatprep.subr.mxu0 0.0
      %1578 = vmatpush1.msra.mxu0 0.0
      %1579 = vmatprep.subr.mxu0 0.0
      %1580 = vmatpush1.msra.mxu0 0.0
      %1581 = vmatprep.subr.mxu0 0.0
      %1582 = vmatpush1.msra.mxu0 0.0
      %1583 = vmatprep.subr.mxu0 0.0
      %1584 = vmatpush1.msra.mxu0 0.0
      %1585 = vmatprep.subr.mxu0 0.0
      %1586 = vmatpush1.msra.mxu0 0.0
      %1587 = vmatprep.subr.mxu0 0.0
      %1588 = vmatpush1.msra.mxu0 0.0
      %1589 = vmatprep.subr.mxu0 0.0
      %1590 = vmatpush1.msra.mxu0 0.0
      %1591 = vmatprep.subr.mxu0 0.0
      %1592 = vmatpush1.msra.mxu0 0.0
      %1593 = vmatprep.subr.mxu0 0.0
      %1594 = vmatpush1.msra.mxu0 0.0
      %1595 = vmatprep.subr.mxu0 0.0
      %1596 = vmatpush1.msra.mxu0 0.0
      %1597 = vmatprep.mubr.f32.mxu0 0.0
      %1598 = vmatmul.mubr.f32.gmra.mrb[0].mxu0 %v1271
      %v1599 = vpop.f32.mrb[0].mxu0
      %v1600 = vadd.f32 0.0, %v1599
      %v1601 = vpop.f32.mrb[0].mxu0
      %1602 = vmatprep.mubr.f32.mxu0 0.0
      %1603 = vmatmul.mubr.f32.gmra.mrb[0].mxu0 %v1273
      %v1604 = vpop.f32.mrb[0].mxu0
      %v1605 = vadd.f32 0.0, %v1604
      %v1606 = vpop.f32.mrb[0].mxu0
      %1607 = vmatprep.mubr.f32.mxu0 0.0
      %1608 = vmatmul.mubr.f32.gmra.mrb[0].mxu0 %v1275
      %v1609 = vpop.f32.mrb[0].mxu0
      %v1610 = vadd.f32 0.0, %v1609
      %v1611 = vpop.f32.mrb[0].mxu0
      %1612 = vmatprep.mubr.f32.mxu0 0.0
      %1613 = vmatmul.mubr.f32.gmra.mrb[0].mxu0 %v1277
      %v1614 = vpop.f32.mrb[0].mxu0
      %v1615 = vadd.f32 0.0, %v1614
      %v1616 = vpop.f32.mrb[0].mxu0
      %1617 = vmatprep.mubr.f32.mxu0 0.0
      %1618 = vmatmul.mubr.f32.gmra.mrb[0].mxu0 %v1279
      %v1619 = vpop.f32.mrb[0].mxu0
      %v1620 = vadd.f32 0.0, %v1619
      %v1621 = vpop.f32.mrb[0].mxu0
      %1622 = vdwg.mxu0
      %1623 = vmatprep.subr.mxu0 0.0
      %1624 = vmatpush1.msra.mxu0 %v1027
      %1625 = vmatprep.subr.mxu0 0.0
      %1626 = vmatpush1.msra.mxu0 0.0
      %1627 = vmatprep.subr.mxu0 0.0
      %1628 = vmatpush1.msra.mxu0 0.0
      %1629 = vmatprep.subr.mxu0 0.0
      %1630 = vmatpush1.msra.mxu0 0.0
      %1631 = vmatprep.subr.mxu0 0.0
      %1632 = vmatpush1.msra.mxu0 0.0
      %1633 = vmatprep.subr.mxu0 0.0
      %1634 = vmatpush1.msra.mxu0 0.0
      %1635 = vmatprep.subr.mxu0 0.0
      %1636 = vmatpush1.msra.mxu0 0.0
      %1637 = vmatprep.subr.mxu0 0.0
      %1638 = vmatpush1.msra.mxu0 0.0
      %1639 = vmatprep.subr.mxu0 0.0
      %1640 = vmatpush1.msra.mxu0 0.0
      %1641 = vmatprep.subr.mxu0 0.0
      %1642 = vmatpush1.msra.mxu0 0.0
      %1643 = vmatprep.subr.mxu0 0.0
      %1644 = vmatpush1.msra.mxu0 0.0
      %1645 = vmatprep.subr.mxu0 0.0
      %1646 = vmatpush1.msra.mxu0 0.0
      %1647 = vmatprep.subr.mxu0 0.0
      %1648 = vmatpush1.msra.mxu0 0.0
      %1649 = vmatprep.subr.mxu0 0.0
      %1650 = vmatpush1.msra.mxu0 0.0
      %1651 = vmatprep.subr.mxu0 0.0
      %1652 = vmatpush1.msra.mxu0 0.0
      %1653 = vmatprep.subr.mxu0 0.0
      %1654 = vmatpush1.msra.mxu0 0.0
      %1655 = vmatprep.subr.mxu0 0.0
      %1656 = vmatpush1.msra.mxu0 0.0
      %1657 = vmatprep.subr.mxu0 0.0
      %1658 = vmatpush1.msra.mxu0 0.0
      %1659 = vmatprep.subr.mxu0 0.0
      %1660 = vmatpush1.msra.mxu0 0.0
      %1661 = vmatprep.subr.mxu0 0.0
      %1662 = vmatpush1.msra.mxu0 0.0
      %1663 = vmatprep.subr.mxu0 0.0
      %1664 = vmatpush1.msra.mxu0 0.0
      %1665 = vmatprep.subr.mxu0 0.0
      %1666 = vmatpush1.msra.mxu0 0.0
      %1667 = vmatprep.subr.mxu0 0.0
      %1668 = vmatpush1.msra.mxu0 0.0
      %1669 = vmatprep.subr.mxu0 0.0
      %1670 = vmatpush1.msra.mxu0 0.0
      %1671 = vmatprep.subr.mxu0 0.0
      %1672 = vmatpush1.msra.mxu0 0.0
      %1673 = vmatprep.subr.mxu0 0.0
      %1674 = vmatpush1.msra.mxu0 0.0
      %1675 = vmatprep.subr.mxu0 0.0
      %1676 = vmatpush1.msra.mxu0 0.0
      %1677 = vmatprep.subr.mxu0 0.0
      %1678 = vmatpush1.msra.mxu0 0.0
      %1679 = vmatprep.subr.mxu0 0.0
      %1680 = vmatpush1.msra.mxu0 0.0
      %1681 = vmatprep.subr.mxu0 0.0
      %1682 = vmatpush1.msra.mxu0 0.0
      %1683 = vmatprep.subr.mxu0 0.0
      %1684 = vmatpush1.msra.mxu0 0.0
      %1685 = vmatprep.subr.mxu0 0.0
      %1686 = vmatpush1.msra.mxu0 0.0
      %1687 = vmatprep.mubr.f32.mxu0 0.0
      %1688 = vmatmul.mubr.f32.gmra.mrb[0].mxu0 %v1051
      %v1689 = vpop.f32.mrb[0].mxu0
      %v1690 = vadd.f32 %v1600, %v1689
      %v1691 = vpop.f32.mrb[0].mxu0
      %1692 = vmatprep.mubr.f32.mxu0 0.0
      %1693 = vmatmul.mubr.f32.gmra.mrb[0].mxu0 %v1053
      %v1694 = vpop.f32.mrb[0].mxu0
      %v1695 = vadd.f32 %v1605, %v1694
      %v1696 = vpop.f32.mrb[0].mxu0
      %1697 = vmatprep.mubr.f32.mxu0 0.0
      %1698 = vmatmul.mubr.f32.gmra.mrb[0].mxu0 %v1055
      %v1699 = vpop.f32.mrb[0].mxu0
      %v1700 = vadd.f32 %v1610, %v1699
      %v1701 = vpop.f32.mrb[0].mxu0
      %1702 = vmatprep.mubr.f32.mxu0 0.0
      %1703 = vmatmul.mubr.f32.gmra.mrb[0].mxu0 %v1057
      %v1704 = vpop.f32.mrb[0].mxu0
      %v1705 = vadd.f32 %v1615, %v1704
      %v1706 = vpop.f32.mrb[0].mxu0
      %1707 = vmatprep.mubr.f32.mxu0 0.0
      %1708 = vmatmul.mubr.f32.gmra.mrb[0].mxu0 %v1059
      %v1709 = vpop.f32.mrb[0].mxu0
      %v1710 = vadd.f32 %v1620, %v1709
      %v1711 = vpop.f32.mrb[0].mxu0
      %1712 = vdwg.mxu0
      %vm1713 = vcmask 1045504
      %v1714 = vrot.slane %v1022, 2
      %v1715 = vrot.slane %v1023, 2
      %v1716 = vsel %vm1713, %v1714, %v1715
      %v1717 = vrot.slane %v1024, 2
      %v1718 = vsel %vm1713, %v1715, %v1717
      %v1719 = vrot.slane %v1025, 2
      %v1720 = vsel %vm1713, %v1717, %v1719
      %v1721 = vrot.slane %v1026, 2
      %v1722 = vsel %vm1713, %v1719, %v1721
      %v1723 = vsel %vm1050, %v1716, 0
      %v1725 = vsel %vm1050, %v1718, 0
      %v1727 = vsel %vm1050, %v1720, 0
      %v1729 = vsel %vm1050, %v1722, 0
      %v1731 = vsel %vm1050, %v1721, 0
      %1733 = vmatprep.subr.mxu0 0.0
      %1734 = vmatpush1.msra.mxu0 %v1031
      %1735 = vmatprep.subr.mxu0 0.0
      %1736 = vmatpush1.msra.mxu0 0.0
      %1737 = vmatprep.subr.mxu0 0.0
      %1738 = vmatpush1.msra.mxu0 0.0
      %1739 = vmatprep.subr.mxu0 0.0
      %1740 = vmatpush1.msra.mxu0 0.0
      %1741 = vmatprep.subr.mxu0 0.0
      %1742 = vmatpush1.msra.mxu0 0.0
      %1743 = vmatprep.subr.mxu0 0.0
      %1744 = vmatpush1.msra.mxu0 0.0
      %1745 = vmatprep.subr.mxu0 0.0
      %1746 = vmatpush1.msra.mxu0 0.0
      %1747 = vmatprep.subr.mxu0 0.0
      %1748 = vmatpush1.msra.mxu0 0.0
      %1749 = vmatprep.subr.mxu0 0.0
      %1750 = vmatpush1.msra.mxu0 0.0
      %1751 = vmatprep.subr.mxu0 0.0
      %1752 = vmatpush1.msra.mxu0 0.0
      %1753 = vmatprep.subr.mxu0 0.0
      %1754 = vmatpush1.msra.mxu0 0.0
      %1755 = vmatprep.subr.mxu0 0.0
      %1756 = vmatpush1.msra.mxu0 0.0
      %1757 = vmatprep.subr.mxu0 0.0
      %1758 = vmatpush1.msra.mxu0 0.0
      %1759 = vmatprep.subr.mxu0 0.0
      %1760 = vmatpush1.msra.mxu0 0.0
      %1761 = vmatprep.subr.mxu0 0.0
      %1762 = vmatpush1.msra.mxu0 0.0
      %1763 = vmatprep.subr.mxu0 0.0
      %1764 = vmatpush1.msra.mxu0 0.0
      %1765 = vmatprep.subr.mxu0 0.0
      %1766 = vmatpush1.msra.mxu0 0.0
      %1767 = vmatprep.subr.mxu0 0.0
      %1768 = vmatpush1.msra.mxu0 0.0
      %1769 = vmatprep.subr.mxu0 0.0
      %1770 = vmatpush1.msra.mxu0 0.0
      %1771 = vmatprep.subr.mxu0 0.0
      %1772 = vmatpush1.msra.mxu0 0.0
      %1773 = vmatprep.subr.mxu0 0.0
      %1774 = vmatpush1.msra.mxu0 0.0
      %1775 = vmatprep.subr.mxu0 0.0
      %1776 = vmatpush1.msra.mxu0 0.0
      %1777 = vmatprep.subr.mxu0 0.0
      %1778 = vmatpush1.msra.mxu0 0.0
      %1779 = vmatprep.subr.mxu0 0.0
      %1780 = vmatpush1.msra.mxu0 0.0
      %1781 = vmatprep.subr.mxu0 0.0
      %1782 = vmatpush1.msra.mxu0 0.0
      %1783 = vmatprep.subr.mxu0 0.0
      %1784 = vmatpush1.msra.mxu0 0.0
      %1785 = vmatprep.subr.mxu0 0.0
      %1786 = vmatpush1.msra.mxu0 0.0
      %1787 = vmatprep.subr.mxu0 0.0
      %1788 = vmatpush1.msra.mxu0 0.0
      %1789 = vmatprep.subr.mxu0 0.0
      %1790 = vmatpush1.msra.mxu0 0.0
      %1791 = vmatprep.subr.mxu0 0.0
      %1792 = vmatpush1.msra.mxu0 0.0
      %1793 = vmatprep.subr.mxu0 0.0
      %1794 = vmatpush1.msra.mxu0 0.0
      %1795 = vmatprep.subr.mxu0 0.0
      %1796 = vmatpush1.msra.mxu0 0.0
      %1797 = vmatprep.mubr.f32.mxu0 0.0
      %1798 = vmatmul.mubr.f32.gmra.mrb[0].mxu0 %v1723
      %v1799 = vpop.f32.mrb[0].mxu0
      %v1800 = vadd.f32 0.0, %v1799
      %v1801 = vpop.f32.mrb[0].mxu0
      %1802 = vmatprep.mubr.f32.mxu0 0.0
      %1803 = vmatmul.mubr.f32.gmra.mrb[0].mxu0 %v1725
      %v1804 = vpop.f32.mrb[0].mxu0
      %v1805 = vadd.f32 0.0, %v1804
      %v1806 = vpop.f32.mrb[0].mxu0
      %1807 = vmatprep.mubr.f32.mxu0 0.0
      %1808 = vmatmul.mubr.f32.gmra.mrb[0].mxu0 %v1727
      %v1809 = vpop.f32.mrb[0].mxu0
      %v1810 = vadd.f32 0.0, %v1809
      %v1811 = vpop.f32.mrb[0].mxu0
      %1812 = vmatprep.mubr.f32.mxu0 0.0
      %1813 = vmatmul.mubr.f32.gmra.mrb[0].mxu0 %v1729
      %v1814 = vpop.f32.mrb[0].mxu0
      %v1815 = vadd.f32 0.0, %v1814
      %v1816 = vpop.f32.mrb[0].mxu0
      %1817 = vmatprep.mubr.f32.mxu0 0.0
      %1818 = vmatmul.mubr.f32.gmra.mrb[0].mxu0 %v1731
      %v1819 = vpop.f32.mrb[0].mxu0
      %v1820 = vadd.f32 0.0, %v1819
      %v1821 = vpop.f32.mrb[0].mxu0
      %1822 = vdwg.mxu0
      %v1823 = vadd.f32 %v1690, %v1800
      %v1824 = vadd.f32 %v1695, %v1805
      %v1825 = vadd.f32 %v1700, %v1810
      %v1826 = vadd.f32 %v1705, %v1815
      %v1827 = vadd.f32 %v1710, %v1820
      %v1828 = vadd.f32 %v1823, %v1380
      %v1829 = vadd.f32 %v1824, %v1380
      %v1830 = vadd.f32 %v1825, %v1380
      %v1831 = vadd.f32 %v1826, %v1380
      %v1832 = vadd.f32 %v1827, %v1380
      %vm1833 = vcmp.gt.f32.partialorder %v1828, 0.0
      %vm1834 = vcmp.gt.f32.partialorder %v1829, 0.0
      %vm1835 = vcmp.gt.f32.partialorder %v1830, 0.0
      %vm1836 = vcmp.gt.f32.partialorder %v1831, 0.0
      %vm1837 = vcmp.gt.f32.partialorder %v1832, 0.0
      %v1838 = vmin.f32 %v1828, 0.0
      %v1839 = vmin.f32 %v1829, 0.0
      %v1840 = vmin.f32 %v1830, 0.0
      %v1841 = vmin.f32 %v1831, 0.0
      %v1842 = vmin.f32 %v1832, 0.0
      %v1843 = vmul.f32 %v1838, 1.442695
      %v1844 = vpow.pop %v1843
      %v1845 = vmul.f32 %v1839, 1.442695
      %v1846 = vpow.pop %v1845
      %v1847 = vmul.f32 %v1840, 1.442695
      %v1848 = vpow.pop %v1847
      %v1849 = vmul.f32 %v1841, 1.442695
      %v1850 = vpow.pop %v1849
      %v1851 = vmul.f32 %v1842, 1.442695
      %v1852 = vpow.pop %v1851
      %v1853 = vsub.f32 %v1844, 1.0
      %v1854 = vsub.f32 %v1846, 1.0
      %v1855 = vsub.f32 %v1848, 1.0
      %v1856 = vsub.f32 %v1850, 1.0
      %v1857 = vsub.f32 %v1852, 1.0
      %v1858 = vsel %vm1833, %v1828, %v1853
      %v1859 = vsel %vm1834, %v1829, %v1854
      %v1860 = vsel %vm1835, %v1830, %v1855
      %v1861 = vsel %vm1836, %v1831, %v1856
      %v1862 = vsel %vm1837, %v1832, %v1857
      %v1864 = vsel %vm1423, %v1858, 0
      %v1867 = vsel %vm1423, %v1859, 0
      %v1870 = vsel %vm1423, %v1860, 0
      %v1873 = vsel %vm1423, %v1861, 0
      %v1876 = vsel %vm1423, %v1862, 0
      %1878 = vmatprep.subr.mxu0 0.0
      %1879 = vmatpush1.msra.mxu0 %v1441
      %1880 = vmatprep.subr.mxu0 0.0
      %1881 = vmatpush1.msra.mxu0 0.0
      %1882 = vmatprep.subr.mxu0 0.0
      %1883 = vmatpush1.msra.mxu0 0.0
      %1884 = vmatprep.subr.mxu0 0.0
      %1885 = vmatpush1.msra.mxu0 0.0
      %1886 = vmatprep.subr.mxu0 0.0
      %1887 = vmatpush1.msra.mxu0 0.0
      %1888 = vmatprep.subr.mxu0 0.0
      %1889 = vmatpush1.msra.mxu0 0.0
      %1890 = vmatprep.subr.mxu0 0.0
      %1891 = vmatpush1.msra.mxu0 0.0
      %1892 = vmatprep.subr.mxu0 0.0
      %1893 = vmatpush1.msra.mxu0 0.0
      %1894 = vmatprep.subr.mxu0 0.0
      %1895 = vmatpush1.msra.mxu0 0.0
      %1896 = vmatprep.subr.mxu0 0.0
      %1897 = vmatpush1.msra.mxu0 0.0
      %1898 = vmatprep.subr.mxu0 0.0
      %1899 = vmatpush1.msra.mxu0 0.0
      %1900 = vmatprep.subr.mxu0 0.0
      %1901 = vmatpush1.msra.mxu0 0.0
      %1902 = vmatprep.subr.mxu0 0.0
      %1903 = vmatpush1.msra.mxu0 0.0
      %1904 = vmatprep.subr.mxu0 0.0
      %1905 = vmatpush1.msra.mxu0 0.0
      %1906 = vmatprep.subr.mxu0 0.0
      %1907 = vmatpush1.msra.mxu0 0.0
      %1908 = vmatprep.subr.mxu0 0.0
      %1909 = vmatpush1.msra.mxu0 0.0
      %1910 = vmatprep.subr.mxu0 0.0
      %1911 = vmatpush1.msra.mxu0 0.0
      %1912 = vmatprep.subr.mxu0 0.0
      %1913 = vmatpush1.msra.mxu0 0.0
      %1914 = vmatprep.subr.mxu0 0.0
      %1915 = vmatpush1.msra.mxu0 0.0
      %1916 = vmatprep.subr.mxu0 0.0
      %1917 = vmatpush1.msra.mxu0 0.0
      %1918 = vmatprep.subr.mxu0 0.0
      %1919 = vmatpush1.msra.mxu0 0.0
      %1920 = vmatprep.subr.mxu0 0.0
      %1921 = vmatpush1.msra.mxu0 0.0
      %1922 = vmatprep.subr.mxu0 0.0
      %1923 = vmatpush1.msra.mxu0 0.0
      %1924 = vmatprep.subr.mxu0 0.0
      %1925 = vmatpush1.msra.mxu0 0.0
      %1926 = vmatprep.subr.mxu0 0.0
      %1927 = vmatpush1.msra.mxu0 0.0
      %1928 = vmatprep.subr.mxu0 0.0
      %1929 = vmatpush1.msra.mxu0 0.0
      %1930 = vmatprep.subr.mxu0 0.0
      %1931 = vmatpush1.msra.mxu0 0.0
      %1932 = vmatprep.subr.mxu0 0.0
      %1933 = vmatpush1.msra.mxu0 0.0
      %1934 = vmatprep.subr.mxu0 0.0
      %1935 = vmatpush1.msra.mxu0 0.0
      %1936 = vmatprep.subr.mxu0 0.0
      %1937 = vmatpush1.msra.mxu0 0.0
      %1938 = vmatprep.subr.mxu0 0.0
      %1939 = vmatpush1.msra.mxu0 0.0
      %1940 = vmatprep.subr.mxu0 0.0
      %1941 = vmatpush1.msra.mxu0 0.0
      %1942 = vmatprep.mubr.f32.mxu0 0.0
      %1943 = vmatmul.mubr.f32.gmra.mrb[0].mxu0 %v1864
      %v1944 = vpop.f32.mrb[0].mxu0
      %v1945 = vadd.f32 %v1421, %v1944
      %v1946 = vpop.f32.mrb[0].mxu0
      %1947 = vmatprep.mubr.f32.mxu0 0.0
      %1948 = vmatmul.mubr.f32.gmra.mrb[0].mxu0 %v1867
      %v1949 = vpop.f32.mrb[0].mxu0
      %v1950 = vadd.f32 %v1421, %v1949
      %v1951 = vpop.f32.mrb[0].mxu0
      %1952 = vmatprep.mubr.f32.mxu0 0.0
      %1953 = vmatmul.mubr.f32.gmra.mrb[0].mxu0 %v1870
      %v1954 = vpop.f32.mrb[0].mxu0
      %v1955 = vadd.f32 %v1421, %v1954
      %v1956 = vpop.f32.mrb[0].mxu0
      %1957 = vmatprep.mubr.f32.mxu0 0.0
      %1958 = vmatmul.mubr.f32.gmra.mrb[0].mxu0 %v1873
      %v1959 = vpop.f32.mrb[0].mxu0
      %v1960 = vadd.f32 %v1421, %v1959
      %v1961 = vpop.f32.mrb[0].mxu0
      %1962 = vmatprep.mubr.f32.mxu0 0.0
      %1963 = vmatmul.mubr.f32.gmra.mrb[0].mxu0 %v1876
      %v1964 = vpop.f32.mrb[0].mxu0
      %v1965 = vadd.f32 %v1421, %v1964
      %v1966 = vpop.f32.mrb[0].mxu0
      %1967 = vdwg.mxu0
      %1973 = vrot.lane.b32.xlu0 %v1945, 8
      %v1974 = vpop.permute.xlu0 %1973
      %1975 = vrot.lane.b32.xlu0 %v1950, 8
      %v1976 = vpop.permute.xlu0 %1975
      %1977 = vrot.lane.b32.xlu0 %v1955, 8
      %v1978 = vpop.permute.xlu0 %1977
      %1979 = vrot.lane.b32.xlu0 %v1960, 8
      %v1980 = vpop.permute.xlu0 %1979
      %1981 = vrot.lane.b32.xlu0 %v1965, 8
      %v1982 = vpop.permute.xlu0 %1981
      %v1988 = vsel %vm1050, %v1510, %v1974
      %v1989 = vsel %vm1050, %v1515, %v1976
      %v1990 = vsel %vm1050, %v1520, %v1978
      %v1991 = vsel %vm1050, %v1525, %v1980
      %v1992 = vsel %vm1050, %v1530, %v1982
      %v1998 = vrot.slane %v992, 1
      %v1999 = vrot.slane %v993, 1
      %v2000 = vsel %vm1040, %v1998, %v1999
      %v2001 = vrot.slane %v994, 1
      %v2002 = vsel %vm1040, %v1999, %v2001
      %v2003 = vrot.slane %v995, 1
      %v2004 = vsel %vm1040, %v2001, %v2003
      %v2005 = vrot.slane %v996, 1
      %v2006 = vsel %vm1040, %v2003, %v2005
      %v2012 = vadd.f32 %v1988, %v2000
      %v2013 = vadd.f32 %v1989, %v2002
      %v2014 = vadd.f32 %v1990, %v2004
      %v2015 = vadd.f32 %v1991, %v2006
      %v2016 = vadd.f32 %v1992, %v2005
      %s2017 = ssub.s32 %s953, 2
      %v2018 = vstv %s2017
      %v2019 = vadd.s32 %v956, %v2018
      %v2020 = vadd.s32 %v957, %v2018
      %v2021 = vadd.s32 %v958, %v2018
      %v2022 = vadd.s32 %v959, %v2018
      %v2023 = vadd.s32 %v960, %v2018
      %vm2024 = vcmp.ge.s32.totalorder %v2019, 0
      %vm2025 = vcmp.ge.s32.totalorder %v2020, 0
      %vm2026 = vcmp.ge.s32.totalorder %v2021, 0
      %vm2027 = vcmp.ge.s32.totalorder %v2022, 0
      %vm2028 = vcmp.ge.s32.totalorder %v2023, 0
      %vm2029 = vcmp.lt.s32.totalorder %v2019, 80
      %vm2030 = vcmp.lt.s32.totalorder %v2020, 80
      %vm2031 = vcmp.lt.s32.totalorder %v2021, 80
      %vm2032 = vcmp.lt.s32.totalorder %v2022, 80
      %vm2033 = vcmp.lt.s32.totalorder %v2023, 80
      %vm2034 = vmand %vm2024, %vm2029
      %vm2035 = vmand %vm2025, %vm2030
      %vm2036 = vmand %vm2026, %vm2031
      %vm2037 = vmand %vm2027, %vm2032
      %vm2038 = vmand %vm2028, %vm2033
      %v2039 = vsel %vm2034, 1, 0
      %v2040 = vsel %vm2035, 1, 0
      %v2041 = vsel %vm2036, 1, 0
      %v2042 = vsel %vm2037, 1, 0
      %v2043 = vsel %vm2038, 1, 0
      %vm2044 = vcmp.eq.s32.totalorder %v2039, 1
      %vm2045 = vcmp.eq.s32.totalorder %v2040, 1
      %vm2046 = vcmp.eq.s32.totalorder %v2041, 1
      %vm2047 = vcmp.eq.s32.totalorder %v2042, 1
      %vm2048 = vcmp.eq.s32.totalorder %v2043, 1
      %v2049 = vsel %vm2044, %v2012, 0.0
      %v2050 = vsel %vm2045, %v2013, 0.0
      %v2051 = vsel %vm2046, %v2014, 0.0
      %v2052 = vsel %vm2047, %v2015, 0.0
      %v2053 = vsel %vm2048, %v2016, 0.0
      %vm2054 = vcmp.gt.f32.partialorder %v2049, 0.0
      %vm2055 = vcmp.gt.f32.partialorder %v2050, 0.0
      %vm2056 = vcmp.gt.f32.partialorder %v2051, 0.0
      %vm2057 = vcmp.gt.f32.partialorder %v2052, 0.0
      %vm2058 = vcmp.gt.f32.partialorder %v2053, 0.0
      %v2059 = vmin.f32 %v2049, 0.0
      %v2060 = vmin.f32 %v2050, 0.0
      %v2061 = vmin.f32 %v2051, 0.0
      %v2062 = vmin.f32 %v2052, 0.0
      %v2063 = vmin.f32 %v2053, 0.0
      %v2064 = vmul.f32 %v2059, 1.442695
      %v2065 = vpow.pop %v2064
      %v2066 = vmul.f32 %v2060, 1.442695
      %v2067 = vpow.pop %v2066
      %v2068 = vmul.f32 %v2061, 1.442695
      %v2069 = vpow.pop %v2068
      %v2070 = vmul.f32 %v2062, 1.442695
      %v2071 = vpow.pop %v2070
      %v2072 = vmul.f32 %v2063, 1.442695
      %v2073 = vpow.pop %v2072
      %v2074 = vsub.f32 %v2065, 1.0
      %v2075 = vsub.f32 %v2067, 1.0
      %v2076 = vsub.f32 %v2069, 1.0
      %v2077 = vsub.f32 %v2071, 1.0
      %v2078 = vsub.f32 %v2073, 1.0
      %v2079 = vsel %vm2054, %v2049, %v2074
      %v2080 = vsel %vm2055, %v2050, %v2075
      %v2081 = vsel %vm2056, %v2051, %v2076
      %v2082 = vsel %vm2057, %v2052, %v2077
      %v2083 = vsel %vm2058, %v2053, %v2078
      %v2084 = vld [vmem:[%s11] sm:$0xff]
      %s2085 = scalar_lea.vmem %s11, 8
      %v2086 = vld [vmem:[%s2085] sm:$0xff]
      %s2087 = scalar_lea.vmem %s11, 16
      %v2088 = vld [vmem:[%s2087] sm:$0xff]
      %v2089 = vld [vmem:[%s12] sm:$0x1]
      %v2090 = vld [vmem:[%s13] sm:$0xf]
      %v2091 = vld [vmem:[%s14] sm:$0x1]
      %v2097 = vrot.slane %v2079, 2
      %v2098 = vrot.slane %v2080, 2
      %v2099 = vsel %vm1713, %v2097, %v2098
      %v2100 = vrot.slane %v2081, 2
      %v2101 = vsel %vm1713, %v2098, %v2100
      %v2102 = vrot.slane %v2082, 2
      %v2103 = vsel %vm1713, %v2100, %v2102
      %v2104 = vrot.slane %v2083, 2
      %v2105 = vsel %vm1713, %v2102, %v2104
      %v2106 = vsel %vm1050, %v2099, 0
      %v2108 = vsel %vm1050, %v2101, 0
      %v2110 = vsel %vm1050, %v2103, 0
      %v2112 = vsel %vm1050, %v2105, 0
      %2114 = vmatprep.subr.mxu0 0.0
      %2115 = vmatpush1.msra.mxu0 %v2086
      %2116 = vmatprep.subr.mxu0 0.0
      %2117 = vmatpush1.msra.mxu0 0.0
      %2118 = vmatprep.subr.mxu0 0.0
      %2119 = vmatpush1.msra.mxu0 0.0
      %2120 = vmatprep.subr.mxu0 0.0
      %2121 = vmatpush1.msra.mxu0 0.0
      %2122 = vmatprep.subr.mxu0 0.0
      %2123 = vmatpush1.msra.mxu0 0.0
      %2124 = vmatprep.subr.mxu0 0.0
      %2125 = vmatpush1.msra.mxu0 0.0
      %2126 = vmatprep.subr.mxu0 0.0
      %2127 = vmatpush1.msra.mxu0 0.0
      %2128 = vmatprep.subr.mxu0 0.0
      %2129 = vmatpush1.msra.mxu0 0.0
      %2130 = vmatprep.subr.mxu0 0.0
      %2131 = vmatpush1.msra.mxu0 0.0
      %2132 = vmatprep.subr.mxu0 0.0
      %2133 = vmatpush1.msra.mxu0 0.0
      %2134 = vmatprep.subr.mxu0 0.0
      %2135 = vmatpush1.msra.mxu0 0.0
      %2136 = vmatprep.subr.mxu0 0.0
      %2137 = vmatpush1.msra.mxu0 0.0
      %2138 = vmatprep.subr.mxu0 0.0
      %2139 = vmatpush1.msra.mxu0 0.0
      %2140 = vmatprep.subr.mxu0 0.0
      %2141 = vmatpush1.msra.mxu0 0.0
      %2142 = vmatprep.subr.mxu0 0.0
      %2143 = vmatpush1.msra.mxu0 0.0
      %2144 = vmatprep.subr.mxu0 0.0
      %2145 = vmatpush1.msra.mxu0 0.0
      %2146 = vmatprep.subr.mxu0 0.0
      %2147 = vmatpush1.msra.mxu0 0.0
      %2148 = vmatprep.subr.mxu0 0.0
      %2149 = vmatpush1.msra.mxu0 0.0
      %2150 = vmatprep.subr.mxu0 0.0
      %2151 = vmatpush1.msra.mxu0 0.0
      %2152 = vmatprep.subr.mxu0 0.0
      %2153 = vmatpush1.msra.mxu0 0.0
      %2154 = vmatprep.subr.mxu0 0.0
      %2155 = vmatpush1.msra.mxu0 0.0
      %2156 = vmatprep.subr.mxu0 0.0
      %2157 = vmatpush1.msra.mxu0 0.0
      %2158 = vmatprep.subr.mxu0 0.0
      %2159 = vmatpush1.msra.mxu0 0.0
      %2160 = vmatprep.subr.mxu0 0.0
      %2161 = vmatpush1.msra.mxu0 0.0
      %2162 = vmatprep.subr.mxu0 0.0
      %2163 = vmatpush1.msra.mxu0 0.0
      %2164 = vmatprep.subr.mxu0 0.0
      %2165 = vmatpush1.msra.mxu0 0.0
      %2166 = vmatprep.subr.mxu0 0.0
      %2167 = vmatpush1.msra.mxu0 0.0
      %2168 = vmatprep.subr.mxu0 0.0
      %2169 = vmatpush1.msra.mxu0 0.0
      %2170 = vmatprep.subr.mxu0 0.0
      %2171 = vmatpush1.msra.mxu0 0.0
      %2172 = vmatprep.subr.mxu0 0.0
      %2173 = vmatpush1.msra.mxu0 0.0
      %2174 = vmatprep.subr.mxu0 0.0
      %2175 = vmatpush1.msra.mxu0 0.0
      %2176 = vmatprep.subr.mxu0 0.0
      %2177 = vmatpush1.msra.mxu0 0.0
      %2178 = vmatprep.mubr.f32.mxu0 0.0
      %2179 = vmatmul.mubr.f32.gmra.mrb[0].mxu0 %v2106
      %v2180 = vpop.f32.mrb[0].mxu0
      %v2181 = vadd.f32 0.0, %v2180
      %v2182 = vpop.f32.mrb[0].mxu0
      %2183 = vmatprep.mubr.f32.mxu0 0.0
      %2184 = vmatmul.mubr.f32.gmra.mrb[0].mxu0 %v2108
      %v2185 = vpop.f32.mrb[0].mxu0
      %v2186 = vadd.f32 0.0, %v2185
      %v2187 = vpop.f32.mrb[0].mxu0
      %2188 = vmatprep.mubr.f32.mxu0 0.0
      %2189 = vmatmul.mubr.f32.gmra.mrb[0].mxu0 %v2110
      %v2190 = vpop.f32.mrb[0].mxu0
      %v2191 = vadd.f32 0.0, %v2190
      %v2192 = vpop.f32.mrb[0].mxu0
      %2193 = vmatprep.mubr.f32.mxu0 0.0
      %2194 = vmatmul.mubr.f32.gmra.mrb[0].mxu0 %v2112
      %v2195 = vpop.f32.mrb[0].mxu0
      %v2196 = vadd.f32 0.0, %v2195
      %v2197 = vpop.f32.mrb[0].mxu0
      %2198 = vdwg.mxu0
      %2199 = vrot.lane.b32.xlu0 %v2079, 120
      %v2200 = vpop.permute.xlu0 %2199
      %2201 = vrot.lane.b32.xlu0 %v2080, 120
      %v2202 = vpop.permute.xlu0 %2201
      %2203 = vrot.lane.b32.xlu0 %v2081, 120
      %v2204 = vpop.permute.xlu0 %2203
      %2205 = vrot.lane.b32.xlu0 %v2082, 120
      %v2206 = vpop.permute.xlu0 %2205
      %v2207 = vsel %vm1050, %v2200, 0
      %v2209 = vsel %vm1050, %v2202, 0
      %v2211 = vsel %vm1050, %v2204, 0
      %v2213 = vsel %vm1050, %v2206, 0
      %2215 = vmatprep.subr.mxu0 0.0
      %2216 = vmatpush1.msra.mxu0 %v2084
      %2217 = vmatprep.subr.mxu0 0.0
      %2218 = vmatpush1.msra.mxu0 0.0
      %2219 = vmatprep.subr.mxu0 0.0
      %2220 = vmatpush1.msra.mxu0 0.0
      %2221 = vmatprep.subr.mxu0 0.0
      %2222 = vmatpush1.msra.mxu0 0.0
      %2223 = vmatprep.subr.mxu0 0.0
      %2224 = vmatpush1.msra.mxu0 0.0
      %2225 = vmatprep.subr.mxu0 0.0
      %2226 = vmatpush1.msra.mxu0 0.0
      %2227 = vmatprep.subr.mxu0 0.0
      %2228 = vmatpush1.msra.mxu0 0.0
      %2229 = vmatprep.subr.mxu0 0.0
      %2230 = vmatpush1.msra.mxu0 0.0
      %2231 = vmatprep.subr.mxu0 0.0
      %2232 = vmatpush1.msra.mxu0 0.0
      %2233 = vmatprep.subr.mxu0 0.0
      %2234 = vmatpush1.msra.mxu0 0.0
      %2235 = vmatprep.subr.mxu0 0.0
      %2236 = vmatpush1.msra.mxu0 0.0
      %2237 = vmatprep.subr.mxu0 0.0
      %2238 = vmatpush1.msra.mxu0 0.0
      %2239 = vmatprep.subr.mxu0 0.0
      %2240 = vmatpush1.msra.mxu0 0.0
      %2241 = vmatprep.subr.mxu0 0.0
      %2242 = vmatpush1.msra.mxu0 0.0
      %2243 = vmatprep.subr.mxu0 0.0
      %2244 = vmatpush1.msra.mxu0 0.0
      %2245 = vmatprep.subr.mxu0 0.0
      %2246 = vmatpush1.msra.mxu0 0.0
      %2247 = vmatprep.subr.mxu0 0.0
      %2248 = vmatpush1.msra.mxu0 0.0
      %2249 = vmatprep.subr.mxu0 0.0
      %2250 = vmatpush1.msra.mxu0 0.0
      %2251 = vmatprep.subr.mxu0 0.0
      %2252 = vmatpush1.msra.mxu0 0.0
      %2253 = vmatprep.subr.mxu0 0.0
      %2254 = vmatpush1.msra.mxu0 0.0
      %2255 = vmatprep.subr.mxu0 0.0
      %2256 = vmatpush1.msra.mxu0 0.0
      %2257 = vmatprep.subr.mxu0 0.0
      %2258 = vmatpush1.msra.mxu0 0.0
      %2259 = vmatprep.subr.mxu0 0.0
      %2260 = vmatpush1.msra.mxu0 0.0
      %2261 = vmatprep.subr.mxu0 0.0
      %2262 = vmatpush1.msra.mxu0 0.0
      %2263 = vmatprep.subr.mxu0 0.0
      %2264 = vmatpush1.msra.mxu0 0.0
      %2265 = vmatprep.subr.mxu0 0.0
      %2266 = vmatpush1.msra.mxu0 0.0
      %2267 = vmatprep.subr.mxu0 0.0
      %2268 = vmatpush1.msra.mxu0 0.0
      %2269 = vmatprep.subr.mxu0 0.0
      %2270 = vmatpush1.msra.mxu0 0.0
      %2271 = vmatprep.subr.mxu0 0.0
      %2272 = vmatpush1.msra.mxu0 0.0
      %2273 = vmatprep.subr.mxu0 0.0
      %2274 = vmatpush1.msra.mxu0 0.0
      %2275 = vmatprep.subr.mxu0 0.0
      %2276 = vmatpush1.msra.mxu0 0.0
      %2277 = vmatprep.subr.mxu0 0.0
      %2278 = vmatpush1.msra.mxu0 0.0
      %2279 = vmatprep.mubr.f32.mxu0 0.0
      %2280 = vmatmul.mubr.f32.gmra.mrb[0].mxu0 %v2207
      %v2281 = vpop.f32.mrb[0].mxu0
      %v2282 = vadd.f32 %v2181, %v2281
      %v2283 = vpop.f32.mrb[0].mxu0
      %2284 = vmatprep.mubr.f32.mxu0 0.0
      %2285 = vmatmul.mubr.f32.gmra.mrb[0].mxu0 %v2209
      %v2286 = vpop.f32.mrb[0].mxu0
      %v2287 = vadd.f32 %v2186, %v2286
      %v2288 = vpop.f32.mrb[0].mxu0
      %2289 = vmatprep.mubr.f32.mxu0 0.0
      %2290 = vmatmul.mubr.f32.gmra.mrb[0].mxu0 %v2211
      %v2291 = vpop.f32.mrb[0].mxu0
      %v2292 = vadd.f32 %v2191, %v2291
      %v2293 = vpop.f32.mrb[0].mxu0
      %2294 = vmatprep.mubr.f32.mxu0 0.0
      %2295 = vmatmul.mubr.f32.gmra.mrb[0].mxu0 %v2213
      %v2296 = vpop.f32.mrb[0].mxu0
      %v2297 = vadd.f32 %v2196, %v2296
      %v2298 = vpop.f32.mrb[0].mxu0
      %2299 = vdwg.mxu0
      %vm2300 = vcmask 1044480
      %v2301 = vrot.slane %v2079, 3
      %v2302 = vrot.slane %v2080, 3
      %v2303 = vsel %vm2300, %v2301, %v2302
      %v2304 = vrot.slane %v2081, 3
      %v2305 = vsel %vm2300, %v2302, %v2304
      %v2306 = vrot.slane %v2082, 3
      %v2307 = vsel %vm2300, %v2304, %v2306
      %v2308 = vrot.slane %v2083, 3
      %v2309 = vsel %vm2300, %v2306, %v2308
      %2310 = vrot.lane.b32.xlu0 %v2303, 120
      %v2311 = vpop.permute.xlu0 %2310
      %2312 = vrot.lane.b32.xlu0 %v2305, 120
      %v2313 = vpop.permute.xlu0 %2312
      %2314 = vrot.lane.b32.xlu0 %v2307, 120
      %v2315 = vpop.permute.xlu0 %2314
      %2316 = vrot.lane.b32.xlu0 %v2309, 120
      %v2317 = vpop.permute.xlu0 %2316
      %v2318 = vsel %vm1050, %v2311, 0
      %v2320 = vsel %vm1050, %v2313, 0
      %v2322 = vsel %vm1050, %v2315, 0
      %v2324 = vsel %vm1050, %v2317, 0
      %2326 = vmatprep.subr.mxu0 0.0
      %2327 = vmatpush1.msra.mxu0 %v2088
      %2328 = vmatprep.subr.mxu0 0.0
      %2329 = vmatpush1.msra.mxu0 0.0
      %2330 = vmatprep.subr.mxu0 0.0
      %2331 = vmatpush1.msra.mxu0 0.0
      %2332 = vmatprep.subr.mxu0 0.0
      %2333 = vmatpush1.msra.mxu0 0.0
      %2334 = vmatprep.subr.mxu0 0.0
      %2335 = vmatpush1.msra.mxu0 0.0
      %2336 = vmatprep.subr.mxu0 0.0
      %2337 = vmatpush1.msra.mxu0 0.0
      %2338 = vmatprep.subr.mxu0 0.0
      %2339 = vmatpush1.msra.mxu0 0.0
      %2340 = vmatprep.subr.mxu0 0.0
      %2341 = vmatpush1.msra.mxu0 0.0
      %2342 = vmatprep.subr.mxu0 0.0
      %2343 = vmatpush1.msra.mxu0 0.0
      %2344 = vmatprep.subr.mxu0 0.0
      %2345 = vmatpush1.msra.mxu0 0.0
      %2346 = vmatprep.subr.mxu0 0.0
      %2347 = vmatpush1.msra.mxu0 0.0
      %2348 = vmatprep.subr.mxu0 0.0
      %2349 = vmatpush1.msra.mxu0 0.0
      %2350 = vmatprep.subr.mxu0 0.0
      %2351 = vmatpush1.msra.mxu0 0.0
      %2352 = vmatprep.subr.mxu0 0.0
      %2353 = vmatpush1.msra.mxu0 0.0
      %2354 = vmatprep.subr.mxu0 0.0
      %2355 = vmatpush1.msra.mxu0 0.0
      %2356 = vmatprep.subr.mxu0 0.0
      %2357 = vmatpush1.msra.mxu0 0.0
      %2358 = vmatprep.subr.mxu0 0.0
      %2359 = vmatpush1.msra.mxu0 0.0
      %2360 = vmatprep.subr.mxu0 0.0
      %2361 = vmatpush1.msra.mxu0 0.0
      %2362 = vmatprep.subr.mxu0 0.0
      %2363 = vmatpush1.msra.mxu0 0.0
      %2364 = vmatprep.subr.mxu0 0.0
      %2365 = vmatpush1.msra.mxu0 0.0
      %2366 = vmatprep.subr.mxu0 0.0
      %2367 = vmatpush1.msra.mxu0 0.0
      %2368 = vmatprep.subr.mxu0 0.0
      %2369 = vmatpush1.msra.mxu0 0.0
      %2370 = vmatprep.subr.mxu0 0.0
      %2371 = vmatpush1.msra.mxu0 0.0
      %2372 = vmatprep.subr.mxu0 0.0
      %2373 = vmatpush1.msra.mxu0 0.0
      %2374 = vmatprep.subr.mxu0 0.0
      %2375 = vmatpush1.msra.mxu0 0.0
      %2376 = vmatprep.subr.mxu0 0.0
      %2377 = vmatpush1.msra.mxu0 0.0
      %2378 = vmatprep.subr.mxu0 0.0
      %2379 = vmatpush1.msra.mxu0 0.0
      %2380 = vmatprep.subr.mxu0 0.0
      %2381 = vmatpush1.msra.mxu0 0.0
      %2382 = vmatprep.subr.mxu0 0.0
      %2383 = vmatpush1.msra.mxu0 0.0
      %2384 = vmatprep.subr.mxu0 0.0
      %2385 = vmatpush1.msra.mxu0 0.0
      %2386 = vmatprep.subr.mxu0 0.0
      %2387 = vmatpush1.msra.mxu0 0.0
      %2388 = vmatprep.subr.mxu0 0.0
      %2389 = vmatpush1.msra.mxu0 0.0
      %2390 = vmatprep.mubr.f32.mxu0 0.0
      %2391 = vmatmul.mubr.f32.gmra.mrb[0].mxu0 %v2318
      %v2392 = vpop.f32.mrb[0].mxu0
      %v2393 = vadd.f32 0.0, %v2392
      %v2394 = vpop.f32.mrb[0].mxu0
      %2395 = vmatprep.mubr.f32.mxu0 0.0
      %2396 = vmatmul.mubr.f32.gmra.mrb[0].mxu0 %v2320
      %v2397 = vpop.f32.mrb[0].mxu0
      %v2398 = vadd.f32 0.0, %v2397
      %v2399 = vpop.f32.mrb[0].mxu0
      %2400 = vmatprep.mubr.f32.mxu0 0.0
      %2401 = vmatmul.mubr.f32.gmra.mrb[0].mxu0 %v2322
      %v2402 = vpop.f32.mrb[0].mxu0
      %v2403 = vadd.f32 0.0, %v2402
      %v2404 = vpop.f32.mrb[0].mxu0
      %2405 = vmatprep.mubr.f32.mxu0 0.0
      %2406 = vmatmul.mubr.f32.gmra.mrb[0].mxu0 %v2324
      %v2407 = vpop.f32.mrb[0].mxu0
      %v2408 = vadd.f32 0.0, %v2407
      %v2409 = vpop.f32.mrb[0].mxu0
      %2410 = vdwg.mxu0
      %v2411 = vadd.f32 %v2282, %v2393
      %v2412 = vadd.f32 %v2287, %v2398
      %v2413 = vadd.f32 %v2292, %v2403
      %v2414 = vadd.f32 %v2297, %v2408
      %v2416 = vlaneseq
      %v2417 = vshrl.u32 %v2416, 7
      %v2418 = vsub.s32 0, %v2417
      %v2419 = vrot.slane %v2089, %v2418
      %v2421 = vadd.f32 %v2411, %v2419
      %v2422 = vadd.f32 %v2412, %v2419
      %v2423 = vadd.f32 %v2413, %v2419
      %v2424 = vadd.f32 %v2414, %v2419
      %vm2425 = vcmp.gt.f32.partialorder %v2421, 0.0
      %vm2426 = vcmp.gt.f32.partialorder %v2422, 0.0
      %vm2427 = vcmp.gt.f32.partialorder %v2423, 0.0
      %vm2428 = vcmp.gt.f32.partialorder %v2424, 0.0
      %v2429 = vmin.f32 %v2421, 0.0
      %v2430 = vmin.f32 %v2422, 0.0
      %v2431 = vmin.f32 %v2423, 0.0
      %v2432 = vmin.f32 %v2424, 0.0
      %v2433 = vmul.f32 %v2429, 1.442695
      %v2434 = vpow.pop %v2433
      %v2435 = vmul.f32 %v2430, 1.442695
      %v2436 = vpow.pop %v2435
      %v2437 = vmul.f32 %v2431, 1.442695
      %v2438 = vpow.pop %v2437
      %v2439 = vmul.f32 %v2432, 1.442695
      %v2440 = vpow.pop %v2439
      %v2441 = vsub.f32 %v2434, 1.0
      %v2442 = vsub.f32 %v2436, 1.0
      %v2443 = vsub.f32 %v2438, 1.0
      %v2444 = vsub.f32 %v2440, 1.0
      %v2445 = vsel %vm2425, %v2421, %v2441
      %v2446 = vsel %vm2426, %v2422, %v2442
      %v2447 = vsel %vm2427, %v2423, %v2443
      %v2448 = vsel %vm2428, %v2424, %v2444
      %v2450 = vlaneseq
      %v2451 = vshrl.u32 %v2450, 7
      %v2452 = vsub.s32 0, %v2451
      %v2453 = vrot.slane %v2091, %v2452
      %v2456 = vsel %vm1423, %v2445, 0
      %v2459 = vsel %vm1423, %v2446, 0
      %v2462 = vsel %vm1423, %v2447, 0
      %v2465 = vsel %vm1423, %v2448, 0
      %v2468 = vsel %vm1439, %v2090, 0
      %2470 = vmatprep.subr.mxu0 0.0
      %2471 = vmatpush1.msra.mxu0 %v2468
      %2472 = vmatprep.subr.mxu0 0.0
      %2473 = vmatpush1.msra.mxu0 0.0
      %2474 = vmatprep.subr.mxu0 0.0
      %2475 = vmatpush1.msra.mxu0 0.0
      %2476 = vmatprep.subr.mxu0 0.0
      %2477 = vmatpush1.msra.mxu0 0.0
      %2478 = vmatprep.subr.mxu0 0.0
      %2479 = vmatpush1.msra.mxu0 0.0
      %2480 = vmatprep.subr.mxu0 0.0
      %2481 = vmatpush1.msra.mxu0 0.0
      %2482 = vmatprep.subr.mxu0 0.0
      %2483 = vmatpush1.msra.mxu0 0.0
      %2484 = vmatprep.subr.mxu0 0.0
      %2485 = vmatpush1.msra.mxu0 0.0
      %2486 = vmatprep.subr.mxu0 0.0
      %2487 = vmatpush1.msra.mxu0 0.0
      %2488 = vmatprep.subr.mxu0 0.0
      %2489 = vmatpush1.msra.mxu0 0.0
      %2490 = vmatprep.subr.mxu0 0.0
      %2491 = vmatpush1.msra.mxu0 0.0
      %2492 = vmatprep.subr.mxu0 0.0
      %2493 = vmatpush1.msra.mxu0 0.0
      %2494 = vmatprep.subr.mxu0 0.0
      %2495 = vmatpush1.msra.mxu0 0.0
      %2496 = vmatprep.subr.mxu0 0.0
      %2497 = vmatpush1.msra.mxu0 0.0
      %2498 = vmatprep.subr.mxu0 0.0
      %2499 = vmatpush1.msra.mxu0 0.0
      %2500 = vmatprep.subr.mxu0 0.0
      %2501 = vmatpush1.msra.mxu0 0.0
      %2502 = vmatprep.subr.mxu0 0.0
      %2503 = vmatpush1.msra.mxu0 0.0
      %2504 = vmatprep.subr.mxu0 0.0
      %2505 = vmatpush1.msra.mxu0 0.0
      %2506 = vmatprep.subr.mxu0 0.0
      %2507 = vmatpush1.msra.mxu0 0.0
      %2508 = vmatprep.subr.mxu0 0.0
      %2509 = vmatpush1.msra.mxu0 0.0
      %2510 = vmatprep.subr.mxu0 0.0
      %2511 = vmatpush1.msra.mxu0 0.0
      %2512 = vmatprep.subr.mxu0 0.0
      %2513 = vmatpush1.msra.mxu0 0.0
      %2514 = vmatprep.subr.mxu0 0.0
      %2515 = vmatpush1.msra.mxu0 0.0
      %2516 = vmatprep.subr.mxu0 0.0
      %2517 = vmatpush1.msra.mxu0 0.0
      %2518 = vmatprep.subr.mxu0 0.0
      %2519 = vmatpush1.msra.mxu0 0.0
      %2520 = vmatprep.subr.mxu0 0.0
      %2521 = vmatpush1.msra.mxu0 0.0
      %2522 = vmatprep.subr.mxu0 0.0
      %2523 = vmatpush1.msra.mxu0 0.0
      %2524 = vmatprep.subr.mxu0 0.0
      %2525 = vmatpush1.msra.mxu0 0.0
      %2526 = vmatprep.subr.mxu0 0.0
      %2527 = vmatpush1.msra.mxu0 0.0
      %2528 = vmatprep.subr.mxu0 0.0
      %2529 = vmatpush1.msra.mxu0 0.0
      %2530 = vmatprep.subr.mxu0 0.0
      %2531 = vmatpush1.msra.mxu0 0.0
      %2532 = vmatprep.subr.mxu0 0.0
      %2533 = vmatpush1.msra.mxu0 0.0
      %2534 = vmatprep.mubr.f32.mxu0 0.0
      %2535 = vmatmul.mubr.f32.gmra.mrb[0].mxu0 %v2456
      %v2536 = vpop.f32.mrb[0].mxu0
      %v2537 = vadd.f32 %v2453, %v2536
      %v2538 = vpop.f32.mrb[0].mxu0
      %2539 = vmatprep.mubr.f32.mxu0 0.0
      %2540 = vmatmul.mubr.f32.gmra.mrb[0].mxu0 %v2459
      %v2541 = vpop.f32.mrb[0].mxu0
      %v2542 = vadd.f32 %v2453, %v2541
      %v2543 = vpop.f32.mrb[0].mxu0
      %2544 = vmatprep.mubr.f32.mxu0 0.0
      %2545 = vmatmul.mubr.f32.gmra.mrb[0].mxu0 %v2462
      %v2546 = vpop.f32.mrb[0].mxu0
      %v2547 = vadd.f32 %v2453, %v2546
      %v2548 = vpop.f32.mrb[0].mxu0
      %2549 = vmatprep.mubr.f32.mxu0 0.0
      %2550 = vmatmul.mubr.f32.gmra.mrb[0].mxu0 %v2465
      %v2551 = vpop.f32.mrb[0].mxu0
      %v2552 = vadd.f32 %v2453, %v2551
      %v2553 = vpop.f32.mrb[0].mxu0
      %2554 = vdwg.mxu0
      %2555 = vrot.lane.b32.xlu0 %v2099, 120
      %v2556 = vpop.permute.xlu0 %2555
      %2557 = vrot.lane.b32.xlu0 %v2101, 120
      %v2558 = vpop.permute.xlu0 %2557
      %2559 = vrot.lane.b32.xlu0 %v2103, 120
      %v2560 = vpop.permute.xlu0 %2559
      %2561 = vrot.lane.b32.xlu0 %v2105, 120
      %v2562 = vpop.permute.xlu0 %2561
      %v2563 = vsel %vm1050, %v2556, 0
      %v2565 = vsel %vm1050, %v2558, 0
      %v2567 = vsel %vm1050, %v2560, 0
      %v2569 = vsel %vm1050, %v2562, 0
      %2571 = vmatprep.subr.mxu0 0.0
      %2572 = vmatpush1.msra.mxu0 %v2086
      %2573 = vmatprep.subr.mxu0 0.0
      %2574 = vmatpush1.msra.mxu0 0.0
      %2575 = vmatprep.subr.mxu0 0.0
      %2576 = vmatpush1.msra.mxu0 0.0
      %2577 = vmatprep.subr.mxu0 0.0
      %2578 = vmatpush1.msra.mxu0 0.0
      %2579 = vmatprep.subr.mxu0 0.0
      %2580 = vmatpush1.msra.mxu0 0.0
      %2581 = vmatprep.subr.mxu0 0.0
      %2582 = vmatpush1.msra.mxu0 0.0
      %2583 = vmatprep.subr.mxu0 0.0
      %2584 = vmatpush1.msra.mxu0 0.0
      %2585 = vmatprep.subr.mxu0 0.0
      %2586 = vmatpush1.msra.mxu0 0.0
      %2587 = vmatprep.subr.mxu0 0.0
      %2588 = vmatpush1.msra.mxu0 0.0
      %2589 = vmatprep.subr.mxu0 0.0
      %2590 = vmatpush1.msra.mxu0 0.0
      %2591 = vmatprep.subr.mxu0 0.0
      %2592 = vmatpush1.msra.mxu0 0.0
      %2593 = vmatprep.subr.mxu0 0.0
      %2594 = vmatpush1.msra.mxu0 0.0
      %2595 = vmatprep.subr.mxu0 0.0
      %2596 = vmatpush1.msra.mxu0 0.0
      %2597 = vmatprep.subr.mxu0 0.0
      %2598 = vmatpush1.msra.mxu0 0.0
      %2599 = vmatprep.subr.mxu0 0.0
      %2600 = vmatpush1.msra.mxu0 0.0
      %2601 = vmatprep.subr.mxu0 0.0
      %2602 = vmatpush1.msra.mxu0 0.0
      %2603 = vmatprep.subr.mxu0 0.0
      %2604 = vmatpush1.msra.mxu0 0.0
      %2605 = vmatprep.subr.mxu0 0.0
      %2606 = vmatpush1.msra.mxu0 0.0
      %2607 = vmatprep.subr.mxu0 0.0
      %2608 = vmatpush1.msra.mxu0 0.0
      %2609 = vmatprep.subr.mxu0 0.0
      %2610 = vmatpush1.msra.mxu0 0.0
      %2611 = vmatprep.subr.mxu0 0.0
      %2612 = vmatpush1.msra.mxu0 0.0
      %2613 = vmatprep.subr.mxu0 0.0
      %2614 = vmatpush1.msra.mxu0 0.0
      %2615 = vmatprep.subr.mxu0 0.0
      %2616 = vmatpush1.msra.mxu0 0.0
      %2617 = vmatprep.subr.mxu0 0.0
      %2618 = vmatpush1.msra.mxu0 0.0
      %2619 = vmatprep.subr.mxu0 0.0
      %2620 = vmatpush1.msra.mxu0 0.0
      %2621 = vmatprep.subr.mxu0 0.0
      %2622 = vmatpush1.msra.mxu0 0.0
      %2623 = vmatprep.subr.mxu0 0.0
      %2624 = vmatpush1.msra.mxu0 0.0
      %2625 = vmatprep.subr.mxu0 0.0
      %2626 = vmatpush1.msra.mxu0 0.0
      %2627 = vmatprep.subr.mxu0 0.0
      %2628 = vmatpush1.msra.mxu0 0.0
      %2629 = vmatprep.subr.mxu0 0.0
      %2630 = vmatpush1.msra.mxu0 0.0
      %2631 = vmatprep.subr.mxu0 0.0
      %2632 = vmatpush1.msra.mxu0 0.0
      %2633 = vmatprep.subr.mxu0 0.0
      %2634 = vmatpush1.msra.mxu0 0.0
      %2635 = vmatprep.mubr.f32.mxu0 0.0
      %2636 = vmatmul.mubr.f32.gmra.mrb[0].mxu0 %v2563
      %v2637 = vpop.f32.mrb[0].mxu0
      %v2638 = vadd.f32 0.0, %v2637
      %v2639 = vpop.f32.mrb[0].mxu0
      %2640 = vmatprep.mubr.f32.mxu0 0.0
      %2641 = vmatmul.mubr.f32.gmra.mrb[0].mxu0 %v2565
      %v2642 = vpop.f32.mrb[0].mxu0
      %v2643 = vadd.f32 0.0, %v2642
      %v2644 = vpop.f32.mrb[0].mxu0
      %2645 = vmatprep.mubr.f32.mxu0 0.0
      %2646 = vmatmul.mubr.f32.gmra.mrb[0].mxu0 %v2567
      %v2647 = vpop.f32.mrb[0].mxu0
      %v2648 = vadd.f32 0.0, %v2647
      %v2649 = vpop.f32.mrb[0].mxu0
      %2650 = vmatprep.mubr.f32.mxu0 0.0
      %2651 = vmatmul.mubr.f32.gmra.mrb[0].mxu0 %v2569
      %v2652 = vpop.f32.mrb[0].mxu0
      %v2653 = vadd.f32 0.0, %v2652
      %v2654 = vpop.f32.mrb[0].mxu0
      %2655 = vdwg.mxu0
      %v2656 = vrot.slane %v2079, 1
      %v2657 = vrot.slane %v2080, 1
      %v2658 = vsel %vm1040, %v2656, %v2657
      %v2659 = vrot.slane %v2081, 1
      %v2660 = vsel %vm1040, %v2657, %v2659
      %v2661 = vrot.slane %v2082, 1
      %v2662 = vsel %vm1040, %v2659, %v2661
      %v2663 = vrot.slane %v2083, 1
      %v2664 = vsel %vm1040, %v2661, %v2663
      %v2665 = vsel %vm1050, %v2658, 0
      %v2667 = vsel %vm1050, %v2660, 0
      %v2669 = vsel %vm1050, %v2662, 0
      %v2671 = vsel %vm1050, %v2664, 0
      %2673 = vmatprep.subr.mxu0 0.0
      %2674 = vmatpush1.msra.mxu0 %v2084
      %2675 = vmatprep.subr.mxu0 0.0
      %2676 = vmatpush1.msra.mxu0 0.0
      %2677 = vmatprep.subr.mxu0 0.0
      %2678 = vmatpush1.msra.mxu0 0.0
      %2679 = vmatprep.subr.mxu0 0.0
      %2680 = vmatpush1.msra.mxu0 0.0
      %2681 = vmatprep.subr.mxu0 0.0
      %2682 = vmatpush1.msra.mxu0 0.0
      %2683 = vmatprep.subr.mxu0 0.0
      %2684 = vmatpush1.msra.mxu0 0.0
      %2685 = vmatprep.subr.mxu0 0.0
      %2686 = vmatpush1.msra.mxu0 0.0
      %2687 = vmatprep.subr.mxu0 0.0
      %2688 = vmatpush1.msra.mxu0 0.0
      %2689 = vmatprep.subr.mxu0 0.0
      %2690 = vmatpush1.msra.mxu0 0.0
      %2691 = vmatprep.subr.mxu0 0.0
      %2692 = vmatpush1.msra.mxu0 0.0
      %2693 = vmatprep.subr.mxu0 0.0
      %2694 = vmatpush1.msra.mxu0 0.0
      %2695 = vmatprep.subr.mxu0 0.0
      %2696 = vmatpush1.msra.mxu0 0.0
      %2697 = vmatprep.subr.mxu0 0.0
      %2698 = vmatpush1.msra.mxu0 0.0
      %2699 = vmatprep.subr.mxu0 0.0
      %2700 = vmatpush1.msra.mxu0 0.0
      %2701 = vmatprep.subr.mxu0 0.0
      %2702 = vmatpush1.msra.mxu0 0.0
      %2703 = vmatprep.subr.mxu0 0.0
      %2704 = vmatpush1.msra.mxu0 0.0
      %2705 = vmatprep.subr.mxu0 0.0
      %2706 = vmatpush1.msra.mxu0 0.0
      %2707 = vmatprep.subr.mxu0 0.0
      %2708 = vmatpush1.msra.mxu0 0.0
      %2709 = vmatprep.subr.mxu0 0.0
      %2710 = vmatpush1.msra.mxu0 0.0
      %2711 = vmatprep.subr.mxu0 0.0
      %2712 = vmatpush1.msra.mxu0 0.0
      %2713 = vmatprep.subr.mxu0 0.0
      %2714 = vmatpush1.msra.mxu0 0.0
      %2715 = vmatprep.subr.mxu0 0.0
      %2716 = vmatpush1.msra.mxu0 0.0
      %2717 = vmatprep.subr.mxu0 0.0
      %2718 = vmatpush1.msra.mxu0 0.0
      %2719 = vmatprep.subr.mxu0 0.0
      %2720 = vmatpush1.msra.mxu0 0.0
      %2721 = vmatprep.subr.mxu0 0.0
      %2722 = vmatpush1.msra.mxu0 0.0
      %2723 = vmatprep.subr.mxu0 0.0
      %2724 = vmatpush1.msra.mxu0 0.0
      %2725 = vmatprep.subr.mxu0 0.0
      %2726 = vmatpush1.msra.mxu0 0.0
      %2727 = vmatprep.subr.mxu0 0.0
      %2728 = vmatpush1.msra.mxu0 0.0
      %2729 = vmatprep.subr.mxu0 0.0
      %2730 = vmatpush1.msra.mxu0 0.0
      %2731 = vmatprep.subr.mxu0 0.0
      %2732 = vmatpush1.msra.mxu0 0.0
      %2733 = vmatprep.subr.mxu0 0.0
      %2734 = vmatpush1.msra.mxu0 0.0
      %2735 = vmatprep.subr.mxu0 0.0
      %2736 = vmatpush1.msra.mxu0 0.0
      %2737 = vmatprep.mubr.f32.mxu0 0.0
      %2738 = vmatmul.mubr.f32.gmra.mrb[0].mxu0 %v2665
      %v2739 = vpop.f32.mrb[0].mxu0
      %v2740 = vadd.f32 %v2638, %v2739
      %v2741 = vpop.f32.mrb[0].mxu0
      %2742 = vmatprep.mubr.f32.mxu0 0.0
      %2743 = vmatmul.mubr.f32.gmra.mrb[0].mxu0 %v2667
      %v2744 = vpop.f32.mrb[0].mxu0
      %v2745 = vadd.f32 %v2643, %v2744
      %v2746 = vpop.f32.mrb[0].mxu0
      %2747 = vmatprep.mubr.f32.mxu0 0.0
      %2748 = vmatmul.mubr.f32.gmra.mrb[0].mxu0 %v2669
      %v2749 = vpop.f32.mrb[0].mxu0
      %v2750 = vadd.f32 %v2648, %v2749
      %v2751 = vpop.f32.mrb[0].mxu0
      %2752 = vmatprep.mubr.f32.mxu0 0.0
      %2753 = vmatmul.mubr.f32.gmra.mrb[0].mxu0 %v2671
      %v2754 = vpop.f32.mrb[0].mxu0
      %v2755 = vadd.f32 %v2653, %v2754
      %v2756 = vpop.f32.mrb[0].mxu0
      %2757 = vdwg.mxu0
      %v2758 = vrot.slane %v2079, 4
      %v2759 = vrot.slane %v2080, 4
      %v2760 = vsel %vm1439, %v2758, %v2759
      %v2761 = vrot.slane %v2081, 4
      %v2762 = vsel %vm1439, %v2759, %v2761
      %v2763 = vrot.slane %v2082, 4
      %v2764 = vsel %vm1439, %v2761, %v2763
      %v2765 = vrot.slane %v2083, 4
      %v2766 = vsel %vm1439, %v2763, %v2765
      %v2767 = vsel %vm1050, %v2760, 0
      %v2769 = vsel %vm1050, %v2762, 0
      %v2771 = vsel %vm1050, %v2764, 0
      %v2773 = vsel %vm1050, %v2766, 0
      %2775 = vmatprep.subr.mxu0 0.0
      %2776 = vmatpush1.msra.mxu0 %v2088
      %2777 = vmatprep.subr.mxu0 0.0
      %2778 = vmatpush1.msra.mxu0 0.0
      %2779 = vmatprep.subr.mxu0 0.0
      %2780 = vmatpush1.msra.mxu0 0.0
      %2781 = vmatprep.subr.mxu0 0.0
      %2782 = vmatpush1.msra.mxu0 0.0
      %2783 = vmatprep.subr.mxu0 0.0
      %2784 = vmatpush1.msra.mxu0 0.0
      %2785 = vmatprep.subr.mxu0 0.0
      %2786 = vmatpush1.msra.mxu0 0.0
      %2787 = vmatprep.subr.mxu0 0.0
      %2788 = vmatpush1.msra.mxu0 0.0
      %2789 = vmatprep.subr.mxu0 0.0
      %2790 = vmatpush1.msra.mxu0 0.0
      %2791 = vmatprep.subr.mxu0 0.0
      %2792 = vmatpush1.msra.mxu0 0.0
      %2793 = vmatprep.subr.mxu0 0.0
      %2794 = vmatpush1.msra.mxu0 0.0
      %2795 = vmatprep.subr.mxu0 0.0
      %2796 = vmatpush1.msra.mxu0 0.0
      %2797 = vmatprep.subr.mxu0 0.0
      %2798 = vmatpush1.msra.mxu0 0.0
      %2799 = vmatprep.subr.mxu0 0.0
      %2800 = vmatpush1.msra.mxu0 0.0
      %2801 = vmatprep.subr.mxu0 0.0
      %2802 = vmatpush1.msra.mxu0 0.0
      %2803 = vmatprep.subr.mxu0 0.0
      %2804 = vmatpush1.msra.mxu0 0.0
      %2805 = vmatprep.subr.mxu0 0.0
      %2806 = vmatpush1.msra.mxu0 0.0
      %2807 = vmatprep.subr.mxu0 0.0
      %2808 = vmatpush1.msra.mxu0 0.0
      %2809 = vmatprep.subr.mxu0 0.0
      %2810 = vmatpush1.msra.mxu0 0.0
      %2811 = vmatprep.subr.mxu0 0.0
      %2812 = vmatpush1.msra.mxu0 0.0
      %2813 = vmatprep.subr.mxu0 0.0
      %2814 = vmatpush1.msra.mxu0 0.0
      %2815 = vmatprep.subr.mxu0 0.0
      %2816 = vmatpush1.msra.mxu0 0.0
      %2817 = vmatprep.subr.mxu0 0.0
      %2818 = vmatpush1.msra.mxu0 0.0
      %2819 = vmatprep.subr.mxu0 0.0
      %2820 = vmatpush1.msra.mxu0 0.0
      %2821 = vmatprep.subr.mxu0 0.0
      %2822 = vmatpush1.msra.mxu0 0.0
      %2823 = vmatprep.subr.mxu0 0.0
      %2824 = vmatpush1.msra.mxu0 0.0
      %2825 = vmatprep.subr.mxu0 0.0
      %2826 = vmatpush1.msra.mxu0 0.0
      %2827 = vmatprep.subr.mxu0 0.0
      %2828 = vmatpush1.msra.mxu0 0.0
      %2829 = vmatprep.subr.mxu0 0.0
      %2830 = vmatpush1.msra.mxu0 0.0
      %2831 = vmatprep.subr.mxu0 0.0
      %2832 = vmatpush1.msra.mxu0 0.0
      %2833 = vmatprep.subr.mxu0 0.0
      %2834 = vmatpush1.msra.mxu0 0.0
      %2835 = vmatprep.subr.mxu0 0.0
      %2836 = vmatpush1.msra.mxu0 0.0
      %2837 = vmatprep.subr.mxu0 0.0
      %2838 = vmatpush1.msra.mxu0 0.0
      %2839 = vmatprep.mubr.f32.mxu0 0.0
      %2840 = vmatmul.mubr.f32.gmra.mrb[0].mxu0 %v2767
      %v2841 = vpop.f32.mrb[0].mxu0
      %v2842 = vadd.f32 0.0, %v2841
      %v2843 = vpop.f32.mrb[0].mxu0
      %2844 = vmatprep.mubr.f32.mxu0 0.0
      %2845 = vmatmul.mubr.f32.gmra.mrb[0].mxu0 %v2769
      %v2846 = vpop.f32.mrb[0].mxu0
      %v2847 = vadd.f32 0.0, %v2846
      %v2848 = vpop.f32.mrb[0].mxu0
      %2849 = vmatprep.mubr.f32.mxu0 0.0
      %2850 = vmatmul.mubr.f32.gmra.mrb[0].mxu0 %v2771
      %v2851 = vpop.f32.mrb[0].mxu0
      %v2852 = vadd.f32 0.0, %v2851
      %v2853 = vpop.f32.mrb[0].mxu0
      %2854 = vmatprep.mubr.f32.mxu0 0.0
      %2855 = vmatmul.mubr.f32.gmra.mrb[0].mxu0 %v2773
      %v2856 = vpop.f32.mrb[0].mxu0
      %v2857 = vadd.f32 0.0, %v2856
      %v2858 = vpop.f32.mrb[0].mxu0
      %2859 = vdwg.mxu0
      %v2860 = vadd.f32 %v2740, %v2842
      %v2861 = vadd.f32 %v2745, %v2847
      %v2862 = vadd.f32 %v2750, %v2852
      %v2863 = vadd.f32 %v2755, %v2857
      %v2864 = vadd.f32 %v2860, %v2419
      %v2865 = vadd.f32 %v2861, %v2419
      %v2866 = vadd.f32 %v2862, %v2419
      %v2867 = vadd.f32 %v2863, %v2419
      %vm2868 = vcmp.gt.f32.partialorder %v2864, 0.0
      %vm2869 = vcmp.gt.f32.partialorder %v2865, 0.0
      %vm2870 = vcmp.gt.f32.partialorder %v2866, 0.0
      %vm2871 = vcmp.gt.f32.partialorder %v2867, 0.0
      %v2872 = vmin.f32 %v2864, 0.0
      %v2873 = vmin.f32 %v2865, 0.0
      %v2874 = vmin.f32 %v2866, 0.0
      %v2875 = vmin.f32 %v2867, 0.0
      %v2876 = vmul.f32 %v2872, 1.442695
      %v2877 = vpow.pop %v2876
      %v2878 = vmul.f32 %v2873, 1.442695
      %v2879 = vpow.pop %v2878
      %v2880 = vmul.f32 %v2874, 1.442695
      %v2881 = vpow.pop %v2880
      %v2882 = vmul.f32 %v2875, 1.442695
      %v2883 = vpow.pop %v2882
      %v2884 = vsub.f32 %v2877, 1.0
      %v2885 = vsub.f32 %v2879, 1.0
      %v2886 = vsub.f32 %v2881, 1.0
      %v2887 = vsub.f32 %v2883, 1.0
      %v2888 = vsel %vm2868, %v2864, %v2884
      %v2889 = vsel %vm2869, %v2865, %v2885
      %v2890 = vsel %vm2870, %v2866, %v2886
      %v2891 = vsel %vm2871, %v2867, %v2887
      %v2893 = vsel %vm1423, %v2888, 0
      %v2896 = vsel %vm1423, %v2889, 0
      %v2899 = vsel %vm1423, %v2890, 0
      %v2902 = vsel %vm1423, %v2891, 0
      %2904 = vmatprep.subr.mxu0 0.0
      %2905 = vmatpush1.msra.mxu0 %v2468
      %2906 = vmatprep.subr.mxu0 0.0
      %2907 = vmatpush1.msra.mxu0 0.0
      %2908 = vmatprep.subr.mxu0 0.0
      %2909 = vmatpush1.msra.mxu0 0.0
      %2910 = vmatprep.subr.mxu0 0.0
      %2911 = vmatpush1.msra.mxu0 0.0
      %2912 = vmatprep.subr.mxu0 0.0
      %2913 = vmatpush1.msra.mxu0 0.0
      %2914 = vmatprep.subr.mxu0 0.0
      %2915 = vmatpush1.msra.mxu0 0.0
      %2916 = vmatprep.subr.mxu0 0.0
      %2917 = vmatpush1.msra.mxu0 0.0
      %2918 = vmatprep.subr.mxu0 0.0
      %2919 = vmatpush1.msra.mxu0 0.0
      %2920 = vmatprep.subr.mxu0 0.0
      %2921 = vmatpush1.msra.mxu0 0.0
      %2922 = vmatprep.subr.mxu0 0.0
      %2923 = vmatpush1.msra.mxu0 0.0
      %2924 = vmatprep.subr.mxu0 0.0
      %2925 = vmatpush1.msra.mxu0 0.0
      %2926 = vmatprep.subr.mxu0 0.0
      %2927 = vmatpush1.msra.mxu0 0.0
      %2928 = vmatprep.subr.mxu0 0.0
      %2929 = vmatpush1.msra.mxu0 0.0
      %2930 = vmatprep.subr.mxu0 0.0
      %2931 = vmatpush1.msra.mxu0 0.0
      %2932 = vmatprep.subr.mxu0 0.0
      %2933 = vmatpush1.msra.mxu0 0.0
      %2934 = vmatprep.subr.mxu0 0.0
      %2935 = vmatpush1.msra.mxu0 0.0
      %2936 = vmatprep.subr.mxu0 0.0
      %2937 = vmatpush1.msra.mxu0 0.0
      %2938 = vmatprep.subr.mxu0 0.0
      %2939 = vmatpush1.msra.mxu0 0.0
      %2940 = vmatprep.subr.mxu0 0.0
      %2941 = vmatpush1.msra.mxu0 0.0
      %2942 = vmatprep.subr.mxu0 0.0
      %2943 = vmatpush1.msra.mxu0 0.0
      %2944 = vmatprep.subr.mxu0 0.0
      %2945 = vmatpush1.msra.mxu0 0.0
      %2946 = vmatprep.subr.mxu0 0.0
      %2947 = vmatpush1.msra.mxu0 0.0
      %2948 = vmatprep.subr.mxu0 0.0
      %2949 = vmatpush1.msra.mxu0 0.0
      %2950 = vmatprep.subr.mxu0 0.0
      %2951 = vmatpush1.msra.mxu0 0.0
      %2952 = vmatprep.subr.mxu0 0.0
      %2953 = vmatpush1.msra.mxu0 0.0
      %2954 = vmatprep.subr.mxu0 0.0
      %2955 = vmatpush1.msra.mxu0 0.0
      %2956 = vmatprep.subr.mxu0 0.0
      %2957 = vmatpush1.msra.mxu0 0.0
      %2958 = vmatprep.subr.mxu0 0.0
      %2959 = vmatpush1.msra.mxu0 0.0
      %2960 = vmatprep.subr.mxu0 0.0
      %2961 = vmatpush1.msra.mxu0 0.0
      %2962 = vmatprep.subr.mxu0 0.0
      %2963 = vmatpush1.msra.mxu0 0.0
      %2964 = vmatprep.subr.mxu0 0.0
      %2965 = vmatpush1.msra.mxu0 0.0
      %2966 = vmatprep.subr.mxu0 0.0
      %2967 = vmatpush1.msra.mxu0 0.0
      %2968 = vmatprep.mubr.f32.mxu0 0.0
      %2969 = vmatmul.mubr.f32.gmra.mrb[0].mxu0 %v2893
      %v2970 = vpop.f32.mrb[0].mxu0
      %v2971 = vadd.f32 %v2453, %v2970
      %v2972 = vpop.f32.mrb[0].mxu0
      %2973 = vmatprep.mubr.f32.mxu0 0.0
      %2974 = vmatmul.mubr.f32.gmra.mrb[0].mxu0 %v2896
      %v2975 = vpop.f32.mrb[0].mxu0
      %v2976 = vadd.f32 %v2453, %v2975
      %v2977 = vpop.f32.mrb[0].mxu0
      %2978 = vmatprep.mubr.f32.mxu0 0.0
      %2979 = vmatmul.mubr.f32.gmra.mrb[0].mxu0 %v2899
      %v2980 = vpop.f32.mrb[0].mxu0
      %v2981 = vadd.f32 %v2453, %v2980
      %v2982 = vpop.f32.mrb[0].mxu0
      %2983 = vmatprep.mubr.f32.mxu0 0.0
      %2984 = vmatmul.mubr.f32.gmra.mrb[0].mxu0 %v2902
      %v2985 = vpop.f32.mrb[0].mxu0
      %v2986 = vadd.f32 %v2453, %v2985
      %v2987 = vpop.f32.mrb[0].mxu0
      %2988 = vdwg.mxu0
      %2993 = vrot.lane.b32.xlu0 %v2971, 8
      %v2994 = vpop.permute.xlu0 %2993
      %2995 = vrot.lane.b32.xlu0 %v2976, 8
      %v2996 = vpop.permute.xlu0 %2995
      %2997 = vrot.lane.b32.xlu0 %v2981, 8
      %v2998 = vpop.permute.xlu0 %2997
      %2999 = vrot.lane.b32.xlu0 %v2986, 8
      %v3000 = vpop.permute.xlu0 %2999
      %v3005 = vsel %vm1050, %v2537, %v2994
      %v3006 = vsel %vm1050, %v2542, %v2996
      %v3007 = vsel %vm1050, %v2547, %v2998
      %v3008 = vsel %vm1050, %v2552, %v3000
      %v3014 = vrot.slane %v2049, 2
      %v3015 = vrot.slane %v2050, 2
      %v3016 = vsel %vm1713, %v3014, %v3015
      %v3017 = vrot.slane %v2051, 2
      %v3018 = vsel %vm1713, %v3015, %v3017
      %v3019 = vrot.slane %v2052, 2
      %v3020 = vsel %vm1713, %v3017, %v3019
      %v3021 = vrot.slane %v2053, 2
      %v3022 = vsel %vm1713, %v3019, %v3021
      %v3027 = vadd.f32 %v3005, %v3016
      %v3028 = vadd.f32 %v3006, %v3018
      %v3029 = vadd.f32 %v3007, %v3020
      %v3030 = vadd.f32 %v3008, %v3022
      %3031 = vst.msk [vmem:[%s654] sm:$0xff] %vm730, %v3027
      %3032 = vst.msk [vmem:[%s654 + $0x8] sm:$0xff] %vm730, %v3028
      %3033 = vst.msk [vmem:[%s654 + $0x10] sm:$0xff] %vm730, %v3029
      %3034 = vst.msk [vmem:[%s654 + $0x18] sm:$0xff] %vm730, %v3030
      %s3035 = smul.u32 4, %s31
      %p3036 = scmp.lt.s32.totalorder %s30, 1
      %s3037 = scalar_select %p3036, %s30, 1
      %p3038 = scmp.lt.s32.totalorder %s3035, 11
      %s3039 = scalar_select %p3038, %s3035, 11
      %s3040 = smul.addr %s3037, 12
      %s3041 = sadd.s32 %s3039, %s3040
      %s3042 = smul.addr %s3041, 8
      %s3043 = scalar_lea.vmem %s15, %s3042
      // Predicated region
      $region81: #{tpu_custom_call.1} parent=79 // pred_check
        %p3044 = pneg %p405
      $region82: #{tpu_custom_call.1} parent=79 // pred_check_branch
        %3046 = sbr.rel (%p3044) target = $region84
      $region83: #{tpu_custom_call.1} parent=79 // pred_region
        %s3047 = smul.u32 4, %s31
      $region84: #{tpu_custom_call.1} parent=79 // pred_fallthru
        _
    $region80: #{tpu_custom_call.1} parent=5 // pred_fallthru
      _
    %p3048 = scmp.le.s32.totalorder 2, %s21
    // Predicated region
    $region85: #{tpu_custom_call.1} parent=5 // pred_check
      %p3049 = pneg %p3048
    $region86: #{tpu_custom_call.1} parent=5 // pred_check_branch
      %3051 = sbr.rel (%p3049) target = $region88
    $region87: #{tpu_custom_call.1} parent=5 // pred_region
      %s3052 = ssub.s32 %s21, 2
      // Predicated region
      $region89: #{tpu_custom_call.1} parent=87 // pred_check
        %p3053 = pneg %p411
      $region90: #{tpu_custom_call.1} parent=87 // pred_check_branch
        %3055 = sbr.rel (%p3053) target = $region92
      $region91: #{tpu_custom_call.1} parent=87 // pred_region
        %s3056 = smul.u32 4, %s33
        %p3057 = scmp.lt.s32.totalorder %s32, 1
        %s3058 = scalar_select %p3057, %s32, 1
        %p3059 = scmp.lt.s32.totalorder %s3056, 11
        %s3060 = scalar_select %p3059, %s3056, 11
        %s3061 = smul.addr %s3058, 12
        %s3062 = sadd.s32 %s3060, %s3061
        %s3063 = smul.addr %s3062, 8
        %s3064 = scalar_lea.vmem %s15, %s3063
      $region92: #{tpu_custom_call.1} parent=87 // pred_fallthru
        _
    $region88: #{tpu_custom_call.1} parent=5 // pred_fallthru
      _
  $region6: #{tpu_custom_call.1} parent=0 // loop_footer
    %s25 = sadd.s32 1, %s21
  $region7: #{tpu_custom_call.1} parent=0 // loop_footer_branch
    %20 = sbr.rel target = $region3
  $region8: #{tpu_custom_call.1} parent=0 // loop_exit
    _

</llo_original>
